<compile_context>
chip_gen: v7x
topology: tpu7x:2x2x1
jax: 0.10.0
libtpu: 0.0.40
codegen_flags: <defaults>
</compile_context>

<pallas_src>
import numpy as np
import jax
import jax.numpy as jnp
from jax import lax
from jax.experimental import pallas as pl
from jax.experimental.pallas import tpu as pltpu

EPS = 1e-5  # nn.InstanceNorm2d default eps


# ----------------------------- kernel ---------------------------------------

def _in_prelu(y, prm_ref):
    """InstanceNorm (affine, biased var, two-pass) + per-channel PReLU.

    prm_ref rows: 0 = gamma, 1 = beta, 2 = PReLU slope.  Affine is folded into
    a single y*scale + shift FMA.
    """
    gamma = prm_ref[0:1, :]
    beta = prm_ref[1:2, :]
    alpha = prm_ref[2:3, :]
    mean = jnp.mean(y, axis=0, keepdims=True)                      # (1, C)
    var = jnp.mean(jnp.square(y - mean), axis=0, keepdims=True)    # biased
    scale = gamma * lax.rsqrt(var + EPS)
    shift = beta - mean * scale
    yn = y * scale + shift
    return jnp.where(yn >= 0, yn, alpha * yn)


def _tap_conv(p, w_ref, s_out):
    """y = sum_k  p[k*s_out:(k+1)*s_out, :] @ w_ref[k]   (conv as per-tap matmuls)."""
    k_taps = w_ref.shape[0]
    c_out = w_ref.shape[2]
    y = jnp.zeros((s_out, c_out), jnp.float32)
    for k in range(k_taps):                                        # static unroll (<=12)
        y = y + jnp.dot(p[k * s_out:(k + 1) * s_out, :], w_ref[k],
                        preferred_element_type=jnp.float32)
    return y


def _fused_encoder_kernel(p1_ref, w1_ref, prm1_ref,
                          g2_ref, w2_ref, prm2_ref,
                          g3_ref, w3_ref, prm3_ref, o_ref):
    # ---- conv_1: 3x3, stride 2 (one matmul on host-im2col patches) ----------
    y1 = jnp.dot(p1_ref[0], w1_ref[...], preferred_element_type=jnp.float32)
    y1 = _in_prelu(y1, prm1_ref)                                   # (S1, C)

    # ---- conv_2: 3x4, stride (2,3); taps gathered in-VMEM via one-hot G2 ----
    s2 = g2_ref.shape[0] // w2_ref.shape[0]
    p2 = jnp.dot(g2_ref[...], y1, preferred_element_type=jnp.float32)
    y2 = _in_prelu(_tap_conv(p2, w2_ref, s2), prm2_ref)            # (S2, 2C)

    # ---- conv_3: 3x4, stride (2,3), pad (1,0); padding = zero rows of G3 ----
    s3 = g3_ref.shape[0] // w3_ref.shape[0]
    p3 = jnp.dot(g3_ref[...], y2, preferred_element_type=jnp.float32)
    y3 = _in_prelu(_tap_conv(p3, w3_ref, s3), prm3_ref)            # (S3, C)

    o_ref[0] = y3


# ----------------------------- host-side prep -------------------------------

def _im2col(x, kh, kw, sh, sw):
    # x: (B, C, H, W) -> (B, Hout*Wout, kh*kw*C); column = (ki*kw + kj)*C + c
    B, C, H, W = x.shape
    Hout = (H - kh) // sh + 1
    Wout = (W - kw) // sw + 1
    cols = []
    for ki in range(kh):
        for kj in range(kw):
            cols.append(x[:, :,
                          ki:ki + sh * (Hout - 1) + 1:sh,
                          kj:kj + sw * (Wout - 1) + 1:sw])
    p = jnp.concatenate(cols, axis=1).reshape(B, kh * kw * C, Hout * Wout)
    return jnp.transpose(p, (0, 2, 1)), Hout, Wout


def _weight_to_mat(w):
    # (Cout, Cin, kh, kw) -> (kh*kw*Cin, Cout), matching _im2col column order
    return jnp.transpose(w, (2, 3, 1, 0)).reshape(-1, w.shape[0])


def _weight_to_taps(w):
    # (Cout, Cin, kh, kw) -> (kh*kw, Cin, Cout); tap index k = ki*kw + kj
    cout, cin, kh, kw = w.shape
    return jnp.transpose(w, (2, 3, 1, 0)).reshape(kh * kw, cin, cout)


def _tap_selector(h_in, w_in, kh, kw, sh, sw, ph, pw):
    """One-hot selector G (kh*kw*S_out, S_in): G[k*S_out + s_out, s_in] = 1 iff input
    position s_in feeds tap k of output s_out. All-zero row == zero padding."""
    h_out = (h_in + 2 * ph - kh) // sh + 1
    w_out = (w_in + 2 * pw - kw) // sw + 1
    s_in, s_out = h_in * w_in, h_out * w_out
    g = np.zeros((kh * kw * s_out, s_in), np.float32)
    for ki in range(kh):
        for kj in range(kw):
            k = ki * kw + kj
            for h in range(h_out):
                hi = sh * h + ki - ph
                if hi < 0 or hi >= h_in:
                    continue
                for w in range(w_out):
                    wi = sw * w + kj - pw
                    if wi < 0 or wi >= w_in:
                        continue
                    g[k * s_out + h * w_out + w, hi * w_in + wi] = 1.0
    return jnp.asarray(g), h_out, w_out


def preamble_pre_encoder(x, params):
    """x: (B, Cin, H, W) NCHW -> (B, channels, H3, W3), matching the PyTorch module."""
    B = x.shape[0]
    # conv biases (_b*) are intentionally unused: InstanceNorm cancels them exactly.
    w1, _b1, gm1, bt1, al1 = params["conv1"]
    w2, _b2, gm2, bt2, al2 = params["conv2"]
    w3, _b3, gm3, bt3, al3 = params["conv3"]
    C1, C2, C3 = w1.shape[0], w2.shape[0], w3.shape[0]

    # layer-1 patches on the host (cheap at small Cin); everything downstream stays in VMEM.
    # TODO(synk): at production H x W, extract layer-1 taps in-kernel too (strided pl.ds
    # reads) to avoid the kh*kw read inflation of host-side im2col.
    p1, H1, W1 = _im2col(x, 3, 3, 2, 2)
    S1 = H1 * W1
    w1m = _weight_to_mat(w1).astype(jnp.float32)
    K1 = w1m.shape[0]

    G2, H2, W2 = _tap_selector(H1, W1, 3, 4, 2, 3, 0, 0)
    w2k = _weight_to_taps(w2).astype(jnp.float32)
    S2, K2 = H2 * W2, w2k.shape[0]

    G3, H3, W3 = _tap_selector(H2, W2, 3, 4, 2, 3, 1, 0)
    w3k = _weight_to_taps(w3).astype(jnp.float32)
    S3, K3 = H3 * W3, w3k.shape[0]

    prm1 = jnp.stack([gm1, bt1, al1]).astype(jnp.float32)   # (3, C1)
    prm2 = jnp.stack([gm2, bt2, al2]).astype(jnp.float32)   # (3, C2)
    prm3 = jnp.stack([gm3, bt3, al3]).astype(jnp.float32)   # (3, C3)

    flops = 2 * B * (S1 * K1 * C1
                     + K2 * S2 * S1 * C1 + K2 * S2 * C1 * C2
                     + K3 * S3 * S2 * C2 + K3 * S3 * C2 * C3)
    bytes_accessed = 4 * (p1.size + w1m.size + G2.size + w2k.size + G3.size
                          + w3k.size + prm1.size + prm2.size + prm3.size
                          + B * S3 * C3)

    out = pl.pallas_call(
        _fused_encoder_kernel,
        out_shape=jax.ShapeDtypeStruct((B, S3, C3), jnp.float32),
        grid=(B,),
        in_specs=[
            pl.BlockSpec((1, S1, K1), lambda b: (b, 0, 0)),
            pl.BlockSpec((K1, C1), lambda b: (0, 0)),
            pl.BlockSpec((3, C1), lambda b: (0, 0)),
            pl.BlockSpec((K2 * S2, S1), lambda b: (0, 0)),
            pl.BlockSpec((K2, C1, C2), lambda b: (0, 0, 0)),
            pl.BlockSpec((3, C2), lambda b: (0, 0)),
            pl.BlockSpec((K3 * S3, S2), lambda b: (0, 0)),
            pl.BlockSpec((K3, C2, C3), lambda b: (0, 0, 0)),
            pl.BlockSpec((3, C3), lambda b: (0, 0)),
        ],
        out_specs=pl.BlockSpec((1, S3, C3), lambda b: (b, 0, 0)),
        compiler_params=pltpu.CompilerParams(dimension_semantics=("parallel",)),
        cost_estimate=pl.CostEstimate(flops=flops,
                                      transcendentals=B * (C1 + C2 + C3),
                                      bytes_accessed=bytes_accessed),
    )(p1.astype(jnp.float32), w1m, prm1, G2, w2k, prm2, G3, w3k, prm3)

    # (B, S3, C) channels-last -> NCHW
    return jnp.transpose(out, (0, 2, 1)).reshape(B, C3, H3, W3)


# ----------------------------- pure-JAX reference ----------------------------

def _reference(x, params):
    def block(h, w, b, gm, bt, al, stride, pad):
        y = lax.conv_general_dilated(h, w, window_strides=stride, padding=pad,
                                     dimension_numbers=("NCHW", "OIHW", "NCHW"))
        y = y + b[None, :, None, None]
        mean = jnp.mean(y, axis=(2, 3), keepdims=True)
        var = jnp.mean((y - mean) ** 2, axis=(2, 3), keepdims=True)
        yn = (y - mean) * lax.rsqrt(var + EPS)
        yn = yn * gm[None, :, None, None] + bt[None, :, None, None]
        return jnp.where(yn >= 0, yn, al[None, :, None, None] * yn)

    h = block(x, *params["conv1"], (2, 2), [(0, 0), (0, 0)])
    h = block(h, *params["conv2"], (2, 3), [(0, 0), (0, 0)])
    h = block(h, *params["conv3"], (2, 3), [(1, 1), (0, 0)])
    return h


# ----------------------------- demo / check ----------------------------------

if __name__ == "__main__":
    key = jax.random.PRNGKey(0)
    B, Cin, H, W = 2, 2, 21, 51        # -> H1,W1 = 10,25 ; H2,W2 = 4,8 ; H3,W3 = 2,2
    channels = 32                      # module default width
    ks = jax.random.split(key, 16)

    x = jax.random.normal(ks[0], (B, Cin, H, W), jnp.float32)

    def conv_params(i, cin, cout, kh, kw):
        w = jax.random.normal(ks[i], (cout, cin, kh, kw), jnp.float32) * 0.1
        b = jax.random.normal(ks[i + 1], (cout,), jnp.float32) * 0.1
        gm = 1.0 + 0.1 * jax.random.normal(ks[i + 2], (cout,), jnp.float32)
        bt = 0.1 * jax.random.normal(ks[i + 3], (cout,), jnp.float32)
        al = jnp.full((cout,), 0.25, jnp.float32)       # PReLU default slope
        return (w, b, gm, bt, al)

    params = {
        "conv1": conv_params(1, Cin, channels, 3, 3),
        "conv2": conv_params(5, channels, channels * 2, 3, 4),
        "conv3": conv_params(9, channels * 2, channels, 3, 4),
    }

    out = jax.block_until_ready(preamble_pre_encoder(x, params))
    ref = jax.block_until_ready(_reference(x, params))

    assert out.shape == ref.shape == (B, channels, 2, 2), (out.shape, ref.shape)
    assert bool(jnp.all(jnp.isfinite(out)))
    # loose tolerance accounts for TPU default bf16-pass matmul precision in both paths
    assert bool(jnp.allclose(out, ref, atol=5e-2, rtol=5e-2)), \
        float(jnp.max(jnp.abs(out - ref)))
    print("KERNEL_OK")
</pallas_src>

<mosaic_0001>
module attributes {stable_mosaic.version = 11 : i64} {
  func.func @_fused_encoder_kernel(%arg0: i32, %arg1: memref<1x250x18xf32, #tpu.memory_space<vmem>>, %arg2: memref<18x32xf32, #tpu.memory_space<vmem>>, %arg3: memref<3x32xf32, #tpu.memory_space<vmem>>, %arg4: memref<384x250xf32, #tpu.memory_space<vmem>>, %arg5: memref<12x32x64xf32, #tpu.memory_space<vmem>>, %arg6: memref<3x64xf32, #tpu.memory_space<vmem>>, %arg7: memref<48x32xf32, #tpu.memory_space<vmem>>, %arg8: memref<12x64x32xf32, #tpu.memory_space<vmem>>, %arg9: memref<3x32xf32, #tpu.memory_space<vmem>>, %arg10: memref<1x4x32xf32, #tpu.memory_space<vmem>>) attributes {dimension_semantics = [#tpu.dimension_semantics<parallel>], iteration_bounds = array<i64: 2>, scalar_prefetch = 0 : i64, scratch_operands = 0 : i64, tpu.core_type = #tpu.core_type<tc>, window_params = [{transform_indices = @transform_0, window_bounds = array<i64: 1, 250, 18>}, {pipeline_mode = #tpu.pipeline_mode<synchronous>, transform_indices = @transform_1, window_bounds = array<i64: 18, 32>}, {pipeline_mode = #tpu.pipeline_mode<synchronous>, transform_indices = @transform_2, window_bounds = array<i64: 3, 32>}, {pipeline_mode = #tpu.pipeline_mode<synchronous>, transform_indices = @transform_3, window_bounds = array<i64: 384, 250>}, {pipeline_mode = #tpu.pipeline_mode<synchronous>, transform_indices = @transform_4, window_bounds = array<i64: 12, 32, 64>}, {pipeline_mode = #tpu.pipeline_mode<synchronous>, transform_indices = @transform_5, window_bounds = array<i64: 3, 64>}, {pipeline_mode = #tpu.pipeline_mode<synchronous>, transform_indices = @transform_6, window_bounds = array<i64: 48, 32>}, {pipeline_mode = #tpu.pipeline_mode<synchronous>, transform_indices = @transform_7, window_bounds = array<i64: 12, 64, 32>}, {pipeline_mode = #tpu.pipeline_mode<synchronous>, transform_indices = @transform_8, window_bounds = array<i64: 3, 32>}, {transform_indices = @transform_9, window_bounds = array<i64: 1, 4, 32>}]} {
    %c0 = arith.constant 0 : index
    %c0_0 = arith.constant 0 : index
    %c0_1 = arith.constant 0 : index
    %0 = vector.load %arg1[%c0, %c0_0, %c0_1] : memref<1x250x18xf32, #tpu.memory_space<vmem>>, vector<1x250x18xf32>
    %1 = vector.shape_cast %0 : vector<1x250x18xf32> to vector<250x18xf32>
    %c0_2 = arith.constant 0 : index
    %c0_3 = arith.constant 0 : index
    %2 = vector.load %arg2[%c0_2, %c0_3] : memref<18x32xf32, #tpu.memory_space<vmem>>, vector<18x32xf32>
    %cst = arith.constant dense<0.000000e+00> : vector<250x32xf32>
    %3 = tpu.matmul %1, %2, %cst {dimension_numbers = #tpu.dot_dimension_numbers<[1], [0], [0], [1], [0, 0, 1, 1], [], []>} : vector<250x18xf32>, vector<18x32xf32>, vector<250x32xf32> -> vector<250x32xf32>
    %c0_4 = arith.constant 0 : index
    %c0_5 = arith.constant 0 : index
    %4 = vector.load %arg3[%c0_4, %c0_5] : memref<3x32xf32, #tpu.memory_space<vmem>>, vector<1x32xf32>
    %c1 = arith.constant 1 : index
    %c0_6 = arith.constant 0 : index
    %5 = vector.load %arg3[%c1, %c0_6] : memref<3x32xf32, #tpu.memory_space<vmem>>, vector<1x32xf32>
    %c2 = arith.constant 2 : index
    %c0_7 = arith.constant 0 : index
    %6 = vector.load %arg3[%c2, %c0_7] : memref<3x32xf32, #tpu.memory_space<vmem>>, vector<1x32xf32>
    %cst_8 = arith.constant dense<0.000000e+00> : vector<32xf32>
    %7 = vector.multi_reduction <add>, %3, %cst_8 [0] : vector<250x32xf32> to vector<32xf32>
    %8 = vector.shape_cast %7 : vector<32xf32> to vector<1x32xf32>
    %cst_9 = arith.constant 2.500000e+02 : f32
    %9 = vector.broadcast %cst_9 : f32 to vector<1x32xf32>
    %10 = arith.divf %8, %9 : vector<1x32xf32>
    %11 = vector.broadcast %10 : vector<1x32xf32> to vector<250x32xf32>
    %12 = arith.subf %3, %11 : vector<250x32xf32>
    %13 = arith.mulf %12, %12 : vector<250x32xf32>
    %cst_10 = arith.constant dense<0.000000e+00> : vector<32xf32>
    %14 = vector.multi_reduction <add>, %13, %cst_10 [0] : vector<250x32xf32> to vector<32xf32>
    %15 = vector.shape_cast %14 : vector<32xf32> to vector<1x32xf32>
    %cst_11 = arith.constant 2.500000e+02 : f32
    %16 = vector.broadcast %cst_11 : f32 to vector<1x32xf32>
    %17 = arith.divf %15, %16 : vector<1x32xf32>
    %cst_12 = arith.constant 9.99999974E-6 : f32
    %18 = vector.broadcast %cst_12 : f32 to vector<1x32xf32>
    %19 = arith.addf %17, %18 : vector<1x32xf32>
    %20 = math.rsqrt %19 : vector<1x32xf32>
    %21 = arith.mulf %4, %20 : vector<1x32xf32>
    %22 = arith.mulf %10, %21 : vector<1x32xf32>
    %23 = arith.subf %5, %22 : vector<1x32xf32>
    %24 = vector.broadcast %21 : vector<1x32xf32> to vector<250x32xf32>
    %25 = arith.mulf %3, %24 : vector<250x32xf32>
    %26 = vector.broadcast %23 : vector<1x32xf32> to vector<250x32xf32>
    %27 = arith.addf %25, %26 : vector<250x32xf32>
    %cst_13 = arith.constant 0.000000e+00 : f32
    %28 = vector.broadcast %cst_13 : f32 to vector<250x32xf32>
    %29 = arith.cmpf oge, %27, %28 : vector<250x32xf32>
    %30 = vector.broadcast %6 : vector<1x32xf32> to vector<250x32xf32>
    %31 = arith.mulf %30, %27 : vector<250x32xf32>
    %32 = arith.select %29, %27, %31 : vector<250x32xi1>, vector<250x32xf32>
    %c0_14 = arith.constant 0 : index
    %c0_15 = arith.constant 0 : index
    %33 = vector.load %arg4[%c0_14, %c0_15] : memref<384x250xf32, #tpu.memory_space<vmem>>, vector<384x250xf32>
    %cst_16 = arith.constant dense<0.000000e+00> : vector<384x32xf32>
    %34 = tpu.matmul %33, %32, %cst_16 {dimension_numbers = #tpu.dot_dimension_numbers<[1], [0], [0], [1], [0, 0, 1, 1], [], []>} : vector<384x250xf32>, vector<250x32xf32>, vector<384x32xf32> -> vector<384x32xf32>
    %cst_17 = arith.constant 0.000000e+00 : f32
    %35 = vector.broadcast %cst_17 : f32 to vector<32x64xf32>
    %36 = vector.extract_strided_slice %34 {offsets = [0, 0], sizes = [32, 32], strides = [1, 1]} : vector<384x32xf32> to vector<32x32xf32>
    %c0_18 = arith.constant 0 : index
    %c0_19 = arith.constant 0 : index
    %c0_20 = arith.constant 0 : index
    %37 = vector.load %arg5[%c0_18, %c0_19, %c0_20] : memref<12x32x64xf32, #tpu.memory_space<vmem>>, vector<1x32x64xf32>
    %38 = vector.shape_cast %37 : vector<1x32x64xf32> to vector<32x64xf32>
    %cst_21 = arith.constant dense<0.000000e+00> : vector<32x64xf32>
    %39 = tpu.matmul %36, %38, %cst_21 {dimension_numbers = #tpu.dot_dimension_numbers<[1], [0], [0], [1], [0, 0, 1, 1], [], []>} : vector<32x32xf32>, vector<32x64xf32>, vector<32x64xf32> -> vector<32x64xf32>
    %40 = arith.addf %35, %39 : vector<32x64xf32>
    %41 = vector.extract_strided_slice %34 {offsets = [32, 0], sizes = [32, 32], strides = [1, 1]} : vector<384x32xf32> to vector<32x32xf32>
    %c1_22 = arith.constant 1 : index
    %c0_23 = arith.constant 0 : index
    %c0_24 = arith.constant 0 : index
    %42 = vector.load %arg5[%c1_22, %c0_23, %c0_24] : memref<12x32x64xf32, #tpu.memory_space<vmem>>, vector<1x32x64xf32>
    %43 = vector.shape_cast %42 : vector<1x32x64xf32> to vector<32x64xf32>
    %cst_25 = arith.constant dense<0.000000e+00> : vector<32x64xf32>
    %44 = tpu.matmul %41, %43, %cst_25 {dimension_numbers = #tpu.dot_dimension_numbers<[1], [0], [0], [1], [0, 0, 1, 1], [], []>} : vector<32x32xf32>, vector<32x64xf32>, vector<32x64xf32> -> vector<32x64xf32>
    %45 = arith.addf %40, %44 : vector<32x64xf32>
    %46 = vector.extract_strided_slice %34 {offsets = [64, 0], sizes = [32, 32], strides = [1, 1]} : vector<384x32xf32> to vector<32x32xf32>
    %c2_26 = arith.constant 2 : index
    %c0_27 = arith.constant 0 : index
    %c0_28 = arith.constant 0 : index
    %47 = vector.load %arg5[%c2_26, %c0_27, %c0_28] : memref<12x32x64xf32, #tpu.memory_space<vmem>>, vector<1x32x64xf32>
    %48 = vector.shape_cast %47 : vector<1x32x64xf32> to vector<32x64xf32>
    %cst_29 = arith.constant dense<0.000000e+00> : vector<32x64xf32>
    %49 = tpu.matmul %46, %48, %cst_29 {dimension_numbers = #tpu.dot_dimension_numbers<[1], [0], [0], [1], [0, 0, 1, 1], [], []>} : vector<32x32xf32>, vector<32x64xf32>, vector<32x64xf32> -> vector<32x64xf32>
    %50 = arith.addf %45, %49 : vector<32x64xf32>
    %51 = vector.extract_strided_slice %34 {offsets = [96, 0], sizes = [32, 32], strides = [1, 1]} : vector<384x32xf32> to vector<32x32xf32>
    %c3 = arith.constant 3 : index
    %c0_30 = arith.constant 0 : index
    %c0_31 = arith.constant 0 : index
    %52 = vector.load %arg5[%c3, %c0_30, %c0_31] : memref<12x32x64xf32, #tpu.memory_space<vmem>>, vector<1x32x64xf32>
    %53 = vector.shape_cast %52 : vector<1x32x64xf32> to vector<32x64xf32>
    %cst_32 = arith.constant dense<0.000000e+00> : vector<32x64xf32>
    %54 = tpu.matmul %51, %53, %cst_32 {dimension_numbers = #tpu.dot_dimension_numbers<[1], [0], [0], [1], [0, 0, 1, 1], [], []>} : vector<32x32xf32>, vector<32x64xf32>, vector<32x64xf32> -> vector<32x64xf32>
    %55 = arith.addf %50, %54 : vector<32x64xf32>
    %56 = vector.extract_strided_slice %34 {offsets = [128, 0], sizes = [32, 32], strides = [1, 1]} : vector<384x32xf32> to vector<32x32xf32>
    %c4 = arith.constant 4 : index
    %c0_33 = arith.constant 0 : index
    %c0_34 = arith.constant 0 : index
    %57 = vector.load %arg5[%c4, %c0_33, %c0_34] : memref<12x32x64xf32, #tpu.memory_space<vmem>>, vector<1x32x64xf32>
    %58 = vector.shape_cast %57 : vector<1x32x64xf32> to vector<32x64xf32>
    %cst_35 = arith.constant dense<0.000000e+00> : vector<32x64xf32>
    %59 = tpu.matmul %56, %58, %cst_35 {dimension_numbers = #tpu.dot_dimension_numbers<[1], [0], [0], [1], [0, 0, 1, 1], [], []>} : vector<32x32xf32>, vector<32x64xf32>, vector<32x64xf32> -> vector<32x64xf32>
    %60 = arith.addf %55, %59 : vector<32x64xf32>
    %61 = vector.extract_strided_slice %34 {offsets = [160, 0], sizes = [32, 32], strides = [1, 1]} : vector<384x32xf32> to vector<32x32xf32>
    %c5 = arith.constant 5 : index
    %c0_36 = arith.constant 0 : index
    %c0_37 = arith.constant 0 : index
    %62 = vector.load %arg5[%c5, %c0_36, %c0_37] : memref<12x32x64xf32, #tpu.memory_space<vmem>>, vector<1x32x64xf32>
    %63 = vector.shape_cast %62 : vector<1x32x64xf32> to vector<32x64xf32>
    %cst_38 = arith.constant dense<0.000000e+00> : vector<32x64xf32>
    %64 = tpu.matmul %61, %63, %cst_38 {dimension_numbers = #tpu.dot_dimension_numbers<[1], [0], [0], [1], [0, 0, 1, 1], [], []>} : vector<32x32xf32>, vector<32x64xf32>, vector<32x64xf32> -> vector<32x64xf32>
    %65 = arith.addf %60, %64 : vector<32x64xf32>
    %66 = vector.extract_strided_slice %34 {offsets = [192, 0], sizes = [32, 32], strides = [1, 1]} : vector<384x32xf32> to vector<32x32xf32>
    %c6 = arith.constant 6 : index
    %c0_39 = arith.constant 0 : index
    %c0_40 = arith.constant 0 : index
    %67 = vector.load %arg5[%c6, %c0_39, %c0_40] : memref<12x32x64xf32, #tpu.memory_space<vmem>>, vector<1x32x64xf32>
    %68 = vector.shape_cast %67 : vector<1x32x64xf32> to vector<32x64xf32>
    %cst_41 = arith.constant dense<0.000000e+00> : vector<32x64xf32>
    %69 = tpu.matmul %66, %68, %cst_41 {dimension_numbers = #tpu.dot_dimension_numbers<[1], [0], [0], [1], [0, 0, 1, 1], [], []>} : vector<32x32xf32>, vector<32x64xf32>, vector<32x64xf32> -> vector<32x64xf32>
    %70 = arith.addf %65, %69 : vector<32x64xf32>
    %71 = vector.extract_strided_slice %34 {offsets = [224, 0], sizes = [32, 32], strides = [1, 1]} : vector<384x32xf32> to vector<32x32xf32>
    %c7 = arith.constant 7 : index
    %c0_42 = arith.constant 0 : index
    %c0_43 = arith.constant 0 : index
    %72 = vector.load %arg5[%c7, %c0_42, %c0_43] : memref<12x32x64xf32, #tpu.memory_space<vmem>>, vector<1x32x64xf32>
    %73 = vector.shape_cast %72 : vector<1x32x64xf32> to vector<32x64xf32>
    %cst_44 = arith.constant dense<0.000000e+00> : vector<32x64xf32>
    %74 = tpu.matmul %71, %73, %cst_44 {dimension_numbers = #tpu.dot_dimension_numbers<[1], [0], [0], [1], [0, 0, 1, 1], [], []>} : vector<32x32xf32>, vector<32x64xf32>, vector<32x64xf32> -> vector<32x64xf32>
    %75 = arith.addf %70, %74 : vector<32x64xf32>
    %76 = vector.extract_strided_slice %34 {offsets = [256, 0], sizes = [32, 32], strides = [1, 1]} : vector<384x32xf32> to vector<32x32xf32>
    %c8 = arith.constant 8 : index
    %c0_45 = arith.constant 0 : index
    %c0_46 = arith.constant 0 : index
    %77 = vector.load %arg5[%c8, %c0_45, %c0_46] : memref<12x32x64xf32, #tpu.memory_space<vmem>>, vector<1x32x64xf32>
    %78 = vector.shape_cast %77 : vector<1x32x64xf32> to vector<32x64xf32>
    %cst_47 = arith.constant dense<0.000000e+00> : vector<32x64xf32>
    %79 = tpu.matmul %76, %78, %cst_47 {dimension_numbers = #tpu.dot_dimension_numbers<[1], [0], [0], [1], [0, 0, 1, 1], [], []>} : vector<32x32xf32>, vector<32x64xf32>, vector<32x64xf32> -> vector<32x64xf32>
    %80 = arith.addf %75, %79 : vector<32x64xf32>
    %81 = vector.extract_strided_slice %34 {offsets = [288, 0], sizes = [32, 32], strides = [1, 1]} : vector<384x32xf32> to vector<32x32xf32>
    %c9 = arith.constant 9 : index
    %c0_48 = arith.constant 0 : index
    %c0_49 = arith.constant 0 : index
    %82 = vector.load %arg5[%c9, %c0_48, %c0_49] : memref<12x32x64xf32, #tpu.memory_space<vmem>>, vector<1x32x64xf32>
    %83 = vector.shape_cast %82 : vector<1x32x64xf32> to vector<32x64xf32>
    %cst_50 = arith.constant dense<0.000000e+00> : vector<32x64xf32>
    %84 = tpu.matmul %81, %83, %cst_50 {dimension_numbers = #tpu.dot_dimension_numbers<[1], [0], [0], [1], [0, 0, 1, 1], [], []>} : vector<32x32xf32>, vector<32x64xf32>, vector<32x64xf32> -> vector<32x64xf32>
    %85 = arith.addf %80, %84 : vector<32x64xf32>
    %86 = vector.extract_strided_slice %34 {offsets = [320, 0], sizes = [32, 32], strides = [1, 1]} : vector<384x32xf32> to vector<32x32xf32>
    %c10 = arith.constant 10 : index
    %c0_51 = arith.constant 0 : index
    %c0_52 = arith.constant 0 : index
    %87 = vector.load %arg5[%c10, %c0_51, %c0_52] : memref<12x32x64xf32, #tpu.memory_space<vmem>>, vector<1x32x64xf32>
    %88 = vector.shape_cast %87 : vector<1x32x64xf32> to vector<32x64xf32>
    %cst_53 = arith.constant dense<0.000000e+00> : vector<32x64xf32>
    %89 = tpu.matmul %86, %88, %cst_53 {dimension_numbers = #tpu.dot_dimension_numbers<[1], [0], [0], [1], [0, 0, 1, 1], [], []>} : vector<32x32xf32>, vector<32x64xf32>, vector<32x64xf32> -> vector<32x64xf32>
    %90 = arith.addf %85, %89 : vector<32x64xf32>
    %91 = vector.extract_strided_slice %34 {offsets = [352, 0], sizes = [32, 32], strides = [1, 1]} : vector<384x32xf32> to vector<32x32xf32>
    %c11 = arith.constant 11 : index
    %c0_54 = arith.constant 0 : index
    %c0_55 = arith.constant 0 : index
    %92 = vector.load %arg5[%c11, %c0_54, %c0_55] : memref<12x32x64xf32, #tpu.memory_space<vmem>>, vector<1x32x64xf32>
    %93 = vector.shape_cast %92 : vector<1x32x64xf32> to vector<32x64xf32>
    %cst_56 = arith.constant dense<0.000000e+00> : vector<32x64xf32>
    %94 = tpu.matmul %91, %93, %cst_56 {dimension_numbers = #tpu.dot_dimension_numbers<[1], [0], [0], [1], [0, 0, 1, 1], [], []>} : vector<32x32xf32>, vector<32x64xf32>, vector<32x64xf32> -> vector<32x64xf32>
    %95 = arith.addf %90, %94 : vector<32x64xf32>
    %c0_57 = arith.constant 0 : index
    %c0_58 = arith.constant 0 : index
    %96 = vector.load %arg6[%c0_57, %c0_58] : memref<3x64xf32, #tpu.memory_space<vmem>>, vector<1x64xf32>
    %c1_59 = arith.constant 1 : index
    %c0_60 = arith.constant 0 : index
    %97 = vector.load %arg6[%c1_59, %c0_60] : memref<3x64xf32, #tpu.memory_space<vmem>>, vector<1x64xf32>
    %c2_61 = arith.constant 2 : index
    %c0_62 = arith.constant 0 : index
    %98 = vector.load %arg6[%c2_61, %c0_62] : memref<3x64xf32, #tpu.memory_space<vmem>>, vector<1x64xf32>
    %cst_63 = arith.constant dense<0.000000e+00> : vector<64xf32>
    %99 = vector.multi_reduction <add>, %95, %cst_63 [0] : vector<32x64xf32> to vector<64xf32>
    %100 = vector.shape_cast %99 : vector<64xf32> to vector<1x64xf32>
    %cst_64 = arith.constant 3.200000e+01 : f32
    %101 = vector.broadcast %cst_64 : f32 to vector<1x64xf32>
    %102 = arith.divf %100, %101 : vector<1x64xf32>
    %103 = vector.broadcast %102 : vector<1x64xf32> to vector<32x64xf32>
    %104 = arith.subf %95, %103 : vector<32x64xf32>
    %105 = arith.mulf %104, %104 : vector<32x64xf32>
    %cst_65 = arith.constant dense<0.000000e+00> : vector<64xf32>
    %106 = vector.multi_reduction <add>, %105, %cst_65 [0] : vector<32x64xf32> to vector<64xf32>
    %107 = vector.shape_cast %106 : vector<64xf32> to vector<1x64xf32>
    %cst_66 = arith.constant 3.200000e+01 : f32
    %108 = vector.broadcast %cst_66 : f32 to vector<1x64xf32>
    %109 = arith.divf %107, %108 : vector<1x64xf32>
    %cst_67 = arith.constant 9.99999974E-6 : f32
    %110 = vector.broadcast %cst_67 : f32 to vector<1x64xf32>
    %111 = arith.addf %109, %110 : vector<1x64xf32>
    %112 = math.rsqrt %111 : vector<1x64xf32>
    %113 = arith.mulf %96, %112 : vector<1x64xf32>
    %114 = arith.mulf %102, %113 : vector<1x64xf32>
    %115 = arith.subf %97, %114 : vector<1x64xf32>
    %116 = vector.broadcast %113 : vector<1x64xf32> to vector<32x64xf32>
    %117 = arith.mulf %95, %116 : vector<32x64xf32>
    %118 = vector.broadcast %115 : vector<1x64xf32> to vector<32x64xf32>
    %119 = arith.addf %117, %118 : vector<32x64xf32>
    %cst_68 = arith.constant 0.000000e+00 : f32
    %120 = vector.broadcast %cst_68 : f32 to vector<32x64xf32>
    %121 = arith.cmpf oge, %119, %120 : vector<32x64xf32>
    %122 = vector.broadcast %98 : vector<1x64xf32> to vector<32x64xf32>
    %123 = arith.mulf %122, %119 : vector<32x64xf32>
    %124 = arith.select %121, %119, %123 : vector<32x64xi1>, vector<32x64xf32>
    %c0_69 = arith.constant 0 : index
    %c0_70 = arith.constant 0 : index
    %125 = vector.load %arg7[%c0_69, %c0_70] : memref<48x32xf32, #tpu.memory_space<vmem>>, vector<48x32xf32>
    %cst_71 = arith.constant dense<0.000000e+00> : vector<48x64xf32>
    %126 = tpu.matmul %125, %124, %cst_71 {dimension_numbers = #tpu.dot_dimension_numbers<[1], [0], [0], [1], [0, 0, 1, 1], [], []>} : vector<48x32xf32>, vector<32x64xf32>, vector<48x64xf32> -> vector<48x64xf32>
    %cst_72 = arith.constant 0.000000e+00 : f32
    %127 = vector.broadcast %cst_72 : f32 to vector<4x32xf32>
    %128 = vector.extract_strided_slice %126 {offsets = [0, 0], sizes = [4, 64], strides = [1, 1]} : vector<48x64xf32> to vector<4x64xf32>
    %c0_73 = arith.constant 0 : index
    %c0_74 = arith.constant 0 : index
    %c0_75 = arith.constant 0 : index
    %129 = vector.load %arg8[%c0_73, %c0_74, %c0_75] : memref<12x64x32xf32, #tpu.memory_space<vmem>>, vector<1x64x32xf32>
    %130 = vector.shape_cast %129 : vector<1x64x32xf32> to vector<64x32xf32>
    %cst_76 = arith.constant dense<0.000000e+00> : vector<4x32xf32>
    %131 = tpu.matmul %128, %130, %cst_76 {dimension_numbers = #tpu.dot_dimension_numbers<[1], [0], [0], [1], [0, 0, 1, 1], [], []>} : vector<4x64xf32>, vector<64x32xf32>, vector<4x32xf32> -> vector<4x32xf32>
    %132 = arith.addf %127, %131 : vector<4x32xf32>
    %133 = vector.extract_strided_slice %126 {offsets = [4, 0], sizes = [4, 64], strides = [1, 1]} : vector<48x64xf32> to vector<4x64xf32>
    %c1_77 = arith.constant 1 : index
    %c0_78 = arith.constant 0 : index
    %c0_79 = arith.constant 0 : index
    %134 = vector.load %arg8[%c1_77, %c0_78, %c0_79] : memref<12x64x32xf32, #tpu.memory_space<vmem>>, vector<1x64x32xf32>
    %135 = vector.shape_cast %134 : vector<1x64x32xf32> to vector<64x32xf32>
    %cst_80 = arith.constant dense<0.000000e+00> : vector<4x32xf32>
    %136 = tpu.matmul %133, %135, %cst_80 {dimension_numbers = #tpu.dot_dimension_numbers<[1], [0], [0], [1], [0, 0, 1, 1], [], []>} : vector<4x64xf32>, vector<64x32xf32>, vector<4x32xf32> -> vector<4x32xf32>
    %137 = arith.addf %132, %136 : vector<4x32xf32>
    %138 = vector.extract_strided_slice %126 {offsets = [8, 0], sizes = [4, 64], strides = [1, 1]} : vector<48x64xf32> to vector<4x64xf32>
    %c2_81 = arith.constant 2 : index
    %c0_82 = arith.constant 0 : index
    %c0_83 = arith.constant 0 : index
    %139 = vector.load %arg8[%c2_81, %c0_82, %c0_83] : memref<12x64x32xf32, #tpu.memory_space<vmem>>, vector<1x64x32xf32>
    %140 = vector.shape_cast %139 : vector<1x64x32xf32> to vector<64x32xf32>
    %cst_84 = arith.constant dense<0.000000e+00> : vector<4x32xf32>
    %141 = tpu.matmul %138, %140, %cst_84 {dimension_numbers = #tpu.dot_dimension_numbers<[1], [0], [0], [1], [0, 0, 1, 1], [], []>} : vector<4x64xf32>, vector<64x32xf32>, vector<4x32xf32> -> vector<4x32xf32>
    %142 = arith.addf %137, %141 : vector<4x32xf32>
    %143 = vector.extract_strided_slice %126 {offsets = [12, 0], sizes = [4, 64], strides = [1, 1]} : vector<48x64xf32> to vector<4x64xf32>
    %c3_85 = arith.constant 3 : index
    %c0_86 = arith.constant 0 : index
    %c0_87 = arith.constant 0 : index
    %144 = vector.load %arg8[%c3_85, %c0_86, %c0_87] : memref<12x64x32xf32, #tpu.memory_space<vmem>>, vector<1x64x32xf32>
    %145 = vector.shape_cast %144 : vector<1x64x32xf32> to vector<64x32xf32>
    %cst_88 = arith.constant dense<0.000000e+00> : vector<4x32xf32>
    %146 = tpu.matmul %143, %145, %cst_88 {dimension_numbers = #tpu.dot_dimension_numbers<[1], [0], [0], [1], [0, 0, 1, 1], [], []>} : vector<4x64xf32>, vector<64x32xf32>, vector<4x32xf32> -> vector<4x32xf32>
    %147 = arith.addf %142, %146 : vector<4x32xf32>
    %148 = vector.extract_strided_slice %126 {offsets = [16, 0], sizes = [4, 64], strides = [1, 1]} : vector<48x64xf32> to vector<4x64xf32>
    %c4_89 = arith.constant 4 : index
    %c0_90 = arith.constant 0 : index
    %c0_91 = arith.constant 0 : index
    %149 = vector.load %arg8[%c4_89, %c0_90, %c0_91] : memref<12x64x32xf32, #tpu.memory_space<vmem>>, vector<1x64x32xf32>
    %150 = vector.shape_cast %149 : vector<1x64x32xf32> to vector<64x32xf32>
    %cst_92 = arith.constant dense<0.000000e+00> : vector<4x32xf32>
    %151 = tpu.matmul %148, %150, %cst_92 {dimension_numbers = #tpu.dot_dimension_numbers<[1], [0], [0], [1], [0, 0, 1, 1], [], []>} : vector<4x64xf32>, vector<64x32xf32>, vector<4x32xf32> -> vector<4x32xf32>
    %152 = arith.addf %147, %151 : vector<4x32xf32>
    %153 = vector.extract_strided_slice %126 {offsets = [20, 0], sizes = [4, 64], strides = [1, 1]} : vector<48x64xf32> to vector<4x64xf32>
    %c5_93 = arith.constant 5 : index
    %c0_94 = arith.constant 0 : index
    %c0_95 = arith.constant 0 : index
    %154 = vector.load %arg8[%c5_93, %c0_94, %c0_95] : memref<12x64x32xf32, #tpu.memory_space<vmem>>, vector<1x64x32xf32>
    %155 = vector.shape_cast %154 : vector<1x64x32xf32> to vector<64x32xf32>
    %cst_96 = arith.constant dense<0.000000e+00> : vector<4x32xf32>
    %156 = tpu.matmul %153, %155, %cst_96 {dimension_numbers = #tpu.dot_dimension_numbers<[1], [0], [0], [1], [0, 0, 1, 1], [], []>} : vector<4x64xf32>, vector<64x32xf32>, vector<4x32xf32> -> vector<4x32xf32>
    %157 = arith.addf %152, %156 : vector<4x32xf32>
    %158 = vector.extract_strided_slice %126 {offsets = [24, 0], sizes = [4, 64], strides = [1, 1]} : vector<48x64xf32> to vector<4x64xf32>
    %c6_97 = arith.constant 6 : index
    %c0_98 = arith.constant 0 : index
    %c0_99 = arith.constant 0 : index
    %159 = vector.load %arg8[%c6_97, %c0_98, %c0_99] : memref<12x64x32xf32, #tpu.memory_space<vmem>>, vector<1x64x32xf32>
    %160 = vector.shape_cast %159 : vector<1x64x32xf32> to vector<64x32xf32>
    %cst_100 = arith.constant dense<0.000000e+00> : vector<4x32xf32>
    %161 = tpu.matmul %158, %160, %cst_100 {dimension_numbers = #tpu.dot_dimension_numbers<[1], [0], [0], [1], [0, 0, 1, 1], [], []>} : vector<4x64xf32>, vector<64x32xf32>, vector<4x32xf32> -> vector<4x32xf32>
    %162 = arith.addf %157, %161 : vector<4x32xf32>
    %163 = vector.extract_strided_slice %126 {offsets = [28, 0], sizes = [4, 64], strides = [1, 1]} : vector<48x64xf32> to vector<4x64xf32>
    %c7_101 = arith.constant 7 : index
    %c0_102 = arith.constant 0 : index
    %c0_103 = arith.constant 0 : index
    %164 = vector.load %arg8[%c7_101, %c0_102, %c0_103] : memref<12x64x32xf32, #tpu.memory_space<vmem>>, vector<1x64x32xf32>
    %165 = vector.shape_cast %164 : vector<1x64x32xf32> to vector<64x32xf32>
    %cst_104 = arith.constant dense<0.000000e+00> : vector<4x32xf32>
    %166 = tpu.matmul %163, %165, %cst_104 {dimension_numbers = #tpu.dot_dimension_numbers<[1], [0], [0], [1], [0, 0, 1, 1], [], []>} : vector<4x64xf32>, vector<64x32xf32>, vector<4x32xf32> -> vector<4x32xf32>
    %167 = arith.addf %162, %166 : vector<4x32xf32>
    %168 = vector.extract_strided_slice %126 {offsets = [32, 0], sizes = [4, 64], strides = [1, 1]} : vector<48x64xf32> to vector<4x64xf32>
    %c8_105 = arith.constant 8 : index
    %c0_106 = arith.constant 0 : index
    %c0_107 = arith.constant 0 : index
    %169 = vector.load %arg8[%c8_105, %c0_106, %c0_107] : memref<12x64x32xf32, #tpu.memory_space<vmem>>, vector<1x64x32xf32>
    %170 = vector.shape_cast %169 : vector<1x64x32xf32> to vector<64x32xf32>
    %cst_108 = arith.constant dense<0.000000e+00> : vector<4x32xf32>
    %171 = tpu.matmul %168, %170, %cst_108 {dimension_numbers = #tpu.dot_dimension_numbers<[1], [0], [0], [1], [0, 0, 1, 1], [], []>} : vector<4x64xf32>, vector<64x32xf32>, vector<4x32xf32> -> vector<4x32xf32>
    %172 = arith.addf %167, %171 : vector<4x32xf32>
    %173 = vector.extract_strided_slice %126 {offsets = [36, 0], sizes = [4, 64], strides = [1, 1]} : vector<48x64xf32> to vector<4x64xf32>
    %c9_109 = arith.constant 9 : index
    %c0_110 = arith.constant 0 : index
    %c0_111 = arith.constant 0 : index
    %174 = vector.load %arg8[%c9_109, %c0_110, %c0_111] : memref<12x64x32xf32, #tpu.memory_space<vmem>>, vector<1x64x32xf32>
    %175 = vector.shape_cast %174 : vector<1x64x32xf32> to vector<64x32xf32>
    %cst_112 = arith.constant dense<0.000000e+00> : vector<4x32xf32>
    %176 = tpu.matmul %173, %175, %cst_112 {dimension_numbers = #tpu.dot_dimension_numbers<[1], [0], [0], [1], [0, 0, 1, 1], [], []>} : vector<4x64xf32>, vector<64x32xf32>, vector<4x32xf32> -> vector<4x32xf32>
    %177 = arith.addf %172, %176 : vector<4x32xf32>
    %178 = vector.extract_strided_slice %126 {offsets = [40, 0], sizes = [4, 64], strides = [1, 1]} : vector<48x64xf32> to vector<4x64xf32>
    %c10_113 = arith.constant 10 : index
    %c0_114 = arith.constant 0 : index
    %c0_115 = arith.constant 0 : index
    %179 = vector.load %arg8[%c10_113, %c0_114, %c0_115] : memref<12x64x32xf32, #tpu.memory_space<vmem>>, vector<1x64x32xf32>
    %180 = vector.shape_cast %179 : vector<1x64x32xf32> to vector<64x32xf32>
    %cst_116 = arith.constant dense<0.000000e+00> : vector<4x32xf32>
    %181 = tpu.matmul %178, %180, %cst_116 {dimension_numbers = #tpu.dot_dimension_numbers<[1], [0], [0], [1], [0, 0, 1, 1], [], []>} : vector<4x64xf32>, vector<64x32xf32>, vector<4x32xf32> -> vector<4x32xf32>
    %182 = arith.addf %177, %181 : vector<4x32xf32>
    %183 = vector.extract_strided_slice %126 {offsets = [44, 0], sizes = [4, 64], strides = [1, 1]} : vector<48x64xf32> to vector<4x64xf32>
    %c11_117 = arith.constant 11 : index
    %c0_118 = arith.constant 0 : index
    %c0_119 = arith.constant 0 : index
    %184 = vector.load %arg8[%c11_117, %c0_118, %c0_119] : memref<12x64x32xf32, #tpu.memory_space<vmem>>, vector<1x64x32xf32>
    %185 = vector.shape_cast %184 : vector<1x64x32xf32> to vector<64x32xf32>
    %cst_120 = arith.constant dense<0.000000e+00> : vector<4x32xf32>
    %186 = tpu.matmul %183, %185, %cst_120 {dimension_numbers = #tpu.dot_dimension_numbers<[1], [0], [0], [1], [0, 0, 1, 1], [], []>} : vector<4x64xf32>, vector<64x32xf32>, vector<4x32xf32> -> vector<4x32xf32>
    %187 = arith.addf %182, %186 : vector<4x32xf32>
    %c0_121 = arith.constant 0 : index
    %c0_122 = arith.constant 0 : index
    %188 = vector.load %arg9[%c0_121, %c0_122] : memref<3x32xf32, #tpu.memory_space<vmem>>, vector<1x32xf32>
    %c1_123 = arith.constant 1 : index
    %c0_124 = arith.constant 0 : index
    %189 = vector.load %arg9[%c1_123, %c0_124] : memref<3x32xf32, #tpu.memory_space<vmem>>, vector<1x32xf32>
    %c2_125 = arith.constant 2 : index
    %c0_126 = arith.constant 0 : index
    %190 = vector.load %arg9[%c2_125, %c0_126] : memref<3x32xf32, #tpu.memory_space<vmem>>, vector<1x32xf32>
    %cst_127 = arith.constant dense<0.000000e+00> : vector<32xf32>
    %191 = vector.multi_reduction <add>, %187, %cst_127 [0] : vector<4x32xf32> to vector<32xf32>
    %192 = vector.shape_cast %191 : vector<32xf32> to vector<1x32xf32>
    %cst_128 = arith.constant 4.000000e+00 : f32
    %193 = vector.broadcast %cst_128 : f32 to vector<1x32xf32>
    %194 = arith.divf %192, %193 : vector<1x32xf32>
    %195 = vector.broadcast %194 : vector<1x32xf32> to vector<4x32xf32>
    %196 = arith.subf %187, %195 : vector<4x32xf32>
    %197 = arith.mulf %196, %196 : vector<4x32xf32>
    %cst_129 = arith.constant dense<0.000000e+00> : vector<32xf32>
    %198 = vector.multi_reduction <add>, %197, %cst_129 [0] : vector<4x32xf32> to vector<32xf32>
    %199 = vector.shape_cast %198 : vector<32xf32> to vector<1x32xf32>
    %cst_130 = arith.constant 4.000000e+00 : f32
    %200 = vector.broadcast %cst_130 : f32 to vector<1x32xf32>
    %201 = arith.divf %199, %200 : vector<1x32xf32>
    %cst_131 = arith.constant 9.99999974E-6 : f32
    %202 = vector.broadcast %cst_131 : f32 to vector<1x32xf32>
    %203 = arith.addf %201, %202 : vector<1x32xf32>
    %204 = math.rsqrt %203 : vector<1x32xf32>
    %205 = arith.mulf %188, %204 : vector<1x32xf32>
    %206 = arith.mulf %194, %205 : vector<1x32xf32>
    %207 = arith.subf %189, %206 : vector<1x32xf32>
    %208 = vector.broadcast %205 : vector<1x32xf32> to vector<4x32xf32>
    %209 = arith.mulf %187, %208 : vector<4x32xf32>
    %210 = vector.broadcast %207 : vector<1x32xf32> to vector<4x32xf32>
    %211 = arith.addf %209, %210 : vector<4x32xf32>
    %cst_132 = arith.constant 0.000000e+00 : f32
    %212 = vector.broadcast %cst_132 : f32 to vector<4x32xf32>
    %213 = arith.cmpf oge, %211, %212 : vector<4x32xf32>
    %214 = vector.broadcast %190 : vector<1x32xf32> to vector<4x32xf32>
    %215 = arith.mulf %214, %211 : vector<4x32xf32>
    %216 = arith.select %213, %211, %215 : vector<4x32xi1>, vector<4x32xf32>
    %c0_133 = arith.constant 0 : index
    %c0_134 = arith.constant 0 : index
    %c0_135 = arith.constant 0 : index
    %217 = vector.load %arg10[%c0_133, %c0_134, %c0_135] : memref<1x4x32xf32, #tpu.memory_space<vmem>>, vector<1x4x32xf32>
    %218 = vector.shape_cast %217 : vector<1x4x32xf32> to vector<4x32xf32>
    %219 = vector.shape_cast %216 : vector<4x32xf32> to vector<1x4x32xf32>
    tpu.vector_store %arg10[%c0_133, %c0_134, %c0_135], %219 {strides = array<i32>} : memref<1x4x32xf32, #tpu.memory_space<vmem>>, vector<1x4x32xf32>,
    return
  }
  func.func @transform_0(%arg0: i32) -> (i32, i32, i32) {
    %c0_i32 = arith.constant 0 : i32
    %c0_i32_0 = arith.constant 0 : i32
    %c0_i32_1 = arith.constant 0 : i32
    return %arg0, %c0_i32, %c0_i32_0 : i32, i32, i32
  }
  func.func @transform_1(%arg0: i32) -> (i32, i32) {
    %c0_i32 = arith.constant 0 : i32
    %c0_i32_0 = arith.constant 0 : i32
    %c0_i32_1 = arith.constant 0 : i32
    return %c0_i32, %c0_i32_0 : i32, i32
  }
  func.func @transform_2(%arg0: i32) -> (i32, i32) {
    %c0_i32 = arith.constant 0 : i32
    %c0_i32_0 = arith.constant 0 : i32
    %c0_i32_1 = arith.constant 0 : i32
    return %c0_i32, %c0_i32_0 : i32, i32
  }
  func.func @transform_3(%arg0: i32) -> (i32, i32) {
    %c0_i32 = arith.constant 0 : i32
    %c0_i32_0 = arith.constant 0 : i32
    %c0_i32_1 = arith.constant 0 : i32
    return %c0_i32, %c0_i32_0 : i32, i32
  }
  func.func @transform_4(%arg0: i32) -> (i32, i32, i32) {
    %c0_i32 = arith.constant 0 : i32
    %c0_i32_0 = arith.constant 0 : i32
    %c0_i32_1 = arith.constant 0 : i32
    %c0_i32_2 = arith.constant 0 : i32
    return %c0_i32, %c0_i32_0, %c0_i32_1 : i32, i32, i32
  }
  func.func @transform_5(%arg0: i32) -> (i32, i32) {
    %c0_i32 = arith.constant 0 : i32
    %c0_i32_0 = arith.constant 0 : i32
    %c0_i32_1 = arith.constant 0 : i32
    return %c0_i32, %c0_i32_0 : i32, i32
  }
  func.func @transform_6(%arg0: i32) -> (i32, i32) {
    %c0_i32 = arith.constant 0 : i32
    %c0_i32_0 = arith.constant 0 : i32
    %c0_i32_1 = arith.constant 0 : i32
    return %c0_i32, %c0_i32_0 : i32, i32
  }
  func.func @transform_7(%arg0: i32) -> (i32, i32, i32) {
    %c0_i32 = arith.constant 0 : i32
    %c0_i32_0 = arith.constant 0 : i32
    %c0_i32_1 = arith.constant 0 : i32
    %c0_i32_2 = arith.constant 0 : i32
    return %c0_i32, %c0_i32_0, %c0_i32_1 : i32, i32, i32
  }
  func.func @transform_8(%arg0: i32) -> (i32, i32) {
    %c0_i32 = arith.constant 0 : i32
    %c0_i32_0 = arith.constant 0 : i32
    %c0_i32_1 = arith.constant 0 : i32
    return %c0_i32, %c0_i32_0 : i32, i32
  }
  func.func @transform_9(%arg0: i32) -> (i32, i32, i32) {
    %c0_i32 = arith.constant 0 : i32
    %c0_i32_0 = arith.constant 0 : i32
    %c0_i32_1 = arith.constant 0 : i32
    return %arg0, %c0_i32, %c0_i32_0 : i32, i32, i32
  }
}

</mosaic_0001>

<llo_original>
// kernel: tpu_custom_call.1
$region0: #{tpu_custom_call.1}
  #allocation0 [shape = 'u32[]', space=smem, size = 0x4, offset = 0x4, fixed_abs, tag = 'smem constant byte address 0x4 - core index']
  #allocation1 [shape = 'u32[144,128]{1,0:T(1,128)}', space=vmem, size = 0x12000, scoped, tag = 'internal scratch']
  %s0 = inlined_call_operand.vmem [shape: f32[2,250,18], index: 0, kind: input, shape index: {}]
  %s1 = inlined_call_operand.vmem [shape: f32[18,32], index: 1, kind: input, shape index: {}]
  %s2 = inlined_call_operand.vmem [shape: f32[3,32], index: 2, kind: input, shape index: {}]
  %s3 = inlined_call_operand.vmem [shape: f32[384,250], index: 3, kind: input, shape index: {}]
  %s4 = inlined_call_operand.vmem [shape: f32[12,32,64], index: 4, kind: input, shape index: {}]
  %s5 = inlined_call_operand.vmem [shape: f32[3,64], index: 5, kind: input, shape index: {}]
  %s6 = inlined_call_operand.vmem [shape: f32[48,32], index: 6, kind: input, shape index: {}]
  %s7 = inlined_call_operand.vmem [shape: f32[12,64,32], index: 7, kind: input, shape index: {}]
  %s8 = inlined_call_operand.vmem [shape: f32[3,32], index: 8, kind: input, shape index: {}]
  %s9 = inlined_call_operand.hbm [shape: f32[2,4,32], index: 9, kind: output, shape index: {}]
  %s10 = sld [smem:[#allocation0]]
  $region69: #{tpu_custom_call.1} parent=0
    _
  %s12 = ssub.s32 1, %s10
  %s13 = scalar_select 0, %s12, %s10
  $region1: #{tpu_custom_call.1} parent=0
    #allocation2 [shape = 'u8[4096]{0}', space=vmem, size = 0x1000, scoped, tag = 'output window, operand 0']
    #allocation3 [shape = 's32[2]{0}', space=sflag, size = 0x8, scoped, tag = 'scoped memory for tpu_custom_call.1']
    %14 = vsyncpa [#allocation3], 0
    %s15 = scalar_lea.sflag [#allocation3], 1
    %16 = vsyncpa %s15, 0
    loop: start=0, step=1, limit=4
    $region2: #{tpu_custom_call.1} parent=1 // loop_pre_header
      _
    $region3: #{tpu_custom_call.1} parent=1 // loop_header
      %s18 = sphi 0, %s22
      %p19 = scmp.ge.s32.totalorder %s18, 4
      %s28 = sphi 0, %s30
      %s31 = sphi 0, %s28
      %s32 = sphi 0, %s31
      %s48 = sphi 0, %s32
      %s52 = sphi 0, %s52
      %s54 = sphi 0, %s52
      %s55 = sphi 0, %s54
      %s69 = sphi 0, %s55
      %s73 = sphi 0, %s73
      %s75 = sphi 0, %s73
      %s76 = sphi 0, %s75
      %s90 = sphi 0, %s76
      %s94 = sphi 0, %s94
      %s96 = sphi 0, %s94
      %s97 = sphi 0, %s96
      %s111 = sphi 0, %s97
      %s115 = sphi 0, %s115
      %s117 = sphi 0, %s115
      %s118 = sphi 0, %s117
      %s132 = sphi 0, %s118
      %s136 = sphi 0, %s136
      %s138 = sphi 0, %s136
      %s139 = sphi 0, %s138
      %s153 = sphi 0, %s139
      %s157 = sphi 0, %s157
      %s159 = sphi 0, %s157
      %s160 = sphi 0, %s159
      %s174 = sphi 0, %s160
      %s178 = sphi 0, %s178
      %s180 = sphi 0, %s178
      %s181 = sphi 0, %s180
      %s195 = sphi 0, %s181
      %s199 = sphi 0, %s199
      %s201 = sphi 0, %s199
      %s202 = sphi 0, %s201
      %s216 = sphi 0, %s202
      %s222 = sphi 0, %s224
      %s225 = sphi 0, %s222
      %s226 = sphi 0, %s225
      %s242 = sphi 0, %s226
    $region4: #{tpu_custom_call.1} parent=1 // loop_header_branch
      %21 = sbr.rel (%p19) target = $region8
    $region5: #{tpu_custom_call.1} parent=1 // loop_body
      %s23 = ssub.s32 %s18, 1
      %s24 = ssub.s32 %s18, 2
      %s25 = sadd.s32 %s18, 1
      %s26 = ssub.s32 %s18, %s25
      %p27 = scmp.eq.s32.totalorder %s26, 0
      %s29 = sadd.s32 %s28, 1
      %s30 = scalar_select %p27, %s28, %s29
      %p33 = pneg %p27
      %p34 = scmp.eq.s32.totalorder %s18, 1
      %p35 = por %p33, %p34
      %p36 = scmp.ne.s32.totalorder %s28, %s31
      %p37 = scmp.eq.s32.totalorder %s18, 0
      %p38 = por %p36, %p37
      %p39 = scmp.ne.s32.totalorder %s28, %s31
      %p40 = scmp.eq.s32.totalorder %s23, 1
      %p41 = por %p39, %p40
      %p42 = scmp.ne.s32.totalorder %s31, %s32
      %p43 = scmp.eq.s32.totalorder %s23, 0
      %p44 = por %p42, %p43
      %p45 = scmp.ne.s32.totalorder %s31, %s32
      %p46 = scmp.eq.s32.totalorder %s24, 1
      %p47 = por %p45, %p46
      %p49 = scmp.ne.s32.totalorder %s32, %s48
      %p50 = scmp.eq.s32.totalorder %s24, 0
      %p51 = por %p49, %p50
      %s53 = sadd.s32 %s52, 1
      %p56 = scmp.eq.s32.totalorder %s18, 1
      %p57 = scmp.ne.s32.totalorder %s52, %s54
      %p58 = scmp.eq.s32.totalorder %s18, 0
      %p59 = por %p57, %p58
      %p60 = scmp.ne.s32.totalorder %s52, %s54
      %p61 = scmp.eq.s32.totalorder %s23, 1
      %p62 = por %p60, %p61
      %p63 = scmp.ne.s32.totalorder %s54, %s55
      %p64 = scmp.eq.s32.totalorder %s23, 0
      %p65 = por %p63, %p64
      %p66 = scmp.ne.s32.totalorder %s54, %s55
      %p67 = scmp.eq.s32.totalorder %s24, 1
      %p68 = por %p66, %p67
      %p70 = scmp.ne.s32.totalorder %s55, %s69
      %p71 = scmp.eq.s32.totalorder %s24, 0
      %p72 = por %p70, %p71
      %s74 = sadd.s32 %s73, 1
      %p77 = scmp.eq.s32.totalorder %s18, 1
      %p78 = scmp.ne.s32.totalorder %s73, %s75
      %p79 = scmp.eq.s32.totalorder %s18, 0
      %p80 = por %p78, %p79
      %p81 = scmp.ne.s32.totalorder %s73, %s75
      %p82 = scmp.eq.s32.totalorder %s23, 1
      %p83 = por %p81, %p82
      %p84 = scmp.ne.s32.totalorder %s75, %s76
      %p85 = scmp.eq.s32.totalorder %s23, 0
      %p86 = por %p84, %p85
      %p87 = scmp.ne.s32.totalorder %s75, %s76
      %p88 = scmp.eq.s32.totalorder %s24, 1
      %p89 = por %p87, %p88
      %p91 = scmp.ne.s32.totalorder %s76, %s90
      %p92 = scmp.eq.s32.totalorder %s24, 0
      %p93 = por %p91, %p92
      %s95 = sadd.s32 %s94, 1
      %p98 = scmp.eq.s32.totalorder %s18, 1
      %p99 = scmp.ne.s32.totalorder %s94, %s96
      %p100 = scmp.eq.s32.totalorder %s18, 0
      %p101 = por %p99, %p100
      %p102 = scmp.ne.s32.totalorder %s94, %s96
      %p103 = scmp.eq.s32.totalorder %s23, 1
      %p104 = por %p102, %p103
      %p105 = scmp.ne.s32.totalorder %s96, %s97
      %p106 = scmp.eq.s32.totalorder %s23, 0
      %p107 = por %p105, %p106
      %p108 = scmp.ne.s32.totalorder %s96, %s97
      %p109 = scmp.eq.s32.totalorder %s24, 1
      %p110 = por %p108, %p109
      %p112 = scmp.ne.s32.totalorder %s97, %s111
      %p113 = scmp.eq.s32.totalorder %s24, 0
      %p114 = por %p112, %p113
      %s116 = sadd.s32 %s115, 1
      %p119 = scmp.eq.s32.totalorder %s18, 1
      %p120 = scmp.ne.s32.totalorder %s115, %s117
      %p121 = scmp.eq.s32.totalorder %s18, 0
      %p122 = por %p120, %p121
      %p123 = scmp.ne.s32.totalorder %s115, %s117
      %p124 = scmp.eq.s32.totalorder %s23, 1
      %p125 = por %p123, %p124
      %p126 = scmp.ne.s32.totalorder %s117, %s118
      %p127 = scmp.eq.s32.totalorder %s23, 0
      %p128 = por %p126, %p127
      %p129 = scmp.ne.s32.totalorder %s117, %s118
      %p130 = scmp.eq.s32.totalorder %s24, 1
      %p131 = por %p129, %p130
      %p133 = scmp.ne.s32.totalorder %s118, %s132
      %p134 = scmp.eq.s32.totalorder %s24, 0
      %p135 = por %p133, %p134
      %s137 = sadd.s32 %s136, 1
      %p140 = scmp.eq.s32.totalorder %s18, 1
      %p141 = scmp.ne.s32.totalorder %s136, %s138
      %p142 = scmp.eq.s32.totalorder %s18, 0
      %p143 = por %p141, %p142
      %p144 = scmp.ne.s32.totalorder %s136, %s138
      %p145 = scmp.eq.s32.totalorder %s23, 1
      %p146 = por %p144, %p145
      %p147 = scmp.ne.s32.totalorder %s138, %s139
      %p148 = scmp.eq.s32.totalorder %s23, 0
      %p149 = por %p147, %p148
      %p150 = scmp.ne.s32.totalorder %s138, %s139
      %p151 = scmp.eq.s32.totalorder %s24, 1
      %p152 = por %p150, %p151
      %p154 = scmp.ne.s32.totalorder %s139, %s153
      %p155 = scmp.eq.s32.totalorder %s24, 0
      %p156 = por %p154, %p155
      %s158 = sadd.s32 %s157, 1
      %p161 = scmp.eq.s32.totalorder %s18, 1
      %p162 = scmp.ne.s32.totalorder %s157, %s159
      %p163 = scmp.eq.s32.totalorder %s18, 0
      %p164 = por %p162, %p163
      %p165 = scmp.ne.s32.totalorder %s157, %s159
      %p166 = scmp.eq.s32.totalorder %s23, 1
      %p167 = por %p165, %p166
      %p168 = scmp.ne.s32.totalorder %s159, %s160
      %p169 = scmp.eq.s32.totalorder %s23, 0
      %p170 = por %p168, %p169
      %p171 = scmp.ne.s32.totalorder %s159, %s160
      %p172 = scmp.eq.s32.totalorder %s24, 1
      %p173 = por %p171, %p172
      %p175 = scmp.ne.s32.totalorder %s160, %s174
      %p176 = scmp.eq.s32.totalorder %s24, 0
      %p177 = por %p175, %p176
      %s179 = sadd.s32 %s178, 1
      %p182 = scmp.eq.s32.totalorder %s18, 1
      %p183 = scmp.ne.s32.totalorder %s178, %s180
      %p184 = scmp.eq.s32.totalorder %s18, 0
      %p185 = por %p183, %p184
      %p186 = scmp.ne.s32.totalorder %s178, %s180
      %p187 = scmp.eq.s32.totalorder %s23, 1
      %p188 = por %p186, %p187
      %p189 = scmp.ne.s32.totalorder %s180, %s181
      %p190 = scmp.eq.s32.totalorder %s23, 0
      %p191 = por %p189, %p190
      %p192 = scmp.ne.s32.totalorder %s180, %s181
      %p193 = scmp.eq.s32.totalorder %s24, 1
      %p194 = por %p192, %p193
      %p196 = scmp.ne.s32.totalorder %s181, %s195
      %p197 = scmp.eq.s32.totalorder %s24, 0
      %p198 = por %p196, %p197
      %s200 = sadd.s32 %s199, 1
      %p203 = scmp.eq.s32.totalorder %s18, 1
      %p204 = scmp.ne.s32.totalorder %s199, %s201
      %p205 = scmp.eq.s32.totalorder %s18, 0
      %p206 = por %p204, %p205
      %p207 = scmp.ne.s32.totalorder %s199, %s201
      %p208 = scmp.eq.s32.totalorder %s23, 1
      %p209 = por %p207, %p208
      %p210 = scmp.ne.s32.totalorder %s201, %s202
      %p211 = scmp.eq.s32.totalorder %s23, 0
      %p212 = por %p210, %p211
      %p213 = scmp.ne.s32.totalorder %s201, %s202
      %p214 = scmp.eq.s32.totalorder %s24, 1
      %p215 = por %p213, %p214
      %p217 = scmp.ne.s32.totalorder %s202, %s216
      %p218 = scmp.eq.s32.totalorder %s24, 0
      %p219 = por %p217, %p218
      %s220 = ssub.s32 %s18, %s25
      %p221 = scmp.eq.s32.totalorder %s220, 0
      %s223 = sadd.s32 %s222, 1
      %s224 = scalar_select %p221, %s222, %s223
      %p227 = pneg %p221
      %p228 = scmp.eq.s32.totalorder %s18, 1
      %p229 = por %p227, %p228
      %p230 = scmp.ne.s32.totalorder %s222, %s225
      %p231 = scmp.eq.s32.totalorder %s18, 0
      %p232 = por %p230, %p231
      %p233 = scmp.ne.s32.totalorder %s222, %s225
      %p234 = scmp.eq.s32.totalorder %s23, 1
      %p235 = por %p233, %p234
      %p236 = scmp.ne.s32.totalorder %s225, %s226
      %p237 = scmp.eq.s32.totalorder %s23, 0
      %p238 = por %p236, %p237
      %p239 = scmp.ne.s32.totalorder %s225, %s226
      %p240 = scmp.eq.s32.totalorder %s24, 1
      %p241 = por %p239, %p240
      %p243 = scmp.ne.s32.totalorder %s226, %s242
      %p244 = scmp.eq.s32.totalorder %s24, 0
      %p245 = por %p243, %p244
      %p246 = scmp.le.s32.totalorder 1, %s18
      %p247 = scmp.lt.s32.totalorder %s18, 3
      %p248 = pnand %p246, %p247
      %p249 = pneg %p248
      // Predicated region
      $region9: #{tpu_custom_call.1} parent=5 // pred_check
        _
      $region10: #{tpu_custom_call.1} parent=5 // pred_check_branch
        %251 = sbr.rel (%p248) target = $region12
      $region11: #{tpu_custom_call.1} parent=5 // pred_region
        %s252 = ssub.s32 %s18, 1
        // Predicated region
        $region13: #{tpu_custom_call.1} parent=11 // pred_check
          %p253 = pneg %p65
        $region14: #{tpu_custom_call.1} parent=11 // pred_check_branch
          %255 = sbr.rel (%p253) target = $region16
        $region15: #{tpu_custom_call.1} parent=11 // pred_region
          _
        $region16: #{tpu_custom_call.1} parent=11 // pred_fallthru
          _
        // Predicated region
        $region17: #{tpu_custom_call.1} parent=11 // pred_check
          %p256 = pneg %p86
        $region18: #{tpu_custom_call.1} parent=11 // pred_check_branch
          %258 = sbr.rel (%p256) target = $region20
        $region19: #{tpu_custom_call.1} parent=11 // pred_region
          _
        $region20: #{tpu_custom_call.1} parent=11 // pred_fallthru
          _
        // Predicated region
        $region21: #{tpu_custom_call.1} parent=11 // pred_check
          %p259 = pneg %p107
        $region22: #{tpu_custom_call.1} parent=11 // pred_check_branch
          %261 = sbr.rel (%p259) target = $region24
        $region23: #{tpu_custom_call.1} parent=11 // pred_region
          _
        $region24: #{tpu_custom_call.1} parent=11 // pred_fallthru
          _
        // Predicated region
        $region25: #{tpu_custom_call.1} parent=11 // pred_check
          %p262 = pneg %p128
        $region26: #{tpu_custom_call.1} parent=11 // pred_check_branch
          %264 = sbr.rel (%p262) target = $region28
        $region27: #{tpu_custom_call.1} parent=11 // pred_region
          _
        $region28: #{tpu_custom_call.1} parent=11 // pred_fallthru
          _
        // Predicated region
        $region29: #{tpu_custom_call.1} parent=11 // pred_check
          %p265 = pneg %p149
        $region30: #{tpu_custom_call.1} parent=11 // pred_check_branch
          %267 = sbr.rel (%p265) target = $region32
        $region31: #{tpu_custom_call.1} parent=11 // pred_region
          _
        $region32: #{tpu_custom_call.1} parent=11 // pred_fallthru
          _
        // Predicated region
        $region33: #{tpu_custom_call.1} parent=11 // pred_check
          %p268 = pneg %p170
        $region34: #{tpu_custom_call.1} parent=11 // pred_check_branch
          %270 = sbr.rel (%p268) target = $region36
        $region35: #{tpu_custom_call.1} parent=11 // pred_region
          _
        $region36: #{tpu_custom_call.1} parent=11 // pred_fallthru
          _
        // Predicated region
        $region37: #{tpu_custom_call.1} parent=11 // pred_check
          %p271 = pneg %p191
        $region38: #{tpu_custom_call.1} parent=11 // pred_check_branch
          %273 = sbr.rel (%p271) target = $region40
        $region39: #{tpu_custom_call.1} parent=11 // pred_region
          _
        $region40: #{tpu_custom_call.1} parent=11 // pred_fallthru
          _
        // Predicated region
        $region41: #{tpu_custom_call.1} parent=11 // pred_check
          %p274 = pneg %p212
        $region42: #{tpu_custom_call.1} parent=11 // pred_check_branch
          %276 = sbr.rel (%p274) target = $region44
        $region43: #{tpu_custom_call.1} parent=11 // pred_region
          _
        $region44: #{tpu_custom_call.1} parent=11 // pred_fallthru
          _
      $region12: #{tpu_custom_call.1} parent=5 // pred_fallthru
        _
      %p277 = scmp.lt.s32.totalorder %s18, 2
      // Predicated region
      $region45: #{tpu_custom_call.1} parent=5 // pred_check
        %p278 = pneg %p277
      $region46: #{tpu_custom_call.1} parent=5 // pred_check_branch
        %280 = sbr.rel (%p278) target = $region48
      $region47: #{tpu_custom_call.1} parent=5 // pred_region
        // Predicated region
        $region49: #{tpu_custom_call.1} parent=47 // pred_check
          %p281 = pneg %p38
        $region50: #{tpu_custom_call.1} parent=47 // pred_check_branch
          %283 = sbr.rel (%p281) target = $region52
        $region51: #{tpu_custom_call.1} parent=47 // pred_region
          %p284 = scmp.lt.s32.totalorder %s18, 1
          %s285 = scalar_select %p284, %s18, 1
          %s286 = smul.addr %s285, 32
          %s287 = smul.addr %s286, 8
          %s288 = scalar_lea.vmem %s0, %s287
        $region52: #{tpu_custom_call.1} parent=47 // pred_fallthru
          _
      $region48: #{tpu_custom_call.1} parent=5 // pred_fallthru
        _
      %p289 = scmp.le.s32.totalorder 1, %s18
      %p290 = scmp.lt.s32.totalorder %s18, 3
      %p291 = pnand %p289, %p290
      %p292 = pneg %p291
      // Predicated region
      $region53: #{tpu_custom_call.1} parent=5 // pred_check
        _
      $region54: #{tpu_custom_call.1} parent=5 // pred_check_branch
        %294 = sbr.rel (%p291) target = $region56
      $region55: #{tpu_custom_call.1} parent=5 // pred_region
        %s295 = ssub.s32 %s18, 1
        %p296 = scmp.lt.s32.totalorder %s23, 1
        %s297 = scalar_select %p296, %s23, 1
        %s298 = smul.addr %s297, 32
        %s299 = smul.addr %s298, 8
        %s300 = scalar_lea.vmem %s0, %s299
        %p301 = pneg %p44
        %p302 = pneg %p41
        %p303 = pneg %p65
        %p304 = pneg %p62
        %p305 = pneg %p86
        %p306 = pneg %p83
        %p307 = pneg %p107
        %p308 = pneg %p104
        %p309 = pneg %p128
        %p310 = pneg %p125
        %p311 = pneg %p149
        %p312 = pneg %p146
        %p313 = pneg %p170
        %p314 = pneg %p167
        %p315 = pneg %p191
        %p316 = pneg %p188
        %p317 = pneg %p212
        %p318 = pneg %p209
        %p319 = pneg %p238
        %p320 = pneg %p235
        %s321 = sand.u32 %s225, 1
        %s322 = scalar_lea.sflag [#allocation3], %s321
        %s323 = sand.u32 %s225, 1
        %s324 = smul.addr %s323, 4
        %s325 = scalar_lea.vmem [#allocation2], %s324
        %p326 = scmp.lt.s32.totalorder %s23, 1
        %s327 = scalar_select %p326, %s23, 1
        %s328 = smul.addr %s327, 32
        %s329 = smul.addr %s328, 8
        %s330 = scalar_lea.vmem %s0, %s329
        %v331 = vld [vmem:[%s330] sm:$0xff]
        %v332 = vld [vmem:[%s330 + $0x8] sm:$0xff]
        %v333 = vld [vmem:[%s330 + $0x10] sm:$0xff]
        %v334 = vld [vmem:[%s330 + $0x18] sm:$0xff]
        %v335 = vld [vmem:[%s330 + $0x20] sm:$0xff]
        %v336 = vld [vmem:[%s330 + $0x28] sm:$0xff]
        %v337 = vld [vmem:[%s330 + $0x30] sm:$0xff]
        %v338 = vld [vmem:[%s330 + $0x38] sm:$0xff]
        %v339 = vld [vmem:[%s330 + $0x40] sm:$0xff]
        %v340 = vld [vmem:[%s330 + $0x48] sm:$0xff]
        %v341 = vld [vmem:[%s330 + $0x50] sm:$0xff]
        %v342 = vld [vmem:[%s330 + $0x58] sm:$0xff]
        %v343 = vld [vmem:[%s330 + $0x60] sm:$0xff]
        %v344 = vld [vmem:[%s330 + $0x68] sm:$0xff]
        %v345 = vld [vmem:[%s330 + $0x70] sm:$0xff]
        %v346 = vld [vmem:[%s330 + $0x78] sm:$0xff]
        %v347 = vld [vmem:[%s330 + $0x80] sm:$0xff]
        %v348 = vld [vmem:[%s330 + $0x88] sm:$0xff]
        %v349 = vld [vmem:[%s330 + $0x90] sm:$0xff]
        %v350 = vld [vmem:[%s330 + $0x98] sm:$0xff]
        %v351 = vld [vmem:[%s330 + $0xa0] sm:$0xff]
        %v352 = vld [vmem:[%s330 + $0xa8] sm:$0xff]
        %v353 = vld [vmem:[%s330 + $0xb0] sm:$0xff]
        %v354 = vld [vmem:[%s330 + $0xb8] sm:$0xff]
        %v355 = vld [vmem:[%s330 + $0xc0] sm:$0xff]
        %v356 = vld [vmem:[%s330 + $0xc8] sm:$0xff]
        %v357 = vld [vmem:[%s330 + $0xd0] sm:$0xff]
        %v358 = vld [vmem:[%s330 + $0xd8] sm:$0xff]
        %v359 = vld [vmem:[%s330 + $0xe0] sm:$0xff]
        %v360 = vld [vmem:[%s330 + $0xe8] sm:$0xff]
        %v361 = vld [vmem:[%s330 + $0xf0] sm:$0xff]
        %v362 = vld [vmem:[%s330 + $0xf8] sm:$0x3]
        %v363 = vld [vmem:[%s1] sm:$0xff]
        %v364 = vld [vmem:[%s1 + $0x8] sm:$0xff]
        %v365 = vld [vmem:[%s1 + $0x10] sm:$0x3]
        %vm366 = vcmask 146432
        %v368 = vsel %vm366, %v331, 0
        %v371 = vsel %vm366, %v332, 0
        %v374 = vsel %vm366, %v333, 0
        %v377 = vsel %vm366, %v334, 0
        %v380 = vsel %vm366, %v335, 0
        %v383 = vsel %vm366, %v336, 0
        %v386 = vsel %vm366, %v337, 0
        %v389 = vsel %vm366, %v338, 0
        %v392 = vsel %vm366, %v339, 0
        %v395 = vsel %vm366, %v340, 0
        %v398 = vsel %vm366, %v341, 0
        %v401 = vsel %vm366, %v342, 0
        %v404 = vsel %vm366, %v343, 0
        %v407 = vsel %vm366, %v344, 0
        %v410 = vsel %vm366, %v345, 0
        %v413 = vsel %vm366, %v346, 0
        %v416 = vsel %vm366, %v347, 0
        %v419 = vsel %vm366, %v348, 0
        %v422 = vsel %vm366, %v349, 0
        %v425 = vsel %vm366, %v350, 0
        %v428 = vsel %vm366, %v351, 0
        %v431 = vsel %vm366, %v352, 0
        %v434 = vsel %vm366, %v353, 0
        %v437 = vsel %vm366, %v354, 0
        %v440 = vsel %vm366, %v355, 0
        %v443 = vsel %vm366, %v356, 0
        %v446 = vsel %vm366, %v357, 0
        %v449 = vsel %vm366, %v358, 0
        %v452 = vsel %vm366, %v359, 0
        %v455 = vsel %vm366, %v360, 0
        %v458 = vsel %vm366, %v361, 0
        %v461 = vsel %vm366, %v362, 0
        %vm463 = vcmask 1041408
        %v465 = vsel %vm463, %v365, 0
        %467 = vmatprep.subr.mxu0 0.0
        %468 = vmatpush1.msra.mxu0 %v363
        %469 = vmatprep.subr.mxu0 0.0
        %470 = vmatpush1.msra.mxu0 %v364
        %471 = vmatprep.subr.mxu0 0.0
        %472 = vmatpush1.msra.mxu0 %v465
        %473 = vmatprep.subr.mxu0 0.0
        %474 = vmatpush1.msra.mxu0 0.0
        %475 = vmatprep.subr.mxu0 0.0
        %476 = vmatpush1.msra.mxu0 0.0
        %477 = vmatprep.subr.mxu0 0.0
        %478 = vmatpush1.msra.mxu0 0.0
        %479 = vmatprep.subr.mxu0 0.0
        %480 = vmatpush1.msra.mxu0 0.0
        %481 = vmatprep.subr.mxu0 0.0
        %482 = vmatpush1.msra.mxu0 0.0
        %483 = vmatprep.subr.mxu0 0.0
        %484 = vmatpush1.msra.mxu0 0.0
        %485 = vmatprep.subr.mxu0 0.0
        %486 = vmatpush1.msra.mxu0 0.0
        %487 = vmatprep.subr.mxu0 0.0
        %488 = vmatpush1.msra.mxu0 0.0
        %489 = vmatprep.subr.mxu0 0.0
        %490 = vmatpush1.msra.mxu0 0.0
        %491 = vmatprep.subr.mxu0 0.0
        %492 = vmatpush1.msra.mxu0 0.0
        %493 = vmatprep.subr.mxu0 0.0
        %494 = vmatpush1.msra.mxu0 0.0
        %495 = vmatprep.subr.mxu0 0.0
        %496 = vmatpush1.msra.mxu0 0.0
        %497 = vmatprep.subr.mxu0 0.0
        %498 = vmatpush1.msra.mxu0 0.0
        %499 = vmatprep.subr.mxu0 0.0
        %500 = vmatpush1.msra.mxu0 0.0
        %501 = vmatprep.subr.mxu0 0.0
        %502 = vmatpush1.msra.mxu0 0.0
        %503 = vmatprep.subr.mxu0 0.0
        %504 = vmatpush1.msra.mxu0 0.0
        %505 = vmatprep.subr.mxu0 0.0
        %506 = vmatpush1.msra.mxu0 0.0
        %507 = vmatprep.subr.mxu0 0.0
        %508 = vmatpush1.msra.mxu0 0.0
        %509 = vmatprep.subr.mxu0 0.0
        %510 = vmatpush1.msra.mxu0 0.0
        %511 = vmatprep.subr.mxu0 0.0
        %512 = vmatpush1.msra.mxu0 0.0
        %513 = vmatprep.subr.mxu0 0.0
        %514 = vmatpush1.msra.mxu0 0.0
        %515 = vmatprep.subr.mxu0 0.0
        %516 = vmatpush1.msra.mxu0 0.0
        %517 = vmatprep.subr.mxu0 0.0
        %518 = vmatpush1.msra.mxu0 0.0
        %519 = vmatprep.subr.mxu0 0.0
        %520 = vmatpush1.msra.mxu0 0.0
        %521 = vmatprep.subr.mxu0 0.0
        %522 = vmatpush1.msra.mxu0 0.0
        %523 = vmatprep.subr.mxu0 0.0
        %524 = vmatpush1.msra.mxu0 0.0
        %525 = vmatprep.subr.mxu0 0.0
        %526 = vmatpush1.msra.mxu0 0.0
        %527 = vmatprep.subr.mxu0 0.0
        %528 = vmatpush1.msra.mxu0 0.0
        %529 = vmatprep.subr.mxu0 0.0
        %530 = vmatpush1.msra.mxu0 0.0
        %531 = vmatprep.mubr.f32.mxu0 0.0
        %532 = vmatmul.mubr.f32.gmra.mrb[0].mxu0 %v368
        %v533 = vpop.f32.mrb[0].mxu0
        %v534 = vadd.f32 0.0, %v533
        %v535 = vpop.f32.mrb[0].mxu0
        %536 = vmatprep.mubr.f32.mxu0 0.0
        %537 = vmatmul.mubr.f32.gmra.mrb[0].mxu0 %v371
        %v538 = vpop.f32.mrb[0].mxu0
        %v539 = vadd.f32 0.0, %v538
        %v540 = vpop.f32.mrb[0].mxu0
        %541 = vmatprep.mubr.f32.mxu0 0.0
        %542 = vmatmul.mubr.f32.gmra.mrb[0].mxu0 %v374
        %v543 = vpop.f32.mrb[0].mxu0
        %v544 = vadd.f32 0.0, %v543
        %v545 = vpop.f32.mrb[0].mxu0
        %546 = vmatprep.mubr.f32.mxu0 0.0
        %547 = vmatmul.mubr.f32.gmra.mrb[0].mxu0 %v377
        %v548 = vpop.f32.mrb[0].mxu0
        %v549 = vadd.f32 0.0, %v548
        %v550 = vpop.f32.mrb[0].mxu0
        %551 = vmatprep.mubr.f32.mxu0 0.0
        %552 = vmatmul.mubr.f32.gmra.mrb[0].mxu0 %v380
        %v553 = vpop.f32.mrb[0].mxu0
        %v554 = vadd.f32 0.0, %v553
        %v555 = vpop.f32.mrb[0].mxu0
        %556 = vmatprep.mubr.f32.mxu0 0.0
        %557 = vmatmul.mubr.f32.gmra.mrb[0].mxu0 %v383
        %v558 = vpop.f32.mrb[0].mxu0
        %v559 = vadd.f32 0.0, %v558
        %v560 = vpop.f32.mrb[0].mxu0
        %561 = vmatprep.mubr.f32.mxu0 0.0
        %562 = vmatmul.mubr.f32.gmra.mrb[0].mxu0 %v386
        %v563 = vpop.f32.mrb[0].mxu0
        %v564 = vadd.f32 0.0, %v563
        %v565 = vpop.f32.mrb[0].mxu0
        %566 = vmatprep.mubr.f32.mxu0 0.0
        %567 = vmatmul.mubr.f32.gmra.mrb[0].mxu0 %v389
        %v568 = vpop.f32.mrb[0].mxu0
        %v569 = vadd.f32 0.0, %v568
        %v570 = vpop.f32.mrb[0].mxu0
        %571 = vmatprep.mubr.f32.mxu0 0.0
        %572 = vmatmul.mubr.f32.gmra.mrb[0].mxu0 %v392
        %v573 = vpop.f32.mrb[0].mxu0
        %v574 = vadd.f32 0.0, %v573
        %v575 = vpop.f32.mrb[0].mxu0
        %576 = vmatprep.mubr.f32.mxu0 0.0
        %577 = vmatmul.mubr.f32.gmra.mrb[0].mxu0 %v395
        %v578 = vpop.f32.mrb[0].mxu0
        %v579 = vadd.f32 0.0, %v578
        %v580 = vpop.f32.mrb[0].mxu0
        %581 = vmatprep.mubr.f32.mxu0 0.0
        %582 = vmatmul.mubr.f32.gmra.mrb[0].mxu0 %v398
        %v583 = vpop.f32.mrb[0].mxu0
        %v584 = vadd.f32 0.0, %v583
        %v585 = vpop.f32.mrb[0].mxu0
        %586 = vmatprep.mubr.f32.mxu0 0.0
        %587 = vmatmul.mubr.f32.gmra.mrb[0].mxu0 %v401
        %v588 = vpop.f32.mrb[0].mxu0
        %v589 = vadd.f32 0.0, %v588
        %v590 = vpop.f32.mrb[0].mxu0
        %591 = vmatprep.mubr.f32.mxu0 0.0
        %592 = vmatmul.mubr.f32.gmra.mrb[0].mxu0 %v404
        %v593 = vpop.f32.mrb[0].mxu0
        %v594 = vadd.f32 0.0, %v593
        %v595 = vpop.f32.mrb[0].mxu0
        %596 = vmatprep.mubr.f32.mxu0 0.0
        %597 = vmatmul.mubr.f32.gmra.mrb[0].mxu0 %v407
        %v598 = vpop.f32.mrb[0].mxu0
        %v599 = vadd.f32 0.0, %v598
        %v600 = vpop.f32.mrb[0].mxu0
        %601 = vmatprep.mubr.f32.mxu0 0.0
        %602 = vmatmul.mubr.f32.gmra.mrb[0].mxu0 %v410
        %v603 = vpop.f32.mrb[0].mxu0
        %v604 = vadd.f32 0.0, %v603
        %v605 = vpop.f32.mrb[0].mxu0
        %606 = vmatprep.mubr.f32.mxu0 0.0
        %607 = vmatmul.mubr.f32.gmra.mrb[0].mxu0 %v413
        %v608 = vpop.f32.mrb[0].mxu0
        %v609 = vadd.f32 0.0, %v608
        %v610 = vpop.f32.mrb[0].mxu0
        %611 = vmatprep.mubr.f32.mxu0 0.0
        %612 = vmatmul.mubr.f32.gmra.mrb[0].mxu0 %v416
        %v613 = vpop.f32.mrb[0].mxu0
        %v614 = vadd.f32 0.0, %v613
        %v615 = vpop.f32.mrb[0].mxu0
        %616 = vmatprep.mubr.f32.mxu0 0.0
        %617 = vmatmul.mubr.f32.gmra.mrb[0].mxu0 %v419
        %v618 = vpop.f32.mrb[0].mxu0
        %v619 = vadd.f32 0.0, %v618
        %v620 = vpop.f32.mrb[0].mxu0
        %621 = vmatprep.mubr.f32.mxu0 0.0
        %622 = vmatmul.mubr.f32.gmra.mrb[0].mxu0 %v422
        %v623 = vpop.f32.mrb[0].mxu0
        %v624 = vadd.f32 0.0, %v623
        %v625 = vpop.f32.mrb[0].mxu0
        %626 = vmatprep.mubr.f32.mxu0 0.0
        %627 = vmatmul.mubr.f32.gmra.mrb[0].mxu0 %v425
        %v628 = vpop.f32.mrb[0].mxu0
        %v629 = vadd.f32 0.0, %v628
        %v630 = vpop.f32.mrb[0].mxu0
        %631 = vmatprep.mubr.f32.mxu0 0.0
        %632 = vmatmul.mubr.f32.gmra.mrb[0].mxu0 %v428
        %v633 = vpop.f32.mrb[0].mxu0
        %v634 = vadd.f32 0.0, %v633
        %v635 = vpop.f32.mrb[0].mxu0
        %636 = vmatprep.mubr.f32.mxu0 0.0
        %637 = vmatmul.mubr.f32.gmra.mrb[0].mxu0 %v431
        %v638 = vpop.f32.mrb[0].mxu0
        %v639 = vadd.f32 0.0, %v638
        %v640 = vpop.f32.mrb[0].mxu0
        %641 = vmatprep.mubr.f32.mxu0 0.0
        %642 = vmatmul.mubr.f32.gmra.mrb[0].mxu0 %v434
        %v643 = vpop.f32.mrb[0].mxu0
        %v644 = vadd.f32 0.0, %v643
        %v645 = vpop.f32.mrb[0].mxu0
        %646 = vmatprep.mubr.f32.mxu0 0.0
        %647 = vmatmul.mubr.f32.gmra.mrb[0].mxu0 %v437
        %v648 = vpop.f32.mrb[0].mxu0
        %v649 = vadd.f32 0.0, %v648
        %v650 = vpop.f32.mrb[0].mxu0
        %651 = vmatprep.mubr.f32.mxu0 0.0
        %652 = vmatmul.mubr.f32.gmra.mrb[0].mxu0 %v440
        %v653 = vpop.f32.mrb[0].mxu0
        %v654 = vadd.f32 0.0, %v653
        %v655 = vpop.f32.mrb[0].mxu0
        %656 = vmatprep.mubr.f32.mxu0 0.0
        %657 = vmatmul.mubr.f32.gmra.mrb[0].mxu0 %v443
        %v658 = vpop.f32.mrb[0].mxu0
        %v659 = vadd.f32 0.0, %v658
        %v660 = vpop.f32.mrb[0].mxu0
        %661 = vmatprep.mubr.f32.mxu0 0.0
        %662 = vmatmul.mubr.f32.gmra.mrb[0].mxu0 %v446
        %v663 = vpop.f32.mrb[0].mxu0
        %v664 = vadd.f32 0.0, %v663
        %v665 = vpop.f32.mrb[0].mxu0
        %666 = vmatprep.mubr.f32.mxu0 0.0
        %667 = vmatmul.mubr.f32.gmra.mrb[0].mxu0 %v449
        %v668 = vpop.f32.mrb[0].mxu0
        %v669 = vadd.f32 0.0, %v668
        %v670 = vpop.f32.mrb[0].mxu0
        %671 = vmatprep.mubr.f32.mxu0 0.0
        %672 = vmatmul.mubr.f32.gmra.mrb[0].mxu0 %v452
        %v673 = vpop.f32.mrb[0].mxu0
        %v674 = vadd.f32 0.0, %v673
        %v675 = vpop.f32.mrb[0].mxu0
        %676 = vmatprep.mubr.f32.mxu0 0.0
        %677 = vmatmul.mubr.f32.gmra.mrb[0].mxu0 %v455
        %v678 = vpop.f32.mrb[0].mxu0
        %v679 = vadd.f32 0.0, %v678
        %v680 = vpop.f32.mrb[0].mxu0
        %681 = vmatprep.mubr.f32.mxu0 0.0
        %682 = vmatmul.mubr.f32.gmra.mrb[0].mxu0 %v458
        %v683 = vpop.f32.mrb[0].mxu0
        %v684 = vadd.f32 0.0, %v683
        %v685 = vpop.f32.mrb[0].mxu0
        %686 = vmatprep.mubr.f32.mxu0 0.0
        %687 = vmatmul.mubr.f32.gmra.mrb[0].mxu0 %v461
        %v688 = vpop.f32.mrb[0].mxu0
        %v689 = vadd.f32 0.0, %v688
        %v690 = vpop.f32.mrb[0].mxu0
        %691 = vdwg.mxu0
        %v692 = vld [vmem:[%s2] sm:$0x1]
        %v693 = vld [vmem:[%s2 + $0x1] sm:$0x1]
        %v694 = vld [vmem:[%s2 + $0x2] sm:$0x1]
        %vm695 = vcmask 261120
        %v696 = vsel %vm695, %v534, 0.0
        %v697 = vsel %vm695, %v539, 0.0
        %v698 = vadd.f32 %v696, %v697
        %v699 = vsel %vm695, %v544, 0.0
        %v700 = vadd.f32 %v698, %v699
        %v701 = vsel %vm695, %v549, 0.0
        %v702 = vadd.f32 %v700, %v701
        %v703 = vsel %vm695, %v554, 0.0
        %v704 = vadd.f32 %v702, %v703
        %v705 = vsel %vm695, %v559, 0.0
        %v706 = vadd.f32 %v704, %v705
        %v707 = vsel %vm695, %v564, 0.0
        %v708 = vadd.f32 %v706, %v707
        %v709 = vsel %vm695, %v569, 0.0
        %v710 = vadd.f32 %v708, %v709
        %v711 = vsel %vm695, %v574, 0.0
        %v712 = vadd.f32 %v710, %v711
        %v713 = vsel %vm695, %v579, 0.0
        %v714 = vadd.f32 %v712, %v713
        %v715 = vsel %vm695, %v584, 0.0
        %v716 = vadd.f32 %v714, %v715
        %v717 = vsel %vm695, %v589, 0.0
        %v718 = vadd.f32 %v716, %v717
        %v719 = vsel %vm695, %v594, 0.0
        %v720 = vadd.f32 %v718, %v719
        %v721 = vsel %vm695, %v599, 0.0
        %v722 = vadd.f32 %v720, %v721
        %v723 = vsel %vm695, %v604, 0.0
        %v724 = vadd.f32 %v722, %v723
        %v725 = vsel %vm695, %v609, 0.0
        %v726 = vadd.f32 %v724, %v725
        %v727 = vsel %vm695, %v614, 0.0
        %v728 = vadd.f32 %v726, %v727
        %v729 = vsel %vm695, %v619, 0.0
        %v730 = vadd.f32 %v728, %v729
        %v731 = vsel %vm695, %v624, 0.0
        %v732 = vadd.f32 %v730, %v731
        %v733 = vsel %vm695, %v629, 0.0
        %v734 = vadd.f32 %v732, %v733
        %v735 = vsel %vm695, %v634, 0.0
        %v736 = vadd.f32 %v734, %v735
        %v737 = vsel %vm695, %v639, 0.0
        %v738 = vadd.f32 %v736, %v737
        %v739 = vsel %vm695, %v644, 0.0
        %v740 = vadd.f32 %v738, %v739
        %v741 = vsel %vm695, %v649, 0.0
        %v742 = vadd.f32 %v740, %v741
        %v743 = vsel %vm695, %v654, 0.0
        %v744 = vadd.f32 %v742, %v743
        %v745 = vsel %vm695, %v659, 0.0
        %v746 = vadd.f32 %v744, %v745
        %v747 = vsel %vm695, %v664, 0.0
        %v748 = vadd.f32 %v746, %v747
        %v749 = vsel %vm695, %v669, 0.0
        %v750 = vadd.f32 %v748, %v749
        %v751 = vsel %vm695, %v674, 0.0
        %v752 = vadd.f32 %v750, %v751
        %v753 = vsel %vm695, %v679, 0.0
        %v754 = vadd.f32 %v752, %v753
        %v755 = vsel %vm695, %v684, 0.0
        %v756 = vadd.f32 %v754, %v755
        %vm757 = vcmask 254976
        %v758 = vsel %vm757, %v689, 0.0
        %v759 = vadd.f32 %v756, %v758
        %v760 = vrot.slane %v759, 4
        %v761 = vadd.f32 %v759, %v760
        %v762 = vrot.slane %v761, 2
        %v763 = vadd.f32 %v761, %v762
        %v764 = vrot.slane %v763, 1
        %v765 = vadd.f32 %v763, %v764
        %v766 = vrcp.pop 250.0
        %v767 = vmul.f32 %v765, %v766
        %v768 = vsub.f32 %v534, %v767
        %v769 = vsub.f32 %v539, %v767
        %v770 = vsub.f32 %v544, %v767
        %v771 = vsub.f32 %v549, %v767
        %v772 = vsub.f32 %v554, %v767
        %v773 = vsub.f32 %v559, %v767
        %v774 = vsub.f32 %v564, %v767
        %v775 = vsub.f32 %v569, %v767
        %v776 = vsub.f32 %v574, %v767
        %v777 = vsub.f32 %v579, %v767
        %v778 = vsub.f32 %v584, %v767
        %v779 = vsub.f32 %v589, %v767
        %v780 = vsub.f32 %v594, %v767
        %v781 = vsub.f32 %v599, %v767
        %v782 = vsub.f32 %v604, %v767
        %v783 = vsub.f32 %v609, %v767
        %v784 = vsub.f32 %v614, %v767
        %v785 = vsub.f32 %v619, %v767
        %v786 = vsub.f32 %v624, %v767
        %v787 = vsub.f32 %v629, %v767
        %v788 = vsub.f32 %v634, %v767
        %v789 = vsub.f32 %v639, %v767
        %v790 = vsub.f32 %v644, %v767
        %v791 = vsub.f32 %v649, %v767
        %v792 = vsub.f32 %v654, %v767
        %v793 = vsub.f32 %v659, %v767
        %v794 = vsub.f32 %v664, %v767
        %v795 = vsub.f32 %v669, %v767
        %v796 = vsub.f32 %v674, %v767
        %v797 = vsub.f32 %v679, %v767
        %v798 = vsub.f32 %v684, %v767
        %v799 = vsub.f32 %v689, %v767
        %v800 = vmul.f32 %v768, %v768
        %v801 = vmul.f32 %v769, %v769
        %v802 = vmul.f32 %v770, %v770
        %v803 = vmul.f32 %v771, %v771
        %v804 = vmul.f32 %v772, %v772
        %v805 = vmul.f32 %v773, %v773
        %v806 = vmul.f32 %v774, %v774
        %v807 = vmul.f32 %v775, %v775
        %v808 = vmul.f32 %v776, %v776
        %v809 = vmul.f32 %v777, %v777
        %v810 = vmul.f32 %v778, %v778
        %v811 = vmul.f32 %v779, %v779
        %v812 = vmul.f32 %v780, %v780
        %v813 = vmul.f32 %v781, %v781
        %v814 = vmul.f32 %v782, %v782
        %v815 = vmul.f32 %v783, %v783
        %v816 = vmul.f32 %v784, %v784
        %v817 = vmul.f32 %v785, %v785
        %v818 = vmul.f32 %v786, %v786
        %v819 = vmul.f32 %v787, %v787
        %v820 = vmul.f32 %v788, %v788
        %v821 = vmul.f32 %v789, %v789
        %v822 = vmul.f32 %v790, %v790
        %v823 = vmul.f32 %v791, %v791
        %v824 = vmul.f32 %v792, %v792
        %v825 = vmul.f32 %v793, %v793
        %v826 = vmul.f32 %v794, %v794
        %v827 = vmul.f32 %v795, %v795
        %v828 = vmul.f32 %v796, %v796
        %v829 = vmul.f32 %v797, %v797
        %v830 = vmul.f32 %v798, %v798
        %v831 = vmul.f32 %v799, %v799
        %v832 = vsel %vm695, %v800, 0.0
        %v833 = vsel %vm695, %v801, 0.0
        %v834 = vadd.f32 %v832, %v833
        %v835 = vsel %vm695, %v802, 0.0
        %v836 = vadd.f32 %v834, %v835
        %v837 = vsel %vm695, %v803, 0.0
        %v838 = vadd.f32 %v836, %v837
        %v839 = vsel %vm695, %v804, 0.0
        %v840 = vadd.f32 %v838, %v839
        %v841 = vsel %vm695, %v805, 0.0
        %v842 = vadd.f32 %v840, %v841
        %v843 = vsel %vm695, %v806, 0.0
        %v844 = vadd.f32 %v842, %v843
        %v845 = vsel %vm695, %v807, 0.0
        %v846 = vadd.f32 %v844, %v845
        %v847 = vsel %vm695, %v808, 0.0
        %v848 = vadd.f32 %v846, %v847
        %v849 = vsel %vm695, %v809, 0.0
        %v850 = vadd.f32 %v848, %v849
        %v851 = vsel %vm695, %v810, 0.0
        %v852 = vadd.f32 %v850, %v851
        %v853 = vsel %vm695, %v811, 0.0
        %v854 = vadd.f32 %v852, %v853
        %v855 = vsel %vm695, %v812, 0.0
        %v856 = vadd.f32 %v854, %v855
        %v857 = vsel %vm695, %v813, 0.0
        %v858 = vadd.f32 %v856, %v857
        %v859 = vsel %vm695, %v814, 0.0
        %v860 = vadd.f32 %v858, %v859
        %v861 = vsel %vm695, %v815, 0.0
        %v862 = vadd.f32 %v860, %v861
        %v863 = vsel %vm695, %v816, 0.0
        %v864 = vadd.f32 %v862, %v863
        %v865 = vsel %vm695, %v817, 0.0
        %v866 = vadd.f32 %v864, %v865
        %v867 = vsel %vm695, %v818, 0.0
        %v868 = vadd.f32 %v866, %v867
        %v869 = vsel %vm695, %v819, 0.0
        %v870 = vadd.f32 %v868, %v869
        %v871 = vsel %vm695, %v820, 0.0
        %v872 = vadd.f32 %v870, %v871
        %v873 = vsel %vm695, %v821, 0.0
        %v874 = vadd.f32 %v872, %v873
        %v875 = vsel %vm695, %v822, 0.0
        %v876 = vadd.f32 %v874, %v875
        %v877 = vsel %vm695, %v823, 0.0
        %v878 = vadd.f32 %v876, %v877
        %v879 = vsel %vm695, %v824, 0.0
        %v880 = vadd.f32 %v878, %v879
        %v881 = vsel %vm695, %v825, 0.0
        %v882 = vadd.f32 %v880, %v881
        %v883 = vsel %vm695, %v826, 0.0
        %v884 = vadd.f32 %v882, %v883
        %v885 = vsel %vm695, %v827, 0.0
        %v886 = vadd.f32 %v884, %v885
        %v887 = vsel %vm695, %v828, 0.0
        %v888 = vadd.f32 %v886, %v887
        %v889 = vsel %vm695, %v829, 0.0
        %v890 = vadd.f32 %v888, %v889
        %v891 = vsel %vm695, %v830, 0.0
        %v892 = vadd.f32 %v890, %v891
        %v893 = vsel %vm757, %v831, 0.0
        %v894 = vadd.f32 %v892, %v893
        %v895 = vrot.slane %v894, 4
        %v896 = vadd.f32 %v894, %v895
        %v897 = vrot.slane %v896, 2
        %v898 = vadd.f32 %v896, %v897
        %v899 = vrot.slane %v898, 1
        %v900 = vadd.f32 %v898, %v899
        %v901 = vmul.f32 %v900, %v766
        %v902 = vadd.f32 %v901, 1e-05
        %v903 = vrsqrt.pop %v902
        %v904 = vmul.f32 %v692, %v903
        %v905 = vmul.f32 %v767, %v904
        %v906 = vsub.f32 %v693, %v905
        %v907 = vlaneseq
        %v908 = vshrl.u32 %v907, 7
        %v909 = vsub.s32 0, %v908
        %v910 = vrot.slane %v904, %v909
        %v911 = vmul.f32 %v534, %v910
        %v912 = vmul.f32 %v539, %v910
        %v913 = vmul.f32 %v544, %v910
        %v914 = vmul.f32 %v549, %v910
        %v915 = vmul.f32 %v554, %v910
        %v916 = vmul.f32 %v559, %v910
        %v917 = vmul.f32 %v564, %v910
        %v918 = vmul.f32 %v569, %v910
        %v919 = vmul.f32 %v574, %v910
        %v920 = vmul.f32 %v579, %v910
        %v921 = vmul.f32 %v584, %v910
        %v922 = vmul.f32 %v589, %v910
        %v923 = vmul.f32 %v594, %v910
        %v924 = vmul.f32 %v599, %v910
        %v925 = vmul.f32 %v604, %v910
        %v926 = vmul.f32 %v609, %v910
        %v927 = vmul.f32 %v614, %v910
        %v928 = vmul.f32 %v619, %v910
        %v929 = vmul.f32 %v624, %v910
        %v930 = vmul.f32 %v629, %v910
        %v931 = vmul.f32 %v634, %v910
        %v932 = vmul.f32 %v639, %v910
        %v933 = vmul.f32 %v644, %v910
        %v934 = vmul.f32 %v649, %v910
        %v935 = vmul.f32 %v654, %v910
        %v936 = vmul.f32 %v659, %v910
        %v937 = vmul.f32 %v664, %v910
        %v938 = vmul.f32 %v669, %v910
        %v939 = vmul.f32 %v674, %v910
        %v940 = vmul.f32 %v679, %v910
        %v941 = vmul.f32 %v684, %v910
        %v942 = vmul.f32 %v689, %v910
        %v943 = vlaneseq
        %v944 = vshrl.u32 %v943, 7
        %v945 = vsub.s32 0, %v944
        %v946 = vrot.slane %v906, %v945
        %v947 = vadd.f32 %v911, %v946
        %v948 = vadd.f32 %v912, %v946
        %v949 = vadd.f32 %v913, %v946
        %v950 = vadd.f32 %v914, %v946
        %v951 = vadd.f32 %v915, %v946
        %v952 = vadd.f32 %v916, %v946
        %v953 = vadd.f32 %v917, %v946
        %v954 = vadd.f32 %v918, %v946
        %v955 = vadd.f32 %v919, %v946
        %v956 = vadd.f32 %v920, %v946
        %v957 = vadd.f32 %v921, %v946
        %v958 = vadd.f32 %v922, %v946
        %v959 = vadd.f32 %v923, %v946
        %v960 = vadd.f32 %v924, %v946
        %v961 = vadd.f32 %v925, %v946
        %v962 = vadd.f32 %v926, %v946
        %v963 = vadd.f32 %v927, %v946
        %v964 = vadd.f32 %v928, %v946
        %v965 = vadd.f32 %v929, %v946
        %v966 = vadd.f32 %v930, %v946
        %v967 = vadd.f32 %v931, %v946
        %v968 = vadd.f32 %v932, %v946
        %v969 = vadd.f32 %v933, %v946
        %v970 = vadd.f32 %v934, %v946
        %v971 = vadd.f32 %v935, %v946
        %v972 = vadd.f32 %v936, %v946
        %v973 = vadd.f32 %v937, %v946
        %v974 = vadd.f32 %v938, %v946
        %v975 = vadd.f32 %v939, %v946
        %v976 = vadd.f32 %v940, %v946
        %v977 = vadd.f32 %v941, %v946
        %v978 = vadd.f32 %v942, %v946
        %vm979 = vcmp.ge.f32.partialorder %v947, 0.0
        %vm980 = vcmp.ge.f32.partialorder %v948, 0.0
        %vm981 = vcmp.ge.f32.partialorder %v949, 0.0
        %vm982 = vcmp.ge.f32.partialorder %v950, 0.0
        %vm983 = vcmp.ge.f32.partialorder %v951, 0.0
        %vm984 = vcmp.ge.f32.partialorder %v952, 0.0
        %vm985 = vcmp.ge.f32.partialorder %v953, 0.0
        %vm986 = vcmp.ge.f32.partialorder %v954, 0.0
        %vm987 = vcmp.ge.f32.partialorder %v955, 0.0
        %vm988 = vcmp.ge.f32.partialorder %v956, 0.0
        %vm989 = vcmp.ge.f32.partialorder %v957, 0.0
        %vm990 = vcmp.ge.f32.partialorder %v958, 0.0
        %vm991 = vcmp.ge.f32.partialorder %v959, 0.0
        %vm992 = vcmp.ge.f32.partialorder %v960, 0.0
        %vm993 = vcmp.ge.f32.partialorder %v961, 0.0
        %vm994 = vcmp.ge.f32.partialorder %v962, 0.0
        %vm995 = vcmp.ge.f32.partialorder %v963, 0.0
        %vm996 = vcmp.ge.f32.partialorder %v964, 0.0
        %vm997 = vcmp.ge.f32.partialorder %v965, 0.0
        %vm998 = vcmp.ge.f32.partialorder %v966, 0.0
        %vm999 = vcmp.ge.f32.partialorder %v967, 0.0
        %vm1000 = vcmp.ge.f32.partialorder %v968, 0.0
        %vm1001 = vcmp.ge.f32.partialorder %v969, 0.0
        %vm1002 = vcmp.ge.f32.partialorder %v970, 0.0
        %vm1003 = vcmp.ge.f32.partialorder %v971, 0.0
        %vm1004 = vcmp.ge.f32.partialorder %v972, 0.0
        %vm1005 = vcmp.ge.f32.partialorder %v973, 0.0
        %vm1006 = vcmp.ge.f32.partialorder %v974, 0.0
        %vm1007 = vcmp.ge.f32.partialorder %v975, 0.0
        %vm1008 = vcmp.ge.f32.partialorder %v976, 0.0
        %vm1009 = vcmp.ge.f32.partialorder %v977, 0.0
        %vm1010 = vcmp.ge.f32.partialorder %v978, 0.0
        %v1011 = vlaneseq
        %v1012 = vshrl.u32 %v1011, 7
        %v1013 = vsub.s32 0, %v1012
        %v1014 = vrot.slane %v694, %v1013
        %v1015 = vmul.f32 %v1014, %v947
        %v1016 = vmul.f32 %v1014, %v948
        %v1017 = vmul.f32 %v1014, %v949
        %v1018 = vmul.f32 %v1014, %v950
        %v1019 = vmul.f32 %v1014, %v951
        %v1020 = vmul.f32 %v1014, %v952
        %v1021 = vmul.f32 %v1014, %v953
        %v1022 = vmul.f32 %v1014, %v954
        %v1023 = vmul.f32 %v1014, %v955
        %v1024 = vmul.f32 %v1014, %v956
        %v1025 = vmul.f32 %v1014, %v957
        %v1026 = vmul.f32 %v1014, %v958
        %v1027 = vmul.f32 %v1014, %v959
        %v1028 = vmul.f32 %v1014, %v960
        %v1029 = vmul.f32 %v1014, %v961
        %v1030 = vmul.f32 %v1014, %v962
        %v1031 = vmul.f32 %v1014, %v963
        %v1032 = vmul.f32 %v1014, %v964
        %v1033 = vmul.f32 %v1014, %v965
        %v1034 = vmul.f32 %v1014, %v966
        %v1035 = vmul.f32 %v1014, %v967
        %v1036 = vmul.f32 %v1014, %v968
        %v1037 = vmul.f32 %v1014, %v969
        %v1038 = vmul.f32 %v1014, %v970
        %v1039 = vmul.f32 %v1014, %v971
        %v1040 = vmul.f32 %v1014, %v972
        %v1041 = vmul.f32 %v1014, %v973
        %v1042 = vmul.f32 %v1014, %v974
        %v1043 = vmul.f32 %v1014, %v975
        %v1044 = vmul.f32 %v1014, %v976
        %v1045 = vmul.f32 %v1014, %v977
        %v1046 = vmul.f32 %v1014, %v978
        %v1047 = vsel %vm979, %v947, %v1015
        %v1048 = vsel %vm980, %v948, %v1016
        %v1049 = vsel %vm981, %v949, %v1017
        %v1050 = vsel %vm982, %v950, %v1018
        %v1051 = vsel %vm983, %v951, %v1019
        %v1052 = vsel %vm984, %v952, %v1020
        %v1053 = vsel %vm985, %v953, %v1021
        %v1054 = vsel %vm986, %v954, %v1022
        %v1055 = vsel %vm987, %v955, %v1023
        %v1056 = vsel %vm988, %v956, %v1024
        %v1057 = vsel %vm989, %v957, %v1025
        %v1058 = vsel %vm990, %v958, %v1026
        %v1059 = vsel %vm991, %v959, %v1027
        %v1060 = vsel %vm992, %v960, %v1028
        %v1061 = vsel %vm993, %v961, %v1029
        %v1062 = vsel %vm994, %v962, %v1030
        %v1063 = vsel %vm995, %v963, %v1031
        %v1064 = vsel %vm996, %v964, %v1032
        %v1065 = vsel %vm997, %v965, %v1033
        %v1066 = vsel %vm998, %v966, %v1034
        %v1067 = vsel %vm999, %v967, %v1035
        %v1068 = vsel %vm1000, %v968, %v1036
        %v1069 = vsel %vm1001, %v969, %v1037
        %v1070 = vsel %vm1002, %v970, %v1038
        %v1071 = vsel %vm1003, %v971, %v1039
        %v1072 = vsel %vm1004, %v972, %v1040
        %v1073 = vsel %vm1005, %v973, %v1041
        %v1074 = vsel %vm1006, %v974, %v1042
        %v1075 = vsel %vm1007, %v975, %v1043
        %v1076 = vsel %vm1008, %v976, %v1044
        %v1077 = vsel %vm1009, %v977, %v1045
        %v1078 = vsel %vm1010, %v978, %v1046
        %v1079 = vld [vmem:[%s3] sm:$0xff]
        %v1080 = vld [vmem:[%s3 + $0x8] sm:$0xff]
        %v1081 = vld [vmem:[%s3 + $0x10] sm:$0xff]
        %v1082 = vld [vmem:[%s3 + $0x18] sm:$0xff]
        %v1083 = vld [vmem:[%s3 + $0x20] sm:$0xff]
        %v1084 = vld [vmem:[%s3 + $0x28] sm:$0xff]
        %v1085 = vld [vmem:[%s3 + $0x30] sm:$0xff]
        %v1086 = vld [vmem:[%s3 + $0x38] sm:$0xff]
        %v1087 = vld [vmem:[%s3 + $0x40] sm:$0xff]
        %v1088 = vld [vmem:[%s3 + $0x48] sm:$0xff]
        %v1089 = vld [vmem:[%s3 + $0x50] sm:$0xff]
        %v1090 = vld [vmem:[%s3 + $0x58] sm:$0xff]
        %v1091 = vld [vmem:[%s3 + $0x60] sm:$0xff]
        %v1092 = vld [vmem:[%s3 + $0x68] sm:$0xff]
        %v1093 = vld [vmem:[%s3 + $0x70] sm:$0xff]
        %v1094 = vld [vmem:[%s3 + $0x78] sm:$0xff]
        %v1095 = vld [vmem:[%s3 + $0x80] sm:$0xff]
        %v1096 = vld [vmem:[%s3 + $0x88] sm:$0xff]
        %v1097 = vld [vmem:[%s3 + $0x90] sm:$0xff]
        %v1098 = vld [vmem:[%s3 + $0x98] sm:$0xff]
        %v1099 = vld [vmem:[%s3 + $0xa0] sm:$0xff]
        %v1100 = vld [vmem:[%s3 + $0xa8] sm:$0xff]
        %v1101 = vld [vmem:[%s3 + $0xb0] sm:$0xff]
        %v1102 = vld [vmem:[%s3 + $0xb8] sm:$0xff]
        %v1103 = vld [vmem:[%s3 + $0xc0] sm:$0xff]
        %v1104 = vld [vmem:[%s3 + $0xc8] sm:$0xff]
        %v1105 = vld [vmem:[%s3 + $0xd0] sm:$0xff]
        %v1106 = vld [vmem:[%s3 + $0xd8] sm:$0xff]
        %v1107 = vld [vmem:[%s3 + $0xe0] sm:$0xff]
        %v1108 = vld [vmem:[%s3 + $0xe8] sm:$0xff]
        %v1109 = vld [vmem:[%s3 + $0xf0] sm:$0xff]
        %v1110 = vld [vmem:[%s3 + $0xf8] sm:$0xff]
        %v1111 = vld [vmem:[%s3 + $0x100] sm:$0xff]
        %v1112 = vld [vmem:[%s3 + $0x108] sm:$0xff]
        %v1113 = vld [vmem:[%s3 + $0x110] sm:$0xff]
        %v1114 = vld [vmem:[%s3 + $0x118] sm:$0xff]
        %v1115 = vld [vmem:[%s3 + $0x120] sm:$0xff]
        %v1116 = vld [vmem:[%s3 + $0x128] sm:$0xff]
        %v1117 = vld [vmem:[%s3 + $0x130] sm:$0xff]
        %v1118 = vld [vmem:[%s3 + $0x138] sm:$0xff]
        %v1119 = vld [vmem:[%s3 + $0x140] sm:$0xff]
        %v1120 = vld [vmem:[%s3 + $0x148] sm:$0xff]
        %v1121 = vld [vmem:[%s3 + $0x150] sm:$0xff]
        %v1122 = vld [vmem:[%s3 + $0x158] sm:$0xff]
        %v1123 = vld [vmem:[%s3 + $0x160] sm:$0xff]
        %v1124 = vld [vmem:[%s3 + $0x168] sm:$0xff]
        %v1125 = vld [vmem:[%s3 + $0x170] sm:$0xff]
        %v1126 = vld [vmem:[%s3 + $0x178] sm:$0xff]
        %v1127 = vld [vmem:[%s3 + $0x180] sm:$0xff]
        %v1128 = vld [vmem:[%s3 + $0x188] sm:$0xff]
        %v1129 = vld [vmem:[%s3 + $0x190] sm:$0xff]
        %v1130 = vld [vmem:[%s3 + $0x198] sm:$0xff]
        %v1131 = vld [vmem:[%s3 + $0x1a0] sm:$0xff]
        %v1132 = vld [vmem:[%s3 + $0x1a8] sm:$0xff]
        %v1133 = vld [vmem:[%s3 + $0x1b0] sm:$0xff]
        %v1134 = vld [vmem:[%s3 + $0x1b8] sm:$0xff]
        %v1135 = vld [vmem:[%s3 + $0x1c0] sm:$0xff]
        %v1136 = vld [vmem:[%s3 + $0x1c8] sm:$0xff]
        %v1137 = vld [vmem:[%s3 + $0x1d0] sm:$0xff]
        %v1138 = vld [vmem:[%s3 + $0x1d8] sm:$0xff]
        %v1139 = vld [vmem:[%s3 + $0x1e0] sm:$0xff]
        %v1140 = vld [vmem:[%s3 + $0x1e8] sm:$0xff]
        %v1141 = vld [vmem:[%s3 + $0x1f0] sm:$0xff]
        %v1142 = vld [vmem:[%s3 + $0x1f8] sm:$0xff]
        %v1143 = vld [vmem:[%s3 + $0x200] sm:$0xff]
        %v1144 = vld [vmem:[%s3 + $0x208] sm:$0xff]
        %v1145 = vld [vmem:[%s3 + $0x210] sm:$0xff]
        %v1146 = vld [vmem:[%s3 + $0x218] sm:$0xff]
        %v1147 = vld [vmem:[%s3 + $0x220] sm:$0xff]
        %v1148 = vld [vmem:[%s3 + $0x228] sm:$0xff]
        %v1149 = vld [vmem:[%s3 + $0x230] sm:$0xff]
        %v1150 = vld [vmem:[%s3 + $0x238] sm:$0xff]
        %v1151 = vld [vmem:[%s3 + $0x240] sm:$0xff]
        %v1152 = vld [vmem:[%s3 + $0x248] sm:$0xff]
        %v1153 = vld [vmem:[%s3 + $0x250] sm:$0xff]
        %v1154 = vld [vmem:[%s3 + $0x258] sm:$0xff]
        %v1155 = vld [vmem:[%s3 + $0x260] sm:$0xff]
        %v1156 = vld [vmem:[%s3 + $0x268] sm:$0xff]
        %v1157 = vld [vmem:[%s3 + $0x270] sm:$0xff]
        %v1158 = vld [vmem:[%s3 + $0x278] sm:$0xff]
        %v1159 = vld [vmem:[%s3 + $0x280] sm:$0xff]
        %v1160 = vld [vmem:[%s3 + $0x288] sm:$0xff]
        %v1161 = vld [vmem:[%s3 + $0x290] sm:$0xff]
        %v1162 = vld [vmem:[%s3 + $0x298] sm:$0xff]
        %v1163 = vld [vmem:[%s3 + $0x2a0] sm:$0xff]
        %v1164 = vld [vmem:[%s3 + $0x2a8] sm:$0xff]
        %v1165 = vld [vmem:[%s3 + $0x2b0] sm:$0xff]
        %v1166 = vld [vmem:[%s3 + $0x2b8] sm:$0xff]
        %v1167 = vld [vmem:[%s3 + $0x2c0] sm:$0xff]
        %v1168 = vld [vmem:[%s3 + $0x2c8] sm:$0xff]
        %v1169 = vld [vmem:[%s3 + $0x2d0] sm:$0xff]
        %v1170 = vld [vmem:[%s3 + $0x2d8] sm:$0xff]
        %v1171 = vld [vmem:[%s3 + $0x2e0] sm:$0xff]
        %v1172 = vld [vmem:[%s3 + $0x2e8] sm:$0xff]
        %v1173 = vld [vmem:[%s3 + $0x2f0] sm:$0xff]
        %v1174 = vld [vmem:[%s3 + $0x2f8] sm:$0xff]
        %vm1175 = vcmask 998400
        %v1177 = vsel %vm1175, %v1080, 0
        %v1180 = vsel %vm1175, %v1082, 0
        %v1183 = vsel %vm1175, %v1084, 0
        %v1186 = vsel %vm1175, %v1086, 0
        %v1189 = vsel %vm1175, %v1088, 0
        %v1192 = vsel %vm1175, %v1090, 0
        %v1195 = vsel %vm1175, %v1092, 0
        %v1198 = vsel %vm1175, %v1094, 0
        %v1201 = vsel %vm1175, %v1096, 0
        %v1204 = vsel %vm1175, %v1098, 0
        %v1207 = vsel %vm1175, %v1100, 0
        %v1210 = vsel %vm1175, %v1102, 0
        %v1213 = vsel %vm1175, %v1104, 0
        %v1216 = vsel %vm1175, %v1106, 0
        %v1219 = vsel %vm1175, %v1108, 0
        %v1222 = vsel %vm1175, %v1110, 0
        %v1225 = vsel %vm1175, %v1112, 0
        %v1228 = vsel %vm1175, %v1114, 0
        %v1231 = vsel %vm1175, %v1116, 0
        %v1234 = vsel %vm1175, %v1118, 0
        %v1237 = vsel %vm1175, %v1120, 0
        %v1240 = vsel %vm1175, %v1122, 0
        %v1243 = vsel %vm1175, %v1124, 0
        %v1246 = vsel %vm1175, %v1126, 0
        %v1249 = vsel %vm1175, %v1128, 0
        %v1252 = vsel %vm1175, %v1130, 0
        %v1255 = vsel %vm1175, %v1132, 0
        %v1258 = vsel %vm1175, %v1134, 0
        %v1261 = vsel %vm1175, %v1136, 0
        %v1264 = vsel %vm1175, %v1138, 0
        %v1267 = vsel %vm1175, %v1140, 0
        %v1270 = vsel %vm1175, %v1142, 0
        %v1273 = vsel %vm1175, %v1144, 0
        %v1276 = vsel %vm1175, %v1146, 0
        %v1279 = vsel %vm1175, %v1148, 0
        %v1282 = vsel %vm1175, %v1150, 0
        %v1285 = vsel %vm1175, %v1152, 0
        %v1288 = vsel %vm1175, %v1154, 0
        %v1291 = vsel %vm1175, %v1156, 0
        %v1294 = vsel %vm1175, %v1158, 0
        %v1297 = vsel %vm1175, %v1160, 0
        %v1300 = vsel %vm1175, %v1162, 0
        %v1303 = vsel %vm1175, %v1164, 0
        %v1306 = vsel %vm1175, %v1166, 0
        %v1309 = vsel %vm1175, %v1168, 0
        %v1312 = vsel %vm1175, %v1170, 0
        %v1315 = vsel %vm1175, %v1172, 0
        %v1318 = vsel %vm1175, %v1174, 0
        %v1321 = vsel %vm463, %v1078, 0
        %1323 = vmatprep.subr.mxu0 0.0
        %1324 = vmatpush1.msra.mxu0 %v1047
        %1325 = vmatprep.subr.mxu0 0.0
        %1326 = vmatpush1.msra.mxu0 %v1048
        %1327 = vmatprep.subr.mxu0 0.0
        %1328 = vmatpush1.msra.mxu0 %v1049
        %1329 = vmatprep.subr.mxu0 0.0
        %1330 = vmatpush1.msra.mxu0 %v1050
        %1331 = vmatprep.subr.mxu0 0.0
        %1332 = vmatpush1.msra.mxu0 %v1051
        %1333 = vmatprep.subr.mxu0 0.0
        %1334 = vmatpush1.msra.mxu0 %v1052
        %1335 = vmatprep.subr.mxu0 0.0
        %1336 = vmatpush1.msra.mxu0 %v1053
        %1337 = vmatprep.subr.mxu0 0.0
        %1338 = vmatpush1.msra.mxu0 %v1054
        %1339 = vmatprep.subr.mxu0 0.0
        %1340 = vmatpush1.msra.mxu0 %v1055
        %1341 = vmatprep.subr.mxu0 0.0
        %1342 = vmatpush1.msra.mxu0 %v1056
        %1343 = vmatprep.subr.mxu0 0.0
        %1344 = vmatpush1.msra.mxu0 %v1057
        %1345 = vmatprep.subr.mxu0 0.0
        %1346 = vmatpush1.msra.mxu0 %v1058
        %1347 = vmatprep.subr.mxu0 0.0
        %1348 = vmatpush1.msra.mxu0 %v1059
        %1349 = vmatprep.subr.mxu0 0.0
        %1350 = vmatpush1.msra.mxu0 %v1060
        %1351 = vmatprep.subr.mxu0 0.0
        %1352 = vmatpush1.msra.mxu0 %v1061
        %1353 = vmatprep.subr.mxu0 0.0
        %1354 = vmatpush1.msra.mxu0 %v1062
        %1355 = vmatprep.subr.mxu0 0.0
        %1356 = vmatpush1.msra.mxu0 %v1063
        %1357 = vmatprep.subr.mxu0 0.0
        %1358 = vmatpush1.msra.mxu0 %v1064
        %1359 = vmatprep.subr.mxu0 0.0
        %1360 = vmatpush1.msra.mxu0 %v1065
        %1361 = vmatprep.subr.mxu0 0.0
        %1362 = vmatpush1.msra.mxu0 %v1066
        %1363 = vmatprep.subr.mxu0 0.0
        %1364 = vmatpush1.msra.mxu0 %v1067
        %1365 = vmatprep.subr.mxu0 0.0
        %1366 = vmatpush1.msra.mxu0 %v1068
        %1367 = vmatprep.subr.mxu0 0.0
        %1368 = vmatpush1.msra.mxu0 %v1069
        %1369 = vmatprep.subr.mxu0 0.0
        %1370 = vmatpush1.msra.mxu0 %v1070
        %1371 = vmatprep.subr.mxu0 0.0
        %1372 = vmatpush1.msra.mxu0 %v1071
        %1373 = vmatprep.subr.mxu0 0.0
        %1374 = vmatpush1.msra.mxu0 %v1072
        %1375 = vmatprep.subr.mxu0 0.0
        %1376 = vmatpush1.msra.mxu0 %v1073
        %1377 = vmatprep.subr.mxu0 0.0
        %1378 = vmatpush1.msra.mxu0 %v1074
        %1379 = vmatprep.subr.mxu0 0.0
        %1380 = vmatpush1.msra.mxu0 %v1075
        %1381 = vmatprep.subr.mxu0 0.0
        %1382 = vmatpush1.msra.mxu0 %v1076
        %1383 = vmatprep.subr.mxu0 0.0
        %1384 = vmatpush1.msra.mxu0 %v1077
        %1385 = vmatprep.subr.mxu0 0.0
        %1386 = vmatpush1.msra.mxu0 %v1321
        %1387 = vmatprep.mubr.f32.mxu0 %v1177
        %1388 = vmatmul.mubr.f32.gmra.mrb[0].mxu0 %v1079
        %v1389 = vpop.f32.mrb[0].mxu0
        %v1390 = vadd.f32 0.0, %v1389
        %v1391 = vpop.f32.mrb[0].mxu0
        %1392 = vmatprep.mubr.f32.mxu0 %v1180
        %1393 = vmatmul.mubr.f32.gmra.mrb[0].mxu0 %v1081
        %v1394 = vpop.f32.mrb[0].mxu0
        %v1395 = vadd.f32 0.0, %v1394
        %v1396 = vpop.f32.mrb[0].mxu0
        %1397 = vmatprep.mubr.f32.mxu0 %v1183
        %1398 = vmatmul.mubr.f32.gmra.mrb[0].mxu0 %v1083
        %v1399 = vpop.f32.mrb[0].mxu0
        %v1400 = vadd.f32 0.0, %v1399
        %v1401 = vpop.f32.mrb[0].mxu0
        %1402 = vmatprep.mubr.f32.mxu0 %v1186
        %1403 = vmatmul.mubr.f32.gmra.mrb[0].mxu0 %v1085
        %v1404 = vpop.f32.mrb[0].mxu0
        %v1405 = vadd.f32 0.0, %v1404
        %v1406 = vpop.f32.mrb[0].mxu0
        %1407 = vmatprep.mubr.f32.mxu0 %v1189
        %1408 = vmatmul.mubr.f32.gmra.mrb[0].mxu0 %v1087
        %v1409 = vpop.f32.mrb[0].mxu0
        %v1410 = vadd.f32 0.0, %v1409
        %v1411 = vpop.f32.mrb[0].mxu0
        %1412 = vmatprep.mubr.f32.mxu0 %v1192
        %1413 = vmatmul.mubr.f32.gmra.mrb[0].mxu0 %v1089
        %v1414 = vpop.f32.mrb[0].mxu0
        %v1415 = vadd.f32 0.0, %v1414
        %v1416 = vpop.f32.mrb[0].mxu0
        %1417 = vmatprep.mubr.f32.mxu0 %v1195
        %1418 = vmatmul.mubr.f32.gmra.mrb[0].mxu0 %v1091
        %v1419 = vpop.f32.mrb[0].mxu0
        %v1420 = vadd.f32 0.0, %v1419
        %v1421 = vpop.f32.mrb[0].mxu0
        %1422 = vmatprep.mubr.f32.mxu0 %v1198
        %1423 = vmatmul.mubr.f32.gmra.mrb[0].mxu0 %v1093
        %v1424 = vpop.f32.mrb[0].mxu0
        %v1425 = vadd.f32 0.0, %v1424
        %v1426 = vpop.f32.mrb[0].mxu0
        %1427 = vmatprep.mubr.f32.mxu0 %v1201
        %1428 = vmatmul.mubr.f32.gmra.mrb[0].mxu0 %v1095
        %v1429 = vpop.f32.mrb[0].mxu0
        %v1430 = vadd.f32 0.0, %v1429
        %v1431 = vpop.f32.mrb[0].mxu0
        %1432 = vmatprep.mubr.f32.mxu0 %v1204
        %1433 = vmatmul.mubr.f32.gmra.mrb[0].mxu0 %v1097
        %v1434 = vpop.f32.mrb[0].mxu0
        %v1435 = vadd.f32 0.0, %v1434
        %v1436 = vpop.f32.mrb[0].mxu0
        %1437 = vmatprep.mubr.f32.mxu0 %v1207
        %1438 = vmatmul.mubr.f32.gmra.mrb[0].mxu0 %v1099
        %v1439 = vpop.f32.mrb[0].mxu0
        %v1440 = vadd.f32 0.0, %v1439
        %v1441 = vpop.f32.mrb[0].mxu0
        %1442 = vmatprep.mubr.f32.mxu0 %v1210
        %1443 = vmatmul.mubr.f32.gmra.mrb[0].mxu0 %v1101
        %v1444 = vpop.f32.mrb[0].mxu0
        %v1445 = vadd.f32 0.0, %v1444
        %v1446 = vpop.f32.mrb[0].mxu0
        %1447 = vmatprep.mubr.f32.mxu0 %v1213
        %1448 = vmatmul.mubr.f32.gmra.mrb[0].mxu0 %v1103
        %v1449 = vpop.f32.mrb[0].mxu0
        %v1450 = vadd.f32 0.0, %v1449
        %v1451 = vpop.f32.mrb[0].mxu0
        %1452 = vmatprep.mubr.f32.mxu0 %v1216
        %1453 = vmatmul.mubr.f32.gmra.mrb[0].mxu0 %v1105
        %v1454 = vpop.f32.mrb[0].mxu0
        %v1455 = vadd.f32 0.0, %v1454
        %v1456 = vpop.f32.mrb[0].mxu0
        %1457 = vmatprep.mubr.f32.mxu0 %v1219
        %1458 = vmatmul.mubr.f32.gmra.mrb[0].mxu0 %v1107
        %v1459 = vpop.f32.mrb[0].mxu0
        %v1460 = vadd.f32 0.0, %v1459
        %v1461 = vpop.f32.mrb[0].mxu0
        %1462 = vmatprep.mubr.f32.mxu0 %v1222
        %1463 = vmatmul.mubr.f32.gmra.mrb[0].mxu0 %v1109
        %v1464 = vpop.f32.mrb[0].mxu0
        %v1465 = vadd.f32 0.0, %v1464
        %v1466 = vpop.f32.mrb[0].mxu0
        %1467 = vmatprep.mubr.f32.mxu0 %v1225
        %1468 = vmatmul.mubr.f32.gmra.mrb[0].mxu0 %v1111
        %v1469 = vpop.f32.mrb[0].mxu0
        %v1470 = vadd.f32 0.0, %v1469
        %v1471 = vpop.f32.mrb[0].mxu0
        %1472 = vmatprep.mubr.f32.mxu0 %v1228
        %1473 = vmatmul.mubr.f32.gmra.mrb[0].mxu0 %v1113
        %v1474 = vpop.f32.mrb[0].mxu0
        %v1475 = vadd.f32 0.0, %v1474
        %v1476 = vpop.f32.mrb[0].mxu0
        %1477 = vmatprep.mubr.f32.mxu0 %v1231
        %1478 = vmatmul.mubr.f32.gmra.mrb[0].mxu0 %v1115
        %v1479 = vpop.f32.mrb[0].mxu0
        %v1480 = vadd.f32 0.0, %v1479
        %v1481 = vpop.f32.mrb[0].mxu0
        %1482 = vmatprep.mubr.f32.mxu0 %v1234
        %1483 = vmatmul.mubr.f32.gmra.mrb[0].mxu0 %v1117
        %v1484 = vpop.f32.mrb[0].mxu0
        %v1485 = vadd.f32 0.0, %v1484
        %v1486 = vpop.f32.mrb[0].mxu0
        %1487 = vmatprep.mubr.f32.mxu0 %v1237
        %1488 = vmatmul.mubr.f32.gmra.mrb[0].mxu0 %v1119
        %v1489 = vpop.f32.mrb[0].mxu0
        %v1490 = vadd.f32 0.0, %v1489
        %v1491 = vpop.f32.mrb[0].mxu0
        %1492 = vmatprep.mubr.f32.mxu0 %v1240
        %1493 = vmatmul.mubr.f32.gmra.mrb[0].mxu0 %v1121
        %v1494 = vpop.f32.mrb[0].mxu0
        %v1495 = vadd.f32 0.0, %v1494
        %v1496 = vpop.f32.mrb[0].mxu0
        %1497 = vmatprep.mubr.f32.mxu0 %v1243
        %1498 = vmatmul.mubr.f32.gmra.mrb[0].mxu0 %v1123
        %v1499 = vpop.f32.mrb[0].mxu0
        %v1500 = vadd.f32 0.0, %v1499
        %v1501 = vpop.f32.mrb[0].mxu0
        %1502 = vmatprep.mubr.f32.mxu0 %v1246
        %1503 = vmatmul.mubr.f32.gmra.mrb[0].mxu0 %v1125
        %v1504 = vpop.f32.mrb[0].mxu0
        %v1505 = vadd.f32 0.0, %v1504
        %v1506 = vpop.f32.mrb[0].mxu0
        %1507 = vmatprep.mubr.f32.mxu0 %v1249
        %1508 = vmatmul.mubr.f32.gmra.mrb[0].mxu0 %v1127
        %v1509 = vpop.f32.mrb[0].mxu0
        %v1510 = vadd.f32 0.0, %v1509
        %v1511 = vpop.f32.mrb[0].mxu0
        %1512 = vmatprep.mubr.f32.mxu0 %v1252
        %1513 = vmatmul.mubr.f32.gmra.mrb[0].mxu0 %v1129
        %v1514 = vpop.f32.mrb[0].mxu0
        %v1515 = vadd.f32 0.0, %v1514
        %v1516 = vpop.f32.mrb[0].mxu0
        %1517 = vmatprep.mubr.f32.mxu0 %v1255
        %1518 = vmatmul.mubr.f32.gmra.mrb[0].mxu0 %v1131
        %v1519 = vpop.f32.mrb[0].mxu0
        %v1520 = vadd.f32 0.0, %v1519
        %v1521 = vpop.f32.mrb[0].mxu0
        %1522 = vmatprep.mubr.f32.mxu0 %v1258
        %1523 = vmatmul.mubr.f32.gmra.mrb[0].mxu0 %v1133
        %v1524 = vpop.f32.mrb[0].mxu0
        %v1525 = vadd.f32 0.0, %v1524
        %v1526 = vpop.f32.mrb[0].mxu0
        %1527 = vmatprep.mubr.f32.mxu0 %v1261
        %1528 = vmatmul.mubr.f32.gmra.mrb[0].mxu0 %v1135
        %v1529 = vpop.f32.mrb[0].mxu0
        %v1530 = vadd.f32 0.0, %v1529
        %v1531 = vpop.f32.mrb[0].mxu0
        %1532 = vmatprep.mubr.f32.mxu0 %v1264
        %1533 = vmatmul.mubr.f32.gmra.mrb[0].mxu0 %v1137
        %v1534 = vpop.f32.mrb[0].mxu0
        %v1535 = vadd.f32 0.0, %v1534
        %v1536 = vpop.f32.mrb[0].mxu0
        %1537 = vmatprep.mubr.f32.mxu0 %v1267
        %1538 = vmatmul.mubr.f32.gmra.mrb[0].mxu0 %v1139
        %v1539 = vpop.f32.mrb[0].mxu0
        %v1540 = vadd.f32 0.0, %v1539
        %v1541 = vpop.f32.mrb[0].mxu0
        %1542 = vmatprep.mubr.f32.mxu0 %v1270
        %1543 = vmatmul.mubr.f32.gmra.mrb[0].mxu0 %v1141
        %v1544 = vpop.f32.mrb[0].mxu0
        %v1545 = vadd.f32 0.0, %v1544
        %v1546 = vpop.f32.mrb[0].mxu0
        %1547 = vmatprep.mubr.f32.mxu0 %v1273
        %1548 = vmatmul.mubr.f32.gmra.mrb[0].mxu0 %v1143
        %v1549 = vpop.f32.mrb[0].mxu0
        %v1550 = vadd.f32 0.0, %v1549
        %v1551 = vpop.f32.mrb[0].mxu0
        %1552 = vmatprep.mubr.f32.mxu0 %v1276
        %1553 = vmatmul.mubr.f32.gmra.mrb[0].mxu0 %v1145
        %v1554 = vpop.f32.mrb[0].mxu0
        %v1555 = vadd.f32 0.0, %v1554
        %v1556 = vpop.f32.mrb[0].mxu0
        %1557 = vmatprep.mubr.f32.mxu0 %v1279
        %1558 = vmatmul.mubr.f32.gmra.mrb[0].mxu0 %v1147
        %v1559 = vpop.f32.mrb[0].mxu0
        %v1560 = vadd.f32 0.0, %v1559
        %v1561 = vpop.f32.mrb[0].mxu0
        %1562 = vmatprep.mubr.f32.mxu0 %v1282
        %1563 = vmatmul.mubr.f32.gmra.mrb[0].mxu0 %v1149
        %v1564 = vpop.f32.mrb[0].mxu0
        %v1565 = vadd.f32 0.0, %v1564
        %v1566 = vpop.f32.mrb[0].mxu0
        %1567 = vmatprep.mubr.f32.mxu0 %v1285
        %1568 = vmatmul.mubr.f32.gmra.mrb[0].mxu0 %v1151
        %v1569 = vpop.f32.mrb[0].mxu0
        %v1570 = vadd.f32 0.0, %v1569
        %v1571 = vpop.f32.mrb[0].mxu0
        %1572 = vmatprep.mubr.f32.mxu0 %v1288
        %1573 = vmatmul.mubr.f32.gmra.mrb[0].mxu0 %v1153
        %v1574 = vpop.f32.mrb[0].mxu0
        %v1575 = vadd.f32 0.0, %v1574
        %v1576 = vpop.f32.mrb[0].mxu0
        %1577 = vmatprep.mubr.f32.mxu0 %v1291
        %1578 = vmatmul.mubr.f32.gmra.mrb[0].mxu0 %v1155
        %v1579 = vpop.f32.mrb[0].mxu0
        %v1580 = vadd.f32 0.0, %v1579
        %v1581 = vpop.f32.mrb[0].mxu0
        %1582 = vmatprep.mubr.f32.mxu0 %v1294
        %1583 = vmatmul.mubr.f32.gmra.mrb[0].mxu0 %v1157
        %v1584 = vpop.f32.mrb[0].mxu0
        %v1585 = vadd.f32 0.0, %v1584
        %v1586 = vpop.f32.mrb[0].mxu0
        %1587 = vmatprep.mubr.f32.mxu0 %v1297
        %1588 = vmatmul.mubr.f32.gmra.mrb[0].mxu0 %v1159
        %v1589 = vpop.f32.mrb[0].mxu0
        %v1590 = vadd.f32 0.0, %v1589
        %v1591 = vpop.f32.mrb[0].mxu0
        %1592 = vmatprep.mubr.f32.mxu0 %v1300
        %1593 = vmatmul.mubr.f32.gmra.mrb[0].mxu0 %v1161
        %v1594 = vpop.f32.mrb[0].mxu0
        %v1595 = vadd.f32 0.0, %v1594
        %v1596 = vpop.f32.mrb[0].mxu0
        %1597 = vmatprep.mubr.f32.mxu0 %v1303
        %1598 = vmatmul.mubr.f32.gmra.mrb[0].mxu0 %v1163
        %v1599 = vpop.f32.mrb[0].mxu0
        %v1600 = vadd.f32 0.0, %v1599
        %v1601 = vpop.f32.mrb[0].mxu0
        %1602 = vmatprep.mubr.f32.mxu0 %v1306
        %1603 = vmatmul.mubr.f32.gmra.mrb[0].mxu0 %v1165
        %v1604 = vpop.f32.mrb[0].mxu0
        %v1605 = vadd.f32 0.0, %v1604
        %v1606 = vpop.f32.mrb[0].mxu0
        %1607 = vmatprep.mubr.f32.mxu0 %v1309
        %1608 = vmatmul.mubr.f32.gmra.mrb[0].mxu0 %v1167
        %v1609 = vpop.f32.mrb[0].mxu0
        %v1610 = vadd.f32 0.0, %v1609
        %v1611 = vpop.f32.mrb[0].mxu0
        %1612 = vmatprep.mubr.f32.mxu0 %v1312
        %1613 = vmatmul.mubr.f32.gmra.mrb[0].mxu0 %v1169
        %v1614 = vpop.f32.mrb[0].mxu0
        %v1615 = vadd.f32 0.0, %v1614
        %v1616 = vpop.f32.mrb[0].mxu0
        %1617 = vmatprep.mubr.f32.mxu0 %v1315
        %1618 = vmatmul.mubr.f32.gmra.mrb[0].mxu0 %v1171
        %v1619 = vpop.f32.mrb[0].mxu0
        %v1620 = vadd.f32 0.0, %v1619
        %v1621 = vpop.f32.mrb[0].mxu0
        %1622 = vmatprep.mubr.f32.mxu0 %v1318
        %1623 = vmatmul.mubr.f32.gmra.mrb[0].mxu0 %v1173
        %v1624 = vpop.f32.mrb[0].mxu0
        %v1625 = vadd.f32 0.0, %v1624
        %v1626 = vpop.f32.mrb[0].mxu0
        %1627 = vdwg.mxu0
        %v1628 = vld [vmem:[%s4] sm:$0xff]
        %v1629 = vld [vmem:[%s4 + $0x8] sm:$0xff]
        %v1630 = vld [vmem:[%s4 + $0x10] sm:$0xff]
        %v1631 = vld [vmem:[%s4 + $0x18] sm:$0xff]
        %s1632 = scalar_lea.vmem %s4, 32
        %v1633 = vld [vmem:[%s1632] sm:$0xff]
        %v1634 = vld [vmem:[%s1632 + $0x8] sm:$0xff]
        %v1635 = vld [vmem:[%s1632 + $0x10] sm:$0xff]
        %v1636 = vld [vmem:[%s1632 + $0x18] sm:$0xff]
        %v1638 = vsel %vm695, %v1410, 0
        %v1641 = vsel %vm695, %v1415, 0
        %v1644 = vsel %vm695, %v1420, 0
        %v1647 = vsel %vm695, %v1425, 0
        %1649 = vmatprep.subr.mxu0 0.0
        %1650 = vmatpush1.msra.mxu0 %v1633
        %1651 = vmatprep.subr.mxu0 0.0
        %1652 = vmatpush1.msra.mxu0 %v1634
        %1653 = vmatprep.subr.mxu0 0.0
        %1654 = vmatpush1.msra.mxu0 %v1635
        %1655 = vmatprep.subr.mxu0 0.0
        %1656 = vmatpush1.msra.mxu0 %v1636
        %1657 = vmatprep.subr.mxu0 0.0
        %1658 = vmatpush1.msra.mxu0 0.0
        %1659 = vmatprep.subr.mxu0 0.0
        %1660 = vmatpush1.msra.mxu0 0.0
        %1661 = vmatprep.subr.mxu0 0.0
        %1662 = vmatpush1.msra.mxu0 0.0
        %1663 = vmatprep.subr.mxu0 0.0
        %1664 = vmatpush1.msra.mxu0 0.0
        %1665 = vmatprep.subr.mxu0 0.0
        %1666 = vmatpush1.msra.mxu0 0.0
        %1667 = vmatprep.subr.mxu0 0.0
        %1668 = vmatpush1.msra.mxu0 0.0
        %1669 = vmatprep.subr.mxu0 0.0
        %1670 = vmatpush1.msra.mxu0 0.0
        %1671 = vmatprep.subr.mxu0 0.0
        %1672 = vmatpush1.msra.mxu0 0.0
        %1673 = vmatprep.subr.mxu0 0.0
        %1674 = vmatpush1.msra.mxu0 0.0
        %1675 = vmatprep.subr.mxu0 0.0
        %1676 = vmatpush1.msra.mxu0 0.0
        %1677 = vmatprep.subr.mxu0 0.0
        %1678 = vmatpush1.msra.mxu0 0.0
        %1679 = vmatprep.subr.mxu0 0.0
        %1680 = vmatpush1.msra.mxu0 0.0
        %1681 = vmatprep.subr.mxu0 0.0
        %1682 = vmatpush1.msra.mxu0 0.0
        %1683 = vmatprep.subr.mxu0 0.0
        %1684 = vmatpush1.msra.mxu0 0.0
        %1685 = vmatprep.subr.mxu0 0.0
        %1686 = vmatpush1.msra.mxu0 0.0
        %1687 = vmatprep.subr.mxu0 0.0
        %1688 = vmatpush1.msra.mxu0 0.0
        %1689 = vmatprep.subr.mxu0 0.0
        %1690 = vmatpush1.msra.mxu0 0.0
        %1691 = vmatprep.subr.mxu0 0.0
        %1692 = vmatpush1.msra.mxu0 0.0
        %1693 = vmatprep.subr.mxu0 0.0
        %1694 = vmatpush1.msra.mxu0 0.0
        %1695 = vmatprep.subr.mxu0 0.0
        %1696 = vmatpush1.msra.mxu0 0.0
        %1697 = vmatprep.subr.mxu0 0.0
        %1698 = vmatpush1.msra.mxu0 0.0
        %1699 = vmatprep.subr.mxu0 0.0
        %1700 = vmatpush1.msra.mxu0 0.0
        %1701 = vmatprep.subr.mxu0 0.0
        %1702 = vmatpush1.msra.mxu0 0.0
        %1703 = vmatprep.subr.mxu0 0.0
        %1704 = vmatpush1.msra.mxu0 0.0
        %1705 = vmatprep.subr.mxu0 0.0
        %1706 = vmatpush1.msra.mxu0 0.0
        %1707 = vmatprep.subr.mxu0 0.0
        %1708 = vmatpush1.msra.mxu0 0.0
        %1709 = vmatprep.subr.mxu0 0.0
        %1710 = vmatpush1.msra.mxu0 0.0
        %1711 = vmatprep.subr.mxu0 0.0
        %1712 = vmatpush1.msra.mxu0 0.0
        %1713 = vmatprep.mubr.f32.mxu0 0.0
        %1714 = vmatmul.mubr.f32.gmra.mrb[0].mxu0 %v1638
        %v1715 = vpop.f32.mrb[0].mxu0
        %v1716 = vadd.f32 0.0, %v1715
        %v1717 = vpop.f32.mrb[0].mxu0
        %1718 = vmatprep.mubr.f32.mxu0 0.0
        %1719 = vmatmul.mubr.f32.gmra.mrb[0].mxu0 %v1641
        %v1720 = vpop.f32.mrb[0].mxu0
        %v1721 = vadd.f32 0.0, %v1720
        %v1722 = vpop.f32.mrb[0].mxu0
        %1723 = vmatprep.mubr.f32.mxu0 0.0
        %1724 = vmatmul.mubr.f32.gmra.mrb[0].mxu0 %v1644
        %v1725 = vpop.f32.mrb[0].mxu0
        %v1726 = vadd.f32 0.0, %v1725
        %v1727 = vpop.f32.mrb[0].mxu0
        %1728 = vmatprep.mubr.f32.mxu0 0.0
        %1729 = vmatmul.mubr.f32.gmra.mrb[0].mxu0 %v1647
        %v1730 = vpop.f32.mrb[0].mxu0
        %v1731 = vadd.f32 0.0, %v1730
        %v1732 = vpop.f32.mrb[0].mxu0
        %1733 = vdwg.mxu0
        %v1735 = vsel %vm695, %v1390, 0
        %v1738 = vsel %vm695, %v1395, 0
        %v1741 = vsel %vm695, %v1400, 0
        %v1744 = vsel %vm695, %v1405, 0
        %1746 = vmatprep.subr.mxu0 0.0
        %1747 = vmatpush1.msra.mxu0 %v1628
        %1748 = vmatprep.subr.mxu0 0.0
        %1749 = vmatpush1.msra.mxu0 %v1629
        %1750 = vmatprep.subr.mxu0 0.0
        %1751 = vmatpush1.msra.mxu0 %v1630
        %1752 = vmatprep.subr.mxu0 0.0
        %1753 = vmatpush1.msra.mxu0 %v1631
        %1754 = vmatprep.subr.mxu0 0.0
        %1755 = vmatpush1.msra.mxu0 0.0
        %1756 = vmatprep.subr.mxu0 0.0
        %1757 = vmatpush1.msra.mxu0 0.0
        %1758 = vmatprep.subr.mxu0 0.0
        %1759 = vmatpush1.msra.mxu0 0.0
        %1760 = vmatprep.subr.mxu0 0.0
        %1761 = vmatpush1.msra.mxu0 0.0
        %1762 = vmatprep.subr.mxu0 0.0
        %1763 = vmatpush1.msra.mxu0 0.0
        %1764 = vmatprep.subr.mxu0 0.0
        %1765 = vmatpush1.msra.mxu0 0.0
        %1766 = vmatprep.subr.mxu0 0.0
        %1767 = vmatpush1.msra.mxu0 0.0
        %1768 = vmatprep.subr.mxu0 0.0
        %1769 = vmatpush1.msra.mxu0 0.0
        %1770 = vmatprep.subr.mxu0 0.0
        %1771 = vmatpush1.msra.mxu0 0.0
        %1772 = vmatprep.subr.mxu0 0.0
        %1773 = vmatpush1.msra.mxu0 0.0
        %1774 = vmatprep.subr.mxu0 0.0
        %1775 = vmatpush1.msra.mxu0 0.0
        %1776 = vmatprep.subr.mxu0 0.0
        %1777 = vmatpush1.msra.mxu0 0.0
        %1778 = vmatprep.subr.mxu0 0.0
        %1779 = vmatpush1.msra.mxu0 0.0
        %1780 = vmatprep.subr.mxu0 0.0
        %1781 = vmatpush1.msra.mxu0 0.0
        %1782 = vmatprep.subr.mxu0 0.0
        %1783 = vmatpush1.msra.mxu0 0.0
        %1784 = vmatprep.subr.mxu0 0.0
        %1785 = vmatpush1.msra.mxu0 0.0
        %1786 = vmatprep.subr.mxu0 0.0
        %1787 = vmatpush1.msra.mxu0 0.0
        %1788 = vmatprep.subr.mxu0 0.0
        %1789 = vmatpush1.msra.mxu0 0.0
        %1790 = vmatprep.subr.mxu0 0.0
        %1791 = vmatpush1.msra.mxu0 0.0
        %1792 = vmatprep.subr.mxu0 0.0
        %1793 = vmatpush1.msra.mxu0 0.0
        %1794 = vmatprep.subr.mxu0 0.0
        %1795 = vmatpush1.msra.mxu0 0.0
        %1796 = vmatprep.subr.mxu0 0.0
        %1797 = vmatpush1.msra.mxu0 0.0
        %1798 = vmatprep.subr.mxu0 0.0
        %1799 = vmatpush1.msra.mxu0 0.0
        %1800 = vmatprep.subr.mxu0 0.0
        %1801 = vmatpush1.msra.mxu0 0.0
        %1802 = vmatprep.subr.mxu0 0.0
        %1803 = vmatpush1.msra.mxu0 0.0
        %1804 = vmatprep.subr.mxu0 0.0
        %1805 = vmatpush1.msra.mxu0 0.0
        %1806 = vmatprep.subr.mxu0 0.0
        %1807 = vmatpush1.msra.mxu0 0.0
        %1808 = vmatprep.subr.mxu0 0.0
        %1809 = vmatpush1.msra.mxu0 0.0
        %1810 = vmatprep.mubr.f32.mxu0 0.0
        %1811 = vmatmul.mubr.f32.gmra.mrb[0].mxu0 %v1735
        %v1812 = vpop.f32.mrb[0].mxu0
        %v1813 = vadd.f32 %v1716, %v1812
        %v1814 = vpop.f32.mrb[0].mxu0
        %1815 = vmatprep.mubr.f32.mxu0 0.0
        %1816 = vmatmul.mubr.f32.gmra.mrb[0].mxu0 %v1738
        %v1817 = vpop.f32.mrb[0].mxu0
        %v1818 = vadd.f32 %v1721, %v1817
        %v1819 = vpop.f32.mrb[0].mxu0
        %1820 = vmatprep.mubr.f32.mxu0 0.0
        %1821 = vmatmul.mubr.f32.gmra.mrb[0].mxu0 %v1741
        %v1822 = vpop.f32.mrb[0].mxu0
        %v1823 = vadd.f32 %v1726, %v1822
        %v1824 = vpop.f32.mrb[0].mxu0
        %1825 = vmatprep.mubr.f32.mxu0 0.0
        %1826 = vmatmul.mubr.f32.gmra.mrb[0].mxu0 %v1744
        %v1827 = vpop.f32.mrb[0].mxu0
        %v1828 = vadd.f32 %v1731, %v1827
        %v1829 = vpop.f32.mrb[0].mxu0
        %1830 = vdwg.mxu0
        %s1831 = scalar_lea.vmem %s4, 64
        %v1832 = vld [vmem:[%s1831] sm:$0xff]
        %v1833 = vld [vmem:[%s1831 + $0x8] sm:$0xff]
        %v1834 = vld [vmem:[%s1831 + $0x10] sm:$0xff]
        %v1835 = vld [vmem:[%s1831 + $0x18] sm:$0xff]
        %v1837 = vsel %vm695, %v1430, 0
        %v1840 = vsel %vm695, %v1435, 0
        %v1843 = vsel %vm695, %v1440, 0
        %v1846 = vsel %vm695, %v1445, 0
        %1848 = vmatprep.subr.mxu0 0.0
        %1849 = vmatpush1.msra.mxu0 %v1832
        %1850 = vmatprep.subr.mxu0 0.0
        %1851 = vmatpush1.msra.mxu0 %v1833
        %1852 = vmatprep.subr.mxu0 0.0
        %1853 = vmatpush1.msra.mxu0 %v1834
        %1854 = vmatprep.subr.mxu0 0.0
        %1855 = vmatpush1.msra.mxu0 %v1835
        %1856 = vmatprep.subr.mxu0 0.0
        %1857 = vmatpush1.msra.mxu0 0.0
        %1858 = vmatprep.subr.mxu0 0.0
        %1859 = vmatpush1.msra.mxu0 0.0
        %1860 = vmatprep.subr.mxu0 0.0
        %1861 = vmatpush1.msra.mxu0 0.0
        %1862 = vmatprep.subr.mxu0 0.0
        %1863 = vmatpush1.msra.mxu0 0.0
        %1864 = vmatprep.subr.mxu0 0.0
        %1865 = vmatpush1.msra.mxu0 0.0
        %1866 = vmatprep.subr.mxu0 0.0
        %1867 = vmatpush1.msra.mxu0 0.0
        %1868 = vmatprep.subr.mxu0 0.0
        %1869 = vmatpush1.msra.mxu0 0.0
        %1870 = vmatprep.subr.mxu0 0.0
        %1871 = vmatpush1.msra.mxu0 0.0
        %1872 = vmatprep.subr.mxu0 0.0
        %1873 = vmatpush1.msra.mxu0 0.0
        %1874 = vmatprep.subr.mxu0 0.0
        %1875 = vmatpush1.msra.mxu0 0.0
        %1876 = vmatprep.subr.mxu0 0.0
        %1877 = vmatpush1.msra.mxu0 0.0
        %1878 = vmatprep.subr.mxu0 0.0
        %1879 = vmatpush1.msra.mxu0 0.0
        %1880 = vmatprep.subr.mxu0 0.0
        %1881 = vmatpush1.msra.mxu0 0.0
        %1882 = vmatprep.subr.mxu0 0.0
        %1883 = vmatpush1.msra.mxu0 0.0
        %1884 = vmatprep.subr.mxu0 0.0
        %1885 = vmatpush1.msra.mxu0 0.0
        %1886 = vmatprep.subr.mxu0 0.0
        %1887 = vmatpush1.msra.mxu0 0.0
        %1888 = vmatprep.subr.mxu0 0.0
        %1889 = vmatpush1.msra.mxu0 0.0
        %1890 = vmatprep.subr.mxu0 0.0
        %1891 = vmatpush1.msra.mxu0 0.0
        %1892 = vmatprep.subr.mxu0 0.0
        %1893 = vmatpush1.msra.mxu0 0.0
        %1894 = vmatprep.subr.mxu0 0.0
        %1895 = vmatpush1.msra.mxu0 0.0
        %1896 = vmatprep.subr.mxu0 0.0
        %1897 = vmatpush1.msra.mxu0 0.0
        %1898 = vmatprep.subr.mxu0 0.0
        %1899 = vmatpush1.msra.mxu0 0.0
        %1900 = vmatprep.subr.mxu0 0.0
        %1901 = vmatpush1.msra.mxu0 0.0
        %1902 = vmatprep.subr.mxu0 0.0
        %1903 = vmatpush1.msra.mxu0 0.0
        %1904 = vmatprep.subr.mxu0 0.0
        %1905 = vmatpush1.msra.mxu0 0.0
        %1906 = vmatprep.subr.mxu0 0.0
        %1907 = vmatpush1.msra.mxu0 0.0
        %1908 = vmatprep.subr.mxu0 0.0
        %1909 = vmatpush1.msra.mxu0 0.0
        %1910 = vmatprep.subr.mxu0 0.0
        %1911 = vmatpush1.msra.mxu0 0.0
        %1912 = vmatprep.mubr.f32.mxu0 0.0
        %1913 = vmatmul.mubr.f32.gmra.mrb[0].mxu0 %v1837
        %v1914 = vpop.f32.mrb[0].mxu0
        %v1915 = vadd.f32 0.0, %v1914
        %v1916 = vpop.f32.mrb[0].mxu0
        %1917 = vmatprep.mubr.f32.mxu0 0.0
        %1918 = vmatmul.mubr.f32.gmra.mrb[0].mxu0 %v1840
        %v1919 = vpop.f32.mrb[0].mxu0
        %v1920 = vadd.f32 0.0, %v1919
        %v1921 = vpop.f32.mrb[0].mxu0
        %1922 = vmatprep.mubr.f32.mxu0 0.0
        %1923 = vmatmul.mubr.f32.gmra.mrb[0].mxu0 %v1843
        %v1924 = vpop.f32.mrb[0].mxu0
        %v1925 = vadd.f32 0.0, %v1924
        %v1926 = vpop.f32.mrb[0].mxu0
        %1927 = vmatprep.mubr.f32.mxu0 0.0
        %1928 = vmatmul.mubr.f32.gmra.mrb[0].mxu0 %v1846
        %v1929 = vpop.f32.mrb[0].mxu0
        %v1930 = vadd.f32 0.0, %v1929
        %v1931 = vpop.f32.mrb[0].mxu0
        %1932 = vdwg.mxu0
        %v1933 = vadd.f32 %v1813, %v1915
        %v1934 = vadd.f32 %v1818, %v1920
        %v1935 = vadd.f32 %v1823, %v1925
        %v1936 = vadd.f32 %v1828, %v1930
        %s1937 = scalar_lea.vmem %s4, 96
        %v1938 = vld [vmem:[%s1937] sm:$0xff]
        %v1939 = vld [vmem:[%s1937 + $0x8] sm:$0xff]
        %v1940 = vld [vmem:[%s1937 + $0x10] sm:$0xff]
        %v1941 = vld [vmem:[%s1937 + $0x18] sm:$0xff]
        %v1943 = vsel %vm695, %v1450, 0
        %v1946 = vsel %vm695, %v1455, 0
        %v1949 = vsel %vm695, %v1460, 0
        %v1952 = vsel %vm695, %v1465, 0
        %1954 = vmatprep.subr.mxu0 0.0
        %1955 = vmatpush1.msra.mxu0 %v1938
        %1956 = vmatprep.subr.mxu0 0.0
        %1957 = vmatpush1.msra.mxu0 %v1939
        %1958 = vmatprep.subr.mxu0 0.0
        %1959 = vmatpush1.msra.mxu0 %v1940
        %1960 = vmatprep.subr.mxu0 0.0
        %1961 = vmatpush1.msra.mxu0 %v1941
        %1962 = vmatprep.subr.mxu0 0.0
        %1963 = vmatpush1.msra.mxu0 0.0
        %1964 = vmatprep.subr.mxu0 0.0
        %1965 = vmatpush1.msra.mxu0 0.0
        %1966 = vmatprep.subr.mxu0 0.0
        %1967 = vmatpush1.msra.mxu0 0.0
        %1968 = vmatprep.subr.mxu0 0.0
        %1969 = vmatpush1.msra.mxu0 0.0
        %1970 = vmatprep.subr.mxu0 0.0
        %1971 = vmatpush1.msra.mxu0 0.0
        %1972 = vmatprep.subr.mxu0 0.0
        %1973 = vmatpush1.msra.mxu0 0.0
        %1974 = vmatprep.subr.mxu0 0.0
        %1975 = vmatpush1.msra.mxu0 0.0
        %1976 = vmatprep.subr.mxu0 0.0
        %1977 = vmatpush1.msra.mxu0 0.0
        %1978 = vmatprep.subr.mxu0 0.0
        %1979 = vmatpush1.msra.mxu0 0.0
        %1980 = vmatprep.subr.mxu0 0.0
        %1981 = vmatpush1.msra.mxu0 0.0
        %1982 = vmatprep.subr.mxu0 0.0
        %1983 = vmatpush1.msra.mxu0 0.0
        %1984 = vmatprep.subr.mxu0 0.0
        %1985 = vmatpush1.msra.mxu0 0.0
        %1986 = vmatprep.subr.mxu0 0.0
        %1987 = vmatpush1.msra.mxu0 0.0
        %1988 = vmatprep.subr.mxu0 0.0
        %1989 = vmatpush1.msra.mxu0 0.0
        %1990 = vmatprep.subr.mxu0 0.0
        %1991 = vmatpush1.msra.mxu0 0.0
        %1992 = vmatprep.subr.mxu0 0.0
        %1993 = vmatpush1.msra.mxu0 0.0
        %1994 = vmatprep.subr.mxu0 0.0
        %1995 = vmatpush1.msra.mxu0 0.0
        %1996 = vmatprep.subr.mxu0 0.0
        %1997 = vmatpush1.msra.mxu0 0.0
        %1998 = vmatprep.subr.mxu0 0.0
        %1999 = vmatpush1.msra.mxu0 0.0
        %2000 = vmatprep.subr.mxu0 0.0
        %2001 = vmatpush1.msra.mxu0 0.0
        %2002 = vmatprep.subr.mxu0 0.0
        %2003 = vmatpush1.msra.mxu0 0.0
        %2004 = vmatprep.subr.mxu0 0.0
        %2005 = vmatpush1.msra.mxu0 0.0
        %2006 = vmatprep.subr.mxu0 0.0
        %2007 = vmatpush1.msra.mxu0 0.0
        %2008 = vmatprep.subr.mxu0 0.0
        %2009 = vmatpush1.msra.mxu0 0.0
        %2010 = vmatprep.subr.mxu0 0.0
        %2011 = vmatpush1.msra.mxu0 0.0
        %2012 = vmatprep.subr.mxu0 0.0
        %2013 = vmatpush1.msra.mxu0 0.0
        %2014 = vmatprep.subr.mxu0 0.0
        %2015 = vmatpush1.msra.mxu0 0.0
        %2016 = vmatprep.subr.mxu0 0.0
        %2017 = vmatpush1.msra.mxu0 0.0
        %2018 = vmatprep.mubr.f32.mxu0 0.0
        %2019 = vmatmul.mubr.f32.gmra.mrb[0].mxu0 %v1943
        %v2020 = vpop.f32.mrb[0].mxu0
        %v2021 = vadd.f32 0.0, %v2020
        %v2022 = vpop.f32.mrb[0].mxu0
        %2023 = vmatprep.mubr.f32.mxu0 0.0
        %2024 = vmatmul.mubr.f32.gmra.mrb[0].mxu0 %v1946
        %v2025 = vpop.f32.mrb[0].mxu0
        %v2026 = vadd.f32 0.0, %v2025
        %v2027 = vpop.f32.mrb[0].mxu0
        %2028 = vmatprep.mubr.f32.mxu0 0.0
        %2029 = vmatmul.mubr.f32.gmra.mrb[0].mxu0 %v1949
        %v2030 = vpop.f32.mrb[0].mxu0
        %v2031 = vadd.f32 0.0, %v2030
        %v2032 = vpop.f32.mrb[0].mxu0
        %2033 = vmatprep.mubr.f32.mxu0 0.0
        %2034 = vmatmul.mubr.f32.gmra.mrb[0].mxu0 %v1952
        %v2035 = vpop.f32.mrb[0].mxu0
        %v2036 = vadd.f32 0.0, %v2035
        %v2037 = vpop.f32.mrb[0].mxu0
        %2038 = vdwg.mxu0
        %v2039 = vadd.f32 %v1933, %v2021
        %v2040 = vadd.f32 %v1934, %v2026
        %v2041 = vadd.f32 %v1935, %v2031
        %v2042 = vadd.f32 %v1936, %v2036
        %s2043 = scalar_lea.vmem %s4, 128
        %v2044 = vld [vmem:[%s2043] sm:$0xff]
        %v2045 = vld [vmem:[%s2043 + $0x8] sm:$0xff]
        %v2046 = vld [vmem:[%s2043 + $0x10] sm:$0xff]
        %v2047 = vld [vmem:[%s2043 + $0x18] sm:$0xff]
        %v2049 = vsel %vm695, %v1470, 0
        %v2052 = vsel %vm695, %v1475, 0
        %v2055 = vsel %vm695, %v1480, 0
        %v2058 = vsel %vm695, %v1485, 0
        %2060 = vmatprep.subr.mxu0 0.0
        %2061 = vmatpush1.msra.mxu0 %v2044
        %2062 = vmatprep.subr.mxu0 0.0
        %2063 = vmatpush1.msra.mxu0 %v2045
        %2064 = vmatprep.subr.mxu0 0.0
        %2065 = vmatpush1.msra.mxu0 %v2046
        %2066 = vmatprep.subr.mxu0 0.0
        %2067 = vmatpush1.msra.mxu0 %v2047
        %2068 = vmatprep.subr.mxu0 0.0
        %2069 = vmatpush1.msra.mxu0 0.0
        %2070 = vmatprep.subr.mxu0 0.0
        %2071 = vmatpush1.msra.mxu0 0.0
        %2072 = vmatprep.subr.mxu0 0.0
        %2073 = vmatpush1.msra.mxu0 0.0
        %2074 = vmatprep.subr.mxu0 0.0
        %2075 = vmatpush1.msra.mxu0 0.0
        %2076 = vmatprep.subr.mxu0 0.0
        %2077 = vmatpush1.msra.mxu0 0.0
        %2078 = vmatprep.subr.mxu0 0.0
        %2079 = vmatpush1.msra.mxu0 0.0
        %2080 = vmatprep.subr.mxu0 0.0
        %2081 = vmatpush1.msra.mxu0 0.0
        %2082 = vmatprep.subr.mxu0 0.0
        %2083 = vmatpush1.msra.mxu0 0.0
        %2084 = vmatprep.subr.mxu0 0.0
        %2085 = vmatpush1.msra.mxu0 0.0
        %2086 = vmatprep.subr.mxu0 0.0
        %2087 = vmatpush1.msra.mxu0 0.0
        %2088 = vmatprep.subr.mxu0 0.0
        %2089 = vmatpush1.msra.mxu0 0.0
        %2090 = vmatprep.subr.mxu0 0.0
        %2091 = vmatpush1.msra.mxu0 0.0
        %2092 = vmatprep.subr.mxu0 0.0
        %2093 = vmatpush1.msra.mxu0 0.0
        %2094 = vmatprep.subr.mxu0 0.0
        %2095 = vmatpush1.msra.mxu0 0.0
        %2096 = vmatprep.subr.mxu0 0.0
        %2097 = vmatpush1.msra.mxu0 0.0
        %2098 = vmatprep.subr.mxu0 0.0
        %2099 = vmatpush1.msra.mxu0 0.0
        %2100 = vmatprep.subr.mxu0 0.0
        %2101 = vmatpush1.msra.mxu0 0.0
        %2102 = vmatprep.subr.mxu0 0.0
        %2103 = vmatpush1.msra.mxu0 0.0
        %2104 = vmatprep.subr.mxu0 0.0
        %2105 = vmatpush1.msra.mxu0 0.0
        %2106 = vmatprep.subr.mxu0 0.0
        %2107 = vmatpush1.msra.mxu0 0.0
        %2108 = vmatprep.subr.mxu0 0.0
        %2109 = vmatpush1.msra.mxu0 0.0
        %2110 = vmatprep.subr.mxu0 0.0
        %2111 = vmatpush1.msra.mxu0 0.0
        %2112 = vmatprep.subr.mxu0 0.0
        %2113 = vmatpush1.msra.mxu0 0.0
        %2114 = vmatprep.subr.mxu0 0.0
        %2115 = vmatpush1.msra.mxu0 0.0
        %2116 = vmatprep.subr.mxu0 0.0
        %2117 = vmatpush1.msra.mxu0 0.0
        %2118 = vmatprep.subr.mxu0 0.0
        %2119 = vmatpush1.msra.mxu0 0.0
        %2120 = vmatprep.subr.mxu0 0.0
        %2121 = vmatpush1.msra.mxu0 0.0
        %2122 = vmatprep.subr.mxu0 0.0
        %2123 = vmatpush1.msra.mxu0 0.0
        %2124 = vmatprep.mubr.f32.mxu0 0.0
        %2125 = vmatmul.mubr.f32.gmra.mrb[0].mxu0 %v2049
        %v2126 = vpop.f32.mrb[0].mxu0
        %v2127 = vadd.f32 0.0, %v2126
        %v2128 = vpop.f32.mrb[0].mxu0
        %2129 = vmatprep.mubr.f32.mxu0 0.0
        %2130 = vmatmul.mubr.f32.gmra.mrb[0].mxu0 %v2052
        %v2131 = vpop.f32.mrb[0].mxu0
        %v2132 = vadd.f32 0.0, %v2131
        %v2133 = vpop.f32.mrb[0].mxu0
        %2134 = vmatprep.mubr.f32.mxu0 0.0
        %2135 = vmatmul.mubr.f32.gmra.mrb[0].mxu0 %v2055
        %v2136 = vpop.f32.mrb[0].mxu0
        %v2137 = vadd.f32 0.0, %v2136
        %v2138 = vpop.f32.mrb[0].mxu0
        %2139 = vmatprep.mubr.f32.mxu0 0.0
        %2140 = vmatmul.mubr.f32.gmra.mrb[0].mxu0 %v2058
        %v2141 = vpop.f32.mrb[0].mxu0
        %v2142 = vadd.f32 0.0, %v2141
        %v2143 = vpop.f32.mrb[0].mxu0
        %2144 = vdwg.mxu0
        %v2145 = vadd.f32 %v2039, %v2127
        %v2146 = vadd.f32 %v2040, %v2132
        %v2147 = vadd.f32 %v2041, %v2137
        %v2148 = vadd.f32 %v2042, %v2142
        %s2149 = scalar_lea.vmem %s4, 160
        %v2150 = vld [vmem:[%s2149] sm:$0xff]
        %v2151 = vld [vmem:[%s2149 + $0x8] sm:$0xff]
        %v2152 = vld [vmem:[%s2149 + $0x10] sm:$0xff]
        %v2153 = vld [vmem:[%s2149 + $0x18] sm:$0xff]
        %v2155 = vsel %vm695, %v1490, 0
        %v2158 = vsel %vm695, %v1495, 0
        %v2161 = vsel %vm695, %v1500, 0
        %v2164 = vsel %vm695, %v1505, 0
        %2166 = vmatprep.subr.mxu0 0.0
        %2167 = vmatpush1.msra.mxu0 %v2150
        %2168 = vmatprep.subr.mxu0 0.0
        %2169 = vmatpush1.msra.mxu0 %v2151
        %2170 = vmatprep.subr.mxu0 0.0
        %2171 = vmatpush1.msra.mxu0 %v2152
        %2172 = vmatprep.subr.mxu0 0.0
        %2173 = vmatpush1.msra.mxu0 %v2153
        %2174 = vmatprep.subr.mxu0 0.0
        %2175 = vmatpush1.msra.mxu0 0.0
        %2176 = vmatprep.subr.mxu0 0.0
        %2177 = vmatpush1.msra.mxu0 0.0
        %2178 = vmatprep.subr.mxu0 0.0
        %2179 = vmatpush1.msra.mxu0 0.0
        %2180 = vmatprep.subr.mxu0 0.0
        %2181 = vmatpush1.msra.mxu0 0.0
        %2182 = vmatprep.subr.mxu0 0.0
        %2183 = vmatpush1.msra.mxu0 0.0
        %2184 = vmatprep.subr.mxu0 0.0
        %2185 = vmatpush1.msra.mxu0 0.0
        %2186 = vmatprep.subr.mxu0 0.0
        %2187 = vmatpush1.msra.mxu0 0.0
        %2188 = vmatprep.subr.mxu0 0.0
        %2189 = vmatpush1.msra.mxu0 0.0
        %2190 = vmatprep.subr.mxu0 0.0
        %2191 = vmatpush1.msra.mxu0 0.0
        %2192 = vmatprep.subr.mxu0 0.0
        %2193 = vmatpush1.msra.mxu0 0.0
        %2194 = vmatprep.subr.mxu0 0.0
        %2195 = vmatpush1.msra.mxu0 0.0
        %2196 = vmatprep.subr.mxu0 0.0
        %2197 = vmatpush1.msra.mxu0 0.0
        %2198 = vmatprep.subr.mxu0 0.0
        %2199 = vmatpush1.msra.mxu0 0.0
        %2200 = vmatprep.subr.mxu0 0.0
        %2201 = vmatpush1.msra.mxu0 0.0
        %2202 = vmatprep.subr.mxu0 0.0
        %2203 = vmatpush1.msra.mxu0 0.0
        %2204 = vmatprep.subr.mxu0 0.0
        %2205 = vmatpush1.msra.mxu0 0.0
        %2206 = vmatprep.subr.mxu0 0.0
        %2207 = vmatpush1.msra.mxu0 0.0
        %2208 = vmatprep.subr.mxu0 0.0
        %2209 = vmatpush1.msra.mxu0 0.0
        %2210 = vmatprep.subr.mxu0 0.0
        %2211 = vmatpush1.msra.mxu0 0.0
        %2212 = vmatprep.subr.mxu0 0.0
        %2213 = vmatpush1.msra.mxu0 0.0
        %2214 = vmatprep.subr.mxu0 0.0
        %2215 = vmatpush1.msra.mxu0 0.0
        %2216 = vmatprep.subr.mxu0 0.0
        %2217 = vmatpush1.msra.mxu0 0.0
        %2218 = vmatprep.subr.mxu0 0.0
        %2219 = vmatpush1.msra.mxu0 0.0
        %2220 = vmatprep.subr.mxu0 0.0
        %2221 = vmatpush1.msra.mxu0 0.0
        %2222 = vmatprep.subr.mxu0 0.0
        %2223 = vmatpush1.msra.mxu0 0.0
        %2224 = vmatprep.subr.mxu0 0.0
        %2225 = vmatpush1.msra.mxu0 0.0
        %2226 = vmatprep.subr.mxu0 0.0
        %2227 = vmatpush1.msra.mxu0 0.0
        %2228 = vmatprep.subr.mxu0 0.0
        %2229 = vmatpush1.msra.mxu0 0.0
        %2230 = vmatprep.mubr.f32.mxu0 0.0
        %2231 = vmatmul.mubr.f32.gmra.mrb[0].mxu0 %v2155
        %v2232 = vpop.f32.mrb[0].mxu0
        %v2233 = vadd.f32 0.0, %v2232
        %v2234 = vpop.f32.mrb[0].mxu0
        %2235 = vmatprep.mubr.f32.mxu0 0.0
        %2236 = vmatmul.mubr.f32.gmra.mrb[0].mxu0 %v2158
        %v2237 = vpop.f32.mrb[0].mxu0
        %v2238 = vadd.f32 0.0, %v2237
        %v2239 = vpop.f32.mrb[0].mxu0
        %2240 = vmatprep.mubr.f32.mxu0 0.0
        %2241 = vmatmul.mubr.f32.gmra.mrb[0].mxu0 %v2161
        %v2242 = vpop.f32.mrb[0].mxu0
        %v2243 = vadd.f32 0.0, %v2242
        %v2244 = vpop.f32.mrb[0].mxu0
        %2245 = vmatprep.mubr.f32.mxu0 0.0
        %2246 = vmatmul.mubr.f32.gmra.mrb[0].mxu0 %v2164
        %v2247 = vpop.f32.mrb[0].mxu0
        %v2248 = vadd.f32 0.0, %v2247
        %v2249 = vpop.f32.mrb[0].mxu0
        %2250 = vdwg.mxu0
        %v2251 = vadd.f32 %v2145, %v2233
        %v2252 = vadd.f32 %v2146, %v2238
        %v2253 = vadd.f32 %v2147, %v2243
        %v2254 = vadd.f32 %v2148, %v2248
        %s2255 = scalar_lea.vmem %s4, 192
        %v2256 = vld [vmem:[%s2255] sm:$0xff]
        %v2257 = vld [vmem:[%s2255 + $0x8] sm:$0xff]
        %v2258 = vld [vmem:[%s2255 + $0x10] sm:$0xff]
        %v2259 = vld [vmem:[%s2255 + $0x18] sm:$0xff]
        %v2261 = vsel %vm695, %v1510, 0
        %v2264 = vsel %vm695, %v1515, 0
        %v2267 = vsel %vm695, %v1520, 0
        %v2270 = vsel %vm695, %v1525, 0
        %2272 = vmatprep.subr.mxu0 0.0
        %2273 = vmatpush1.msra.mxu0 %v2256
        %2274 = vmatprep.subr.mxu0 0.0
        %2275 = vmatpush1.msra.mxu0 %v2257
        %2276 = vmatprep.subr.mxu0 0.0
        %2277 = vmatpush1.msra.mxu0 %v2258
        %2278 = vmatprep.subr.mxu0 0.0
        %2279 = vmatpush1.msra.mxu0 %v2259
        %2280 = vmatprep.subr.mxu0 0.0
        %2281 = vmatpush1.msra.mxu0 0.0
        %2282 = vmatprep.subr.mxu0 0.0
        %2283 = vmatpush1.msra.mxu0 0.0
        %2284 = vmatprep.subr.mxu0 0.0
        %2285 = vmatpush1.msra.mxu0 0.0
        %2286 = vmatprep.subr.mxu0 0.0
        %2287 = vmatpush1.msra.mxu0 0.0
        %2288 = vmatprep.subr.mxu0 0.0
        %2289 = vmatpush1.msra.mxu0 0.0
        %2290 = vmatprep.subr.mxu0 0.0
        %2291 = vmatpush1.msra.mxu0 0.0
        %2292 = vmatprep.subr.mxu0 0.0
        %2293 = vmatpush1.msra.mxu0 0.0
        %2294 = vmatprep.subr.mxu0 0.0
        %2295 = vmatpush1.msra.mxu0 0.0
        %2296 = vmatprep.subr.mxu0 0.0
        %2297 = vmatpush1.msra.mxu0 0.0
        %2298 = vmatprep.subr.mxu0 0.0
        %2299 = vmatpush1.msra.mxu0 0.0
        %2300 = vmatprep.subr.mxu0 0.0
        %2301 = vmatpush1.msra.mxu0 0.0
        %2302 = vmatprep.subr.mxu0 0.0
        %2303 = vmatpush1.msra.mxu0 0.0
        %2304 = vmatprep.subr.mxu0 0.0
        %2305 = vmatpush1.msra.mxu0 0.0
        %2306 = vmatprep.subr.mxu0 0.0
        %2307 = vmatpush1.msra.mxu0 0.0
        %2308 = vmatprep.subr.mxu0 0.0
        %2309 = vmatpush1.msra.mxu0 0.0
        %2310 = vmatprep.subr.mxu0 0.0
        %2311 = vmatpush1.msra.mxu0 0.0
        %2312 = vmatprep.subr.mxu0 0.0
        %2313 = vmatpush1.msra.mxu0 0.0
        %2314 = vmatprep.subr.mxu0 0.0
        %2315 = vmatpush1.msra.mxu0 0.0
        %2316 = vmatprep.subr.mxu0 0.0
        %2317 = vmatpush1.msra.mxu0 0.0
        %2318 = vmatprep.subr.mxu0 0.0
        %2319 = vmatpush1.msra.mxu0 0.0
        %2320 = vmatprep.subr.mxu0 0.0
        %2321 = vmatpush1.msra.mxu0 0.0
        %2322 = vmatprep.subr.mxu0 0.0
        %2323 = vmatpush1.msra.mxu0 0.0
        %2324 = vmatprep.subr.mxu0 0.0
        %2325 = vmatpush1.msra.mxu0 0.0
        %2326 = vmatprep.subr.mxu0 0.0
        %2327 = vmatpush1.msra.mxu0 0.0
        %2328 = vmatprep.subr.mxu0 0.0
        %2329 = vmatpush1.msra.mxu0 0.0
        %2330 = vmatprep.subr.mxu0 0.0
        %2331 = vmatpush1.msra.mxu0 0.0
        %2332 = vmatprep.subr.mxu0 0.0
        %2333 = vmatpush1.msra.mxu0 0.0
        %2334 = vmatprep.subr.mxu0 0.0
        %2335 = vmatpush1.msra.mxu0 0.0
        %2336 = vmatprep.mubr.f32.mxu0 0.0
        %2337 = vmatmul.mubr.f32.gmra.mrb[0].mxu0 %v2261
        %v2338 = vpop.f32.mrb[0].mxu0
        %v2339 = vadd.f32 0.0, %v2338
        %v2340 = vpop.f32.mrb[0].mxu0
        %2341 = vmatprep.mubr.f32.mxu0 0.0
        %2342 = vmatmul.mubr.f32.gmra.mrb[0].mxu0 %v2264
        %v2343 = vpop.f32.mrb[0].mxu0
        %v2344 = vadd.f32 0.0, %v2343
        %v2345 = vpop.f32.mrb[0].mxu0
        %2346 = vmatprep.mubr.f32.mxu0 0.0
        %2347 = vmatmul.mubr.f32.gmra.mrb[0].mxu0 %v2267
        %v2348 = vpop.f32.mrb[0].mxu0
        %v2349 = vadd.f32 0.0, %v2348
        %v2350 = vpop.f32.mrb[0].mxu0
        %2351 = vmatprep.mubr.f32.mxu0 0.0
        %2352 = vmatmul.mubr.f32.gmra.mrb[0].mxu0 %v2270
        %v2353 = vpop.f32.mrb[0].mxu0
        %v2354 = vadd.f32 0.0, %v2353
        %v2355 = vpop.f32.mrb[0].mxu0
        %2356 = vdwg.mxu0
        %v2357 = vadd.f32 %v2251, %v2339
        %v2358 = vadd.f32 %v2252, %v2344
        %v2359 = vadd.f32 %v2253, %v2349
        %v2360 = vadd.f32 %v2254, %v2354
        %s2361 = scalar_lea.vmem %s4, 224
        %v2362 = vld [vmem:[%s2361] sm:$0xff]
        %v2363 = vld [vmem:[%s2361 + $0x8] sm:$0xff]
        %v2364 = vld [vmem:[%s2361 + $0x10] sm:$0xff]
        %v2365 = vld [vmem:[%s2361 + $0x18] sm:$0xff]
        %v2367 = vsel %vm695, %v1530, 0
        %v2370 = vsel %vm695, %v1535, 0
        %v2373 = vsel %vm695, %v1540, 0
        %v2376 = vsel %vm695, %v1545, 0
        %2378 = vmatprep.subr.mxu0 0.0
        %2379 = vmatpush1.msra.mxu0 %v2362
        %2380 = vmatprep.subr.mxu0 0.0
        %2381 = vmatpush1.msra.mxu0 %v2363
        %2382 = vmatprep.subr.mxu0 0.0
        %2383 = vmatpush1.msra.mxu0 %v2364
        %2384 = vmatprep.subr.mxu0 0.0
        %2385 = vmatpush1.msra.mxu0 %v2365
        %2386 = vmatprep.subr.mxu0 0.0
        %2387 = vmatpush1.msra.mxu0 0.0
        %2388 = vmatprep.subr.mxu0 0.0
        %2389 = vmatpush1.msra.mxu0 0.0
        %2390 = vmatprep.subr.mxu0 0.0
        %2391 = vmatpush1.msra.mxu0 0.0
        %2392 = vmatprep.subr.mxu0 0.0
        %2393 = vmatpush1.msra.mxu0 0.0
        %2394 = vmatprep.subr.mxu0 0.0
        %2395 = vmatpush1.msra.mxu0 0.0
        %2396 = vmatprep.subr.mxu0 0.0
        %2397 = vmatpush1.msra.mxu0 0.0
        %2398 = vmatprep.subr.mxu0 0.0
        %2399 = vmatpush1.msra.mxu0 0.0
        %2400 = vmatprep.subr.mxu0 0.0
        %2401 = vmatpush1.msra.mxu0 0.0
        %2402 = vmatprep.subr.mxu0 0.0
        %2403 = vmatpush1.msra.mxu0 0.0
        %2404 = vmatprep.subr.mxu0 0.0
        %2405 = vmatpush1.msra.mxu0 0.0
        %2406 = vmatprep.subr.mxu0 0.0
        %2407 = vmatpush1.msra.mxu0 0.0
        %2408 = vmatprep.subr.mxu0 0.0
        %2409 = vmatpush1.msra.mxu0 0.0
        %2410 = vmatprep.subr.mxu0 0.0
        %2411 = vmatpush1.msra.mxu0 0.0
        %2412 = vmatprep.subr.mxu0 0.0
        %2413 = vmatpush1.msra.mxu0 0.0
        %2414 = vmatprep.subr.mxu0 0.0
        %2415 = vmatpush1.msra.mxu0 0.0
        %2416 = vmatprep.subr.mxu0 0.0
        %2417 = vmatpush1.msra.mxu0 0.0
        %2418 = vmatprep.subr.mxu0 0.0
        %2419 = vmatpush1.msra.mxu0 0.0
        %2420 = vmatprep.subr.mxu0 0.0
        %2421 = vmatpush1.msra.mxu0 0.0
        %2422 = vmatprep.subr.mxu0 0.0
        %2423 = vmatpush1.msra.mxu0 0.0
        %2424 = vmatprep.subr.mxu0 0.0
        %2425 = vmatpush1.msra.mxu0 0.0
        %2426 = vmatprep.subr.mxu0 0.0
        %2427 = vmatpush1.msra.mxu0 0.0
        %2428 = vmatprep.subr.mxu0 0.0
        %2429 = vmatpush1.msra.mxu0 0.0
        %2430 = vmatprep.subr.mxu0 0.0
        %2431 = vmatpush1.msra.mxu0 0.0
        %2432 = vmatprep.subr.mxu0 0.0
        %2433 = vmatpush1.msra.mxu0 0.0
        %2434 = vmatprep.subr.mxu0 0.0
        %2435 = vmatpush1.msra.mxu0 0.0
        %2436 = vmatprep.subr.mxu0 0.0
        %2437 = vmatpush1.msra.mxu0 0.0
        %2438 = vmatprep.subr.mxu0 0.0
        %2439 = vmatpush1.msra.mxu0 0.0
        %2440 = vmatprep.subr.mxu0 0.0
        %2441 = vmatpush1.msra.mxu0 0.0
        %2442 = vmatprep.mubr.f32.mxu0 0.0
        %2443 = vmatmul.mubr.f32.gmra.mrb[0].mxu0 %v2367
        %v2444 = vpop.f32.mrb[0].mxu0
        %v2445 = vadd.f32 0.0, %v2444
        %v2446 = vpop.f32.mrb[0].mxu0
        %2447 = vmatprep.mubr.f32.mxu0 0.0
        %2448 = vmatmul.mubr.f32.gmra.mrb[0].mxu0 %v2370
        %v2449 = vpop.f32.mrb[0].mxu0
        %v2450 = vadd.f32 0.0, %v2449
        %v2451 = vpop.f32.mrb[0].mxu0
        %2452 = vmatprep.mubr.f32.mxu0 0.0
        %2453 = vmatmul.mubr.f32.gmra.mrb[0].mxu0 %v2373
        %v2454 = vpop.f32.mrb[0].mxu0
        %v2455 = vadd.f32 0.0, %v2454
        %v2456 = vpop.f32.mrb[0].mxu0
        %2457 = vmatprep.mubr.f32.mxu0 0.0
        %2458 = vmatmul.mubr.f32.gmra.mrb[0].mxu0 %v2376
        %v2459 = vpop.f32.mrb[0].mxu0
        %v2460 = vadd.f32 0.0, %v2459
        %v2461 = vpop.f32.mrb[0].mxu0
        %2462 = vdwg.mxu0
        %v2463 = vadd.f32 %v2357, %v2445
        %v2464 = vadd.f32 %v2358, %v2450
        %v2465 = vadd.f32 %v2359, %v2455
        %v2466 = vadd.f32 %v2360, %v2460
        %s2467 = scalar_lea.vmem %s4, 256
        %v2468 = vld [vmem:[%s2467] sm:$0xff]
        %v2469 = vld [vmem:[%s2467 + $0x8] sm:$0xff]
        %v2470 = vld [vmem:[%s2467 + $0x10] sm:$0xff]
        %v2471 = vld [vmem:[%s2467 + $0x18] sm:$0xff]
        %v2473 = vsel %vm695, %v1550, 0
        %v2476 = vsel %vm695, %v1555, 0
        %v2479 = vsel %vm695, %v1560, 0
        %v2482 = vsel %vm695, %v1565, 0
        %2484 = vmatprep.subr.mxu0 0.0
        %2485 = vmatpush1.msra.mxu0 %v2468
        %2486 = vmatprep.subr.mxu0 0.0
        %2487 = vmatpush1.msra.mxu0 %v2469
        %2488 = vmatprep.subr.mxu0 0.0
        %2489 = vmatpush1.msra.mxu0 %v2470
        %2490 = vmatprep.subr.mxu0 0.0
        %2491 = vmatpush1.msra.mxu0 %v2471
        %2492 = vmatprep.subr.mxu0 0.0
        %2493 = vmatpush1.msra.mxu0 0.0
        %2494 = vmatprep.subr.mxu0 0.0
        %2495 = vmatpush1.msra.mxu0 0.0
        %2496 = vmatprep.subr.mxu0 0.0
        %2497 = vmatpush1.msra.mxu0 0.0
        %2498 = vmatprep.subr.mxu0 0.0
        %2499 = vmatpush1.msra.mxu0 0.0
        %2500 = vmatprep.subr.mxu0 0.0
        %2501 = vmatpush1.msra.mxu0 0.0
        %2502 = vmatprep.subr.mxu0 0.0
        %2503 = vmatpush1.msra.mxu0 0.0
        %2504 = vmatprep.subr.mxu0 0.0
        %2505 = vmatpush1.msra.mxu0 0.0
        %2506 = vmatprep.subr.mxu0 0.0
        %2507 = vmatpush1.msra.mxu0 0.0
        %2508 = vmatprep.subr.mxu0 0.0
        %2509 = vmatpush1.msra.mxu0 0.0
        %2510 = vmatprep.subr.mxu0 0.0
        %2511 = vmatpush1.msra.mxu0 0.0
        %2512 = vmatprep.subr.mxu0 0.0
        %2513 = vmatpush1.msra.mxu0 0.0
        %2514 = vmatprep.subr.mxu0 0.0
        %2515 = vmatpush1.msra.mxu0 0.0
        %2516 = vmatprep.subr.mxu0 0.0
        %2517 = vmatpush1.msra.mxu0 0.0
        %2518 = vmatprep.subr.mxu0 0.0
        %2519 = vmatpush1.msra.mxu0 0.0
        %2520 = vmatprep.subr.mxu0 0.0
        %2521 = vmatpush1.msra.mxu0 0.0
        %2522 = vmatprep.subr.mxu0 0.0
        %2523 = vmatpush1.msra.mxu0 0.0
        %2524 = vmatprep.subr.mxu0 0.0
        %2525 = vmatpush1.msra.mxu0 0.0
        %2526 = vmatprep.subr.mxu0 0.0
        %2527 = vmatpush1.msra.mxu0 0.0
        %2528 = vmatprep.subr.mxu0 0.0
        %2529 = vmatpush1.msra.mxu0 0.0
        %2530 = vmatprep.subr.mxu0 0.0
        %2531 = vmatpush1.msra.mxu0 0.0
        %2532 = vmatprep.subr.mxu0 0.0
        %2533 = vmatpush1.msra.mxu0 0.0
        %2534 = vmatprep.subr.mxu0 0.0
        %2535 = vmatpush1.msra.mxu0 0.0
        %2536 = vmatprep.subr.mxu0 0.0
        %2537 = vmatpush1.msra.mxu0 0.0
        %2538 = vmatprep.subr.mxu0 0.0
        %2539 = vmatpush1.msra.mxu0 0.0
        %2540 = vmatprep.subr.mxu0 0.0
        %2541 = vmatpush1.msra.mxu0 0.0
        %2542 = vmatprep.subr.mxu0 0.0
        %2543 = vmatpush1.msra.mxu0 0.0
        %2544 = vmatprep.subr.mxu0 0.0
        %2545 = vmatpush1.msra.mxu0 0.0
        %2546 = vmatprep.subr.mxu0 0.0
        %2547 = vmatpush1.msra.mxu0 0.0
        %2548 = vmatprep.mubr.f32.mxu0 0.0
        %2549 = vmatmul.mubr.f32.gmra.mrb[0].mxu0 %v2473
        %v2550 = vpop.f32.mrb[0].mxu0
        %v2551 = vadd.f32 0.0, %v2550
        %v2552 = vpop.f32.mrb[0].mxu0
        %2553 = vmatprep.mubr.f32.mxu0 0.0
        %2554 = vmatmul.mubr.f32.gmra.mrb[0].mxu0 %v2476
        %v2555 = vpop.f32.mrb[0].mxu0
        %v2556 = vadd.f32 0.0, %v2555
        %v2557 = vpop.f32.mrb[0].mxu0
        %2558 = vmatprep.mubr.f32.mxu0 0.0
        %2559 = vmatmul.mubr.f32.gmra.mrb[0].mxu0 %v2479
        %v2560 = vpop.f32.mrb[0].mxu0
        %v2561 = vadd.f32 0.0, %v2560
        %v2562 = vpop.f32.mrb[0].mxu0
        %2563 = vmatprep.mubr.f32.mxu0 0.0
        %2564 = vmatmul.mubr.f32.gmra.mrb[0].mxu0 %v2482
        %v2565 = vpop.f32.mrb[0].mxu0
        %v2566 = vadd.f32 0.0, %v2565
        %v2567 = vpop.f32.mrb[0].mxu0
        %2568 = vdwg.mxu0
        %v2569 = vadd.f32 %v2463, %v2551
        %v2570 = vadd.f32 %v2464, %v2556
        %v2571 = vadd.f32 %v2465, %v2561
        %v2572 = vadd.f32 %v2466, %v2566
        %s2573 = scalar_lea.vmem %s4, 288
        %v2574 = vld [vmem:[%s2573] sm:$0xff]
        %v2575 = vld [vmem:[%s2573 + $0x8] sm:$0xff]
        %v2576 = vld [vmem:[%s2573 + $0x10] sm:$0xff]
        %v2577 = vld [vmem:[%s2573 + $0x18] sm:$0xff]
        %v2579 = vsel %vm695, %v1570, 0
        %v2582 = vsel %vm695, %v1575, 0
        %v2585 = vsel %vm695, %v1580, 0
        %v2588 = vsel %vm695, %v1585, 0
        %2590 = vmatprep.subr.mxu0 0.0
        %2591 = vmatpush1.msra.mxu0 %v2574
        %2592 = vmatprep.subr.mxu0 0.0
        %2593 = vmatpush1.msra.mxu0 %v2575
        %2594 = vmatprep.subr.mxu0 0.0
        %2595 = vmatpush1.msra.mxu0 %v2576
        %2596 = vmatprep.subr.mxu0 0.0
        %2597 = vmatpush1.msra.mxu0 %v2577
        %2598 = vmatprep.subr.mxu0 0.0
        %2599 = vmatpush1.msra.mxu0 0.0
        %2600 = vmatprep.subr.mxu0 0.0
        %2601 = vmatpush1.msra.mxu0 0.0
        %2602 = vmatprep.subr.mxu0 0.0
        %2603 = vmatpush1.msra.mxu0 0.0
        %2604 = vmatprep.subr.mxu0 0.0
        %2605 = vmatpush1.msra.mxu0 0.0
        %2606 = vmatprep.subr.mxu0 0.0
        %2607 = vmatpush1.msra.mxu0 0.0
        %2608 = vmatprep.subr.mxu0 0.0
        %2609 = vmatpush1.msra.mxu0 0.0
        %2610 = vmatprep.subr.mxu0 0.0
        %2611 = vmatpush1.msra.mxu0 0.0
        %2612 = vmatprep.subr.mxu0 0.0
        %2613 = vmatpush1.msra.mxu0 0.0
        %2614 = vmatprep.subr.mxu0 0.0
        %2615 = vmatpush1.msra.mxu0 0.0
        %2616 = vmatprep.subr.mxu0 0.0
        %2617 = vmatpush1.msra.mxu0 0.0
        %2618 = vmatprep.subr.mxu0 0.0
        %2619 = vmatpush1.msra.mxu0 0.0
        %2620 = vmatprep.subr.mxu0 0.0
        %2621 = vmatpush1.msra.mxu0 0.0
        %2622 = vmatprep.subr.mxu0 0.0
        %2623 = vmatpush1.msra.mxu0 0.0
        %2624 = vmatprep.subr.mxu0 0.0
        %2625 = vmatpush1.msra.mxu0 0.0
        %2626 = vmatprep.subr.mxu0 0.0
        %2627 = vmatpush1.msra.mxu0 0.0
        %2628 = vmatprep.subr.mxu0 0.0
        %2629 = vmatpush1.msra.mxu0 0.0
        %2630 = vmatprep.subr.mxu0 0.0
        %2631 = vmatpush1.msra.mxu0 0.0
        %2632 = vmatprep.subr.mxu0 0.0
        %2633 = vmatpush1.msra.mxu0 0.0
        %2634 = vmatprep.subr.mxu0 0.0
        %2635 = vmatpush1.msra.mxu0 0.0
        %2636 = vmatprep.subr.mxu0 0.0
        %2637 = vmatpush1.msra.mxu0 0.0
        %2638 = vmatprep.subr.mxu0 0.0
        %2639 = vmatpush1.msra.mxu0 0.0
        %2640 = vmatprep.subr.mxu0 0.0
        %2641 = vmatpush1.msra.mxu0 0.0
        %2642 = vmatprep.subr.mxu0 0.0
        %2643 = vmatpush1.msra.mxu0 0.0
        %2644 = vmatprep.subr.mxu0 0.0
        %2645 = vmatpush1.msra.mxu0 0.0
        %2646 = vmatprep.subr.mxu0 0.0
        %2647 = vmatpush1.msra.mxu0 0.0
        %2648 = vmatprep.subr.mxu0 0.0
        %2649 = vmatpush1.msra.mxu0 0.0
        %2650 = vmatprep.subr.mxu0 0.0
        %2651 = vmatpush1.msra.mxu0 0.0
        %2652 = vmatprep.subr.mxu0 0.0
        %2653 = vmatpush1.msra.mxu0 0.0
        %2654 = vmatprep.mubr.f32.mxu0 0.0
        %2655 = vmatmul.mubr.f32.gmra.mrb[0].mxu0 %v2579
        %v2656 = vpop.f32.mrb[0].mxu0
        %v2657 = vadd.f32 0.0, %v2656
        %v2658 = vpop.f32.mrb[0].mxu0
        %2659 = vmatprep.mubr.f32.mxu0 0.0
        %2660 = vmatmul.mubr.f32.gmra.mrb[0].mxu0 %v2582
        %v2661 = vpop.f32.mrb[0].mxu0
        %v2662 = vadd.f32 0.0, %v2661
        %v2663 = vpop.f32.mrb[0].mxu0
        %2664 = vmatprep.mubr.f32.mxu0 0.0
        %2665 = vmatmul.mubr.f32.gmra.mrb[0].mxu0 %v2585
        %v2666 = vpop.f32.mrb[0].mxu0
        %v2667 = vadd.f32 0.0, %v2666
        %v2668 = vpop.f32.mrb[0].mxu0
        %2669 = vmatprep.mubr.f32.mxu0 0.0
        %2670 = vmatmul.mubr.f32.gmra.mrb[0].mxu0 %v2588
        %v2671 = vpop.f32.mrb[0].mxu0
        %v2672 = vadd.f32 0.0, %v2671
        %v2673 = vpop.f32.mrb[0].mxu0
        %2674 = vdwg.mxu0
        %v2675 = vadd.f32 %v2569, %v2657
        %v2676 = vadd.f32 %v2570, %v2662
        %v2677 = vadd.f32 %v2571, %v2667
        %v2678 = vadd.f32 %v2572, %v2672
        %s2679 = scalar_lea.vmem %s4, 320
        %v2680 = vld [vmem:[%s2679] sm:$0xff]
        %v2681 = vld [vmem:[%s2679 + $0x8] sm:$0xff]
        %v2682 = vld [vmem:[%s2679 + $0x10] sm:$0xff]
        %v2683 = vld [vmem:[%s2679 + $0x18] sm:$0xff]
        %v2685 = vsel %vm695, %v1590, 0
        %v2688 = vsel %vm695, %v1595, 0
        %v2691 = vsel %vm695, %v1600, 0
        %v2694 = vsel %vm695, %v1605, 0
        %2696 = vmatprep.subr.mxu0 0.0
        %2697 = vmatpush1.msra.mxu0 %v2680
        %2698 = vmatprep.subr.mxu0 0.0
        %2699 = vmatpush1.msra.mxu0 %v2681
        %2700 = vmatprep.subr.mxu0 0.0
        %2701 = vmatpush1.msra.mxu0 %v2682
        %2702 = vmatprep.subr.mxu0 0.0
        %2703 = vmatpush1.msra.mxu0 %v2683
        %2704 = vmatprep.subr.mxu0 0.0
        %2705 = vmatpush1.msra.mxu0 0.0
        %2706 = vmatprep.subr.mxu0 0.0
        %2707 = vmatpush1.msra.mxu0 0.0
        %2708 = vmatprep.subr.mxu0 0.0
        %2709 = vmatpush1.msra.mxu0 0.0
        %2710 = vmatprep.subr.mxu0 0.0
        %2711 = vmatpush1.msra.mxu0 0.0
        %2712 = vmatprep.subr.mxu0 0.0
        %2713 = vmatpush1.msra.mxu0 0.0
        %2714 = vmatprep.subr.mxu0 0.0
        %2715 = vmatpush1.msra.mxu0 0.0
        %2716 = vmatprep.subr.mxu0 0.0
        %2717 = vmatpush1.msra.mxu0 0.0
        %2718 = vmatprep.subr.mxu0 0.0
        %2719 = vmatpush1.msra.mxu0 0.0
        %2720 = vmatprep.subr.mxu0 0.0
        %2721 = vmatpush1.msra.mxu0 0.0
        %2722 = vmatprep.subr.mxu0 0.0
        %2723 = vmatpush1.msra.mxu0 0.0
        %2724 = vmatprep.subr.mxu0 0.0
        %2725 = vmatpush1.msra.mxu0 0.0
        %2726 = vmatprep.subr.mxu0 0.0
        %2727 = vmatpush1.msra.mxu0 0.0
        %2728 = vmatprep.subr.mxu0 0.0
        %2729 = vmatpush1.msra.mxu0 0.0
        %2730 = vmatprep.subr.mxu0 0.0
        %2731 = vmatpush1.msra.mxu0 0.0
        %2732 = vmatprep.subr.mxu0 0.0
        %2733 = vmatpush1.msra.mxu0 0.0
        %2734 = vmatprep.subr.mxu0 0.0
        %2735 = vmatpush1.msra.mxu0 0.0
        %2736 = vmatprep.subr.mxu0 0.0
        %2737 = vmatpush1.msra.mxu0 0.0
        %2738 = vmatprep.subr.mxu0 0.0
        %2739 = vmatpush1.msra.mxu0 0.0
        %2740 = vmatprep.subr.mxu0 0.0
        %2741 = vmatpush1.msra.mxu0 0.0
        %2742 = vmatprep.subr.mxu0 0.0
        %2743 = vmatpush1.msra.mxu0 0.0
        %2744 = vmatprep.subr.mxu0 0.0
        %2745 = vmatpush1.msra.mxu0 0.0
        %2746 = vmatprep.subr.mxu0 0.0
        %2747 = vmatpush1.msra.mxu0 0.0
        %2748 = vmatprep.subr.mxu0 0.0
        %2749 = vmatpush1.msra.mxu0 0.0
        %2750 = vmatprep.subr.mxu0 0.0
        %2751 = vmatpush1.msra.mxu0 0.0
        %2752 = vmatprep.subr.mxu0 0.0
        %2753 = vmatpush1.msra.mxu0 0.0
        %2754 = vmatprep.subr.mxu0 0.0
        %2755 = vmatpush1.msra.mxu0 0.0
        %2756 = vmatprep.subr.mxu0 0.0
        %2757 = vmatpush1.msra.mxu0 0.0
        %2758 = vmatprep.subr.mxu0 0.0
        %2759 = vmatpush1.msra.mxu0 0.0
        %2760 = vmatprep.mubr.f32.mxu0 0.0
        %2761 = vmatmul.mubr.f32.gmra.mrb[0].mxu0 %v2685
        %v2762 = vpop.f32.mrb[0].mxu0
        %v2763 = vadd.f32 0.0, %v2762
        %v2764 = vpop.f32.mrb[0].mxu0
        %2765 = vmatprep.mubr.f32.mxu0 0.0
        %2766 = vmatmul.mubr.f32.gmra.mrb[0].mxu0 %v2688
        %v2767 = vpop.f32.mrb[0].mxu0
        %v2768 = vadd.f32 0.0, %v2767
        %v2769 = vpop.f32.mrb[0].mxu0
        %2770 = vmatprep.mubr.f32.mxu0 0.0
        %2771 = vmatmul.mubr.f32.gmra.mrb[0].mxu0 %v2691
        %v2772 = vpop.f32.mrb[0].mxu0
        %v2773 = vadd.f32 0.0, %v2772
        %v2774 = vpop.f32.mrb[0].mxu0
        %2775 = vmatprep.mubr.f32.mxu0 0.0
        %2776 = vmatmul.mubr.f32.gmra.mrb[0].mxu0 %v2694
        %v2777 = vpop.f32.mrb[0].mxu0
        %v2778 = vadd.f32 0.0, %v2777
        %v2779 = vpop.f32.mrb[0].mxu0
        %2780 = vdwg.mxu0
        %v2781 = vadd.f32 %v2675, %v2763
        %v2782 = vadd.f32 %v2676, %v2768
        %v2783 = vadd.f32 %v2677, %v2773
        %v2784 = vadd.f32 %v2678, %v2778
        %s2785 = scalar_lea.vmem %s4, 352
        %v2786 = vld [vmem:[%s2785] sm:$0xff]
        %v2787 = vld [vmem:[%s2785 + $0x8] sm:$0xff]
        %v2788 = vld [vmem:[%s2785 + $0x10] sm:$0xff]
        %v2789 = vld [vmem:[%s2785 + $0x18] sm:$0xff]
        %v2791 = vsel %vm695, %v1610, 0
        %v2794 = vsel %vm695, %v1615, 0
        %v2797 = vsel %vm695, %v1620, 0
        %v2800 = vsel %vm695, %v1625, 0
        %2802 = vmatprep.subr.mxu0 0.0
        %2803 = vmatpush1.msra.mxu0 %v2786
        %2804 = vmatprep.subr.mxu0 0.0
        %2805 = vmatpush1.msra.mxu0 %v2787
        %2806 = vmatprep.subr.mxu0 0.0
        %2807 = vmatpush1.msra.mxu0 %v2788
        %2808 = vmatprep.subr.mxu0 0.0
        %2809 = vmatpush1.msra.mxu0 %v2789
        %2810 = vmatprep.subr.mxu0 0.0
        %2811 = vmatpush1.msra.mxu0 0.0
        %2812 = vmatprep.subr.mxu0 0.0
        %2813 = vmatpush1.msra.mxu0 0.0
        %2814 = vmatprep.subr.mxu0 0.0
        %2815 = vmatpush1.msra.mxu0 0.0
        %2816 = vmatprep.subr.mxu0 0.0
        %2817 = vmatpush1.msra.mxu0 0.0
        %2818 = vmatprep.subr.mxu0 0.0
        %2819 = vmatpush1.msra.mxu0 0.0
        %2820 = vmatprep.subr.mxu0 0.0
        %2821 = vmatpush1.msra.mxu0 0.0
        %2822 = vmatprep.subr.mxu0 0.0
        %2823 = vmatpush1.msra.mxu0 0.0
        %2824 = vmatprep.subr.mxu0 0.0
        %2825 = vmatpush1.msra.mxu0 0.0
        %2826 = vmatprep.subr.mxu0 0.0
        %2827 = vmatpush1.msra.mxu0 0.0
        %2828 = vmatprep.subr.mxu0 0.0
        %2829 = vmatpush1.msra.mxu0 0.0
        %2830 = vmatprep.subr.mxu0 0.0
        %2831 = vmatpush1.msra.mxu0 0.0
        %2832 = vmatprep.subr.mxu0 0.0
        %2833 = vmatpush1.msra.mxu0 0.0
        %2834 = vmatprep.subr.mxu0 0.0
        %2835 = vmatpush1.msra.mxu0 0.0
        %2836 = vmatprep.subr.mxu0 0.0
        %2837 = vmatpush1.msra.mxu0 0.0
        %2838 = vmatprep.subr.mxu0 0.0
        %2839 = vmatpush1.msra.mxu0 0.0
        %2840 = vmatprep.subr.mxu0 0.0
        %2841 = vmatpush1.msra.mxu0 0.0
        %2842 = vmatprep.subr.mxu0 0.0
        %2843 = vmatpush1.msra.mxu0 0.0
        %2844 = vmatprep.subr.mxu0 0.0
        %2845 = vmatpush1.msra.mxu0 0.0
        %2846 = vmatprep.subr.mxu0 0.0
        %2847 = vmatpush1.msra.mxu0 0.0
        %2848 = vmatprep.subr.mxu0 0.0
        %2849 = vmatpush1.msra.mxu0 0.0
        %2850 = vmatprep.subr.mxu0 0.0
        %2851 = vmatpush1.msra.mxu0 0.0
        %2852 = vmatprep.subr.mxu0 0.0
        %2853 = vmatpush1.msra.mxu0 0.0
        %2854 = vmatprep.subr.mxu0 0.0
        %2855 = vmatpush1.msra.mxu0 0.0
        %2856 = vmatprep.subr.mxu0 0.0
        %2857 = vmatpush1.msra.mxu0 0.0
        %2858 = vmatprep.subr.mxu0 0.0
        %2859 = vmatpush1.msra.mxu0 0.0
        %2860 = vmatprep.subr.mxu0 0.0
        %2861 = vmatpush1.msra.mxu0 0.0
        %2862 = vmatprep.subr.mxu0 0.0
        %2863 = vmatpush1.msra.mxu0 0.0
        %2864 = vmatprep.subr.mxu0 0.0
        %2865 = vmatpush1.msra.mxu0 0.0
        %2866 = vmatprep.mubr.f32.mxu0 0.0
        %2867 = vmatmul.mubr.f32.gmra.mrb[0].mxu0 %v2791
        %v2868 = vpop.f32.mrb[0].mxu0
        %v2869 = vadd.f32 0.0, %v2868
        %v2870 = vpop.f32.mrb[0].mxu0
        %2871 = vmatprep.mubr.f32.mxu0 0.0
        %2872 = vmatmul.mubr.f32.gmra.mrb[0].mxu0 %v2794
        %v2873 = vpop.f32.mrb[0].mxu0
        %v2874 = vadd.f32 0.0, %v2873
        %v2875 = vpop.f32.mrb[0].mxu0
        %2876 = vmatprep.mubr.f32.mxu0 0.0
        %2877 = vmatmul.mubr.f32.gmra.mrb[0].mxu0 %v2797
        %v2878 = vpop.f32.mrb[0].mxu0
        %v2879 = vadd.f32 0.0, %v2878
        %v2880 = vpop.f32.mrb[0].mxu0
        %2881 = vmatprep.mubr.f32.mxu0 0.0
        %2882 = vmatmul.mubr.f32.gmra.mrb[0].mxu0 %v2800
        %v2883 = vpop.f32.mrb[0].mxu0
        %v2884 = vadd.f32 0.0, %v2883
        %v2885 = vpop.f32.mrb[0].mxu0
        %2886 = vdwg.mxu0
        %v2887 = vadd.f32 %v2781, %v2869
        %v2888 = vadd.f32 %v2782, %v2874
        %v2889 = vadd.f32 %v2783, %v2879
        %v2890 = vadd.f32 %v2784, %v2884
        %v2891 = vld [vmem:[%s5] sm:$0x1]
        %v2892 = vld [vmem:[%s5 + $0x1] sm:$0x1]
        %v2893 = vld [vmem:[%s5 + $0x2] sm:$0x1]
        %vm2894 = vcmask 523264
        %v2895 = vsel %vm2894, %v2887, 0.0
        %v2896 = vsel %vm2894, %v2888, 0.0
        %v2897 = vadd.f32 %v2895, %v2896
        %v2898 = vsel %vm2894, %v2889, 0.0
        %v2899 = vadd.f32 %v2897, %v2898
        %v2900 = vsel %vm2894, %v2890, 0.0
        %v2901 = vadd.f32 %v2899, %v2900
        %v2902 = vrot.slane %v2901, 4
        %v2903 = vadd.f32 %v2901, %v2902
        %v2904 = vrot.slane %v2903, 2
        %v2905 = vadd.f32 %v2903, %v2904
        %v2906 = vrot.slane %v2905, 1
        %v2907 = vadd.f32 %v2905, %v2906
        %v2908 = vrcp.pop 32.0
        %v2909 = vmul.f32 %v2907, %v2908
        %v2910 = vsub.f32 %v2887, %v2909
        %v2911 = vsub.f32 %v2888, %v2909
        %v2912 = vsub.f32 %v2889, %v2909
        %v2913 = vsub.f32 %v2890, %v2909
        %v2914 = vmul.f32 %v2910, %v2910
        %v2915 = vmul.f32 %v2911, %v2911
        %v2916 = vmul.f32 %v2912, %v2912
        %v2917 = vmul.f32 %v2913, %v2913
        %v2918 = vsel %vm2894, %v2914, 0.0
        %v2919 = vsel %vm2894, %v2915, 0.0
        %v2920 = vadd.f32 %v2918, %v2919
        %v2921 = vsel %vm2894, %v2916, 0.0
        %v2922 = vadd.f32 %v2920, %v2921
        %v2923 = vsel %vm2894, %v2917, 0.0
        %v2924 = vadd.f32 %v2922, %v2923
        %v2925 = vrot.slane %v2924, 4
        %v2926 = vadd.f32 %v2924, %v2925
        %v2927 = vrot.slane %v2926, 2
        %v2928 = vadd.f32 %v2926, %v2927
        %v2929 = vrot.slane %v2928, 1
        %v2930 = vadd.f32 %v2928, %v2929
        %v2931 = vmul.f32 %v2930, %v2908
        %v2932 = vadd.f32 %v2931, 1e-05
        %v2933 = vrsqrt.pop %v2932
        %v2934 = vmul.f32 %v2891, %v2933
        %v2935 = vmul.f32 %v2909, %v2934
        %v2936 = vsub.f32 %v2892, %v2935
        %v2937 = vlaneseq
        %v2938 = vshrl.u32 %v2937, 7
        %v2939 = vsub.s32 0, %v2938
        %v2940 = vrot.slane %v2934, %v2939
        %v2941 = vmul.f32 %v2887, %v2940
        %v2942 = vmul.f32 %v2888, %v2940
        %v2943 = vmul.f32 %v2889, %v2940
        %v2944 = vmul.f32 %v2890, %v2940
        %v2945 = vlaneseq
        %v2946 = vshrl.u32 %v2945, 7
        %v2947 = vsub.s32 0, %v2946
        %v2948 = vrot.slane %v2936, %v2947
        %v2949 = vadd.f32 %v2941, %v2948
        %v2950 = vadd.f32 %v2942, %v2948
        %v2951 = vadd.f32 %v2943, %v2948
        %v2952 = vadd.f32 %v2944, %v2948
        %vm2953 = vcmp.ge.f32.partialorder %v2949, 0.0
        %vm2954 = vcmp.ge.f32.partialorder %v2950, 0.0
        %vm2955 = vcmp.ge.f32.partialorder %v2951, 0.0
        %vm2956 = vcmp.ge.f32.partialorder %v2952, 0.0
        %v2957 = vlaneseq
        %v2958 = vshrl.u32 %v2957, 7
        %v2959 = vsub.s32 0, %v2958
        %v2960 = vrot.slane %v2893, %v2959
        %v2961 = vmul.f32 %v2960, %v2949
        %v2962 = vmul.f32 %v2960, %v2950
        %v2963 = vmul.f32 %v2960, %v2951
        %v2964 = vmul.f32 %v2960, %v2952
        %v2965 = vsel %vm2953, %v2949, %v2961
        %v2966 = vsel %vm2954, %v2950, %v2962
        %v2967 = vsel %vm2955, %v2951, %v2963
        %v2968 = vsel %vm2956, %v2952, %v2964
        %v2969 = vld [vmem:[%s6] sm:$0xff]
        %v2970 = vld [vmem:[%s6 + $0x8] sm:$0xff]
        %v2971 = vld [vmem:[%s6 + $0x10] sm:$0xff]
        %v2972 = vld [vmem:[%s6 + $0x18] sm:$0xff]
        %v2973 = vld [vmem:[%s6 + $0x20] sm:$0xff]
        %v2974 = vld [vmem:[%s6 + $0x28] sm:$0xff]
        %v2976 = vsel %vm695, %v2969, 0
        %v2979 = vsel %vm695, %v2970, 0
        %v2982 = vsel %vm695, %v2971, 0
        %v2985 = vsel %vm695, %v2972, 0
        %v2988 = vsel %vm695, %v2973, 0
        %v2991 = vsel %vm695, %v2974, 0
        %2993 = vmatprep.subr.mxu0 0.0
        %2994 = vmatpush1.msra.mxu0 %v2965
        %2995 = vmatprep.subr.mxu0 0.0
        %2996 = vmatpush1.msra.mxu0 %v2966
        %2997 = vmatprep.subr.mxu0 0.0
        %2998 = vmatpush1.msra.mxu0 %v2967
        %2999 = vmatprep.subr.mxu0 0.0
        %3000 = vmatpush1.msra.mxu0 %v2968
        %3001 = vmatprep.subr.mxu0 0.0
        %3002 = vmatpush1.msra.mxu0 0.0
        %3003 = vmatprep.subr.mxu0 0.0
        %3004 = vmatpush1.msra.mxu0 0.0
        %3005 = vmatprep.subr.mxu0 0.0
        %3006 = vmatpush1.msra.mxu0 0.0
        %3007 = vmatprep.subr.mxu0 0.0
        %3008 = vmatpush1.msra.mxu0 0.0
        %3009 = vmatprep.subr.mxu0 0.0
        %3010 = vmatpush1.msra.mxu0 0.0
        %3011 = vmatprep.subr.mxu0 0.0
        %3012 = vmatpush1.msra.mxu0 0.0
        %3013 = vmatprep.subr.mxu0 0.0
        %3014 = vmatpush1.msra.mxu0 0.0
        %3015 = vmatprep.subr.mxu0 0.0
        %3016 = vmatpush1.msra.mxu0 0.0
        %3017 = vmatprep.subr.mxu0 0.0
        %3018 = vmatpush1.msra.mxu0 0.0
        %3019 = vmatprep.subr.mxu0 0.0
        %3020 = vmatpush1.msra.mxu0 0.0
        %3021 = vmatprep.subr.mxu0 0.0
        %3022 = vmatpush1.msra.mxu0 0.0
        %3023 = vmatprep.subr.mxu0 0.0
        %3024 = vmatpush1.msra.mxu0 0.0
        %3025 = vmatprep.subr.mxu0 0.0
        %3026 = vmatpush1.msra.mxu0 0.0
        %3027 = vmatprep.subr.mxu0 0.0
        %3028 = vmatpush1.msra.mxu0 0.0
        %3029 = vmatprep.subr.mxu0 0.0
        %3030 = vmatpush1.msra.mxu0 0.0
        %3031 = vmatprep.subr.mxu0 0.0
        %3032 = vmatpush1.msra.mxu0 0.0
        %3033 = vmatprep.subr.mxu0 0.0
        %3034 = vmatpush1.msra.mxu0 0.0
        %3035 = vmatprep.subr.mxu0 0.0
        %3036 = vmatpush1.msra.mxu0 0.0
        %3037 = vmatprep.subr.mxu0 0.0
        %3038 = vmatpush1.msra.mxu0 0.0
        %3039 = vmatprep.subr.mxu0 0.0
        %3040 = vmatpush1.msra.mxu0 0.0
        %3041 = vmatprep.subr.mxu0 0.0
        %3042 = vmatpush1.msra.mxu0 0.0
        %3043 = vmatprep.subr.mxu0 0.0
        %3044 = vmatpush1.msra.mxu0 0.0
        %3045 = vmatprep.subr.mxu0 0.0
        %3046 = vmatpush1.msra.mxu0 0.0
        %3047 = vmatprep.subr.mxu0 0.0
        %3048 = vmatpush1.msra.mxu0 0.0
        %3049 = vmatprep.subr.mxu0 0.0
        %3050 = vmatpush1.msra.mxu0 0.0
        %3051 = vmatprep.subr.mxu0 0.0
        %3052 = vmatpush1.msra.mxu0 0.0
        %3053 = vmatprep.subr.mxu0 0.0
        %3054 = vmatpush1.msra.mxu0 0.0
        %3055 = vmatprep.subr.mxu0 0.0
        %3056 = vmatpush1.msra.mxu0 0.0
        %3057 = vmatprep.mubr.f32.mxu0 0.0
        %3058 = vmatmul.mubr.f32.gmra.mrb[0].mxu0 %v2976
        %v3059 = vpop.f32.mrb[0].mxu0
        %v3060 = vadd.f32 0.0, %v3059
        %v3061 = vpop.f32.mrb[0].mxu0
        %3062 = vmatprep.mubr.f32.mxu0 0.0
        %3063 = vmatmul.mubr.f32.gmra.mrb[0].mxu0 %v2979
        %v3064 = vpop.f32.mrb[0].mxu0
        %v3065 = vadd.f32 0.0, %v3064
        %v3066 = vpop.f32.mrb[0].mxu0
        %3067 = vmatprep.mubr.f32.mxu0 0.0
        %3068 = vmatmul.mubr.f32.gmra.mrb[0].mxu0 %v2982
        %v3069 = vpop.f32.mrb[0].mxu0
        %v3070 = vadd.f32 0.0, %v3069
        %v3071 = vpop.f32.mrb[0].mxu0
        %3072 = vmatprep.mubr.f32.mxu0 0.0
        %3073 = vmatmul.mubr.f32.gmra.mrb[0].mxu0 %v2985
        %v3074 = vpop.f32.mrb[0].mxu0
        %v3075 = vadd.f32 0.0, %v3074
        %v3076 = vpop.f32.mrb[0].mxu0
        %3077 = vmatprep.mubr.f32.mxu0 0.0
        %3078 = vmatmul.mubr.f32.gmra.mrb[0].mxu0 %v2988
        %v3079 = vpop.f32.mrb[0].mxu0
        %v3080 = vadd.f32 0.0, %v3079
        %v3081 = vpop.f32.mrb[0].mxu0
        %3082 = vmatprep.mubr.f32.mxu0 0.0
        %3083 = vmatmul.mubr.f32.gmra.mrb[0].mxu0 %v2991
        %v3084 = vpop.f32.mrb[0].mxu0
        %v3085 = vadd.f32 0.0, %v3084
        %v3086 = vpop.f32.mrb[0].mxu0
        %3087 = vdwg.mxu0
        %v3088 = vld [vmem:[%s7] sm:$0xff]
        %v3089 = vld [vmem:[%s7 + $0x8] sm:$0xff]
        %v3090 = vld [vmem:[%s7 + $0x10] sm:$0xff]
        %v3091 = vld [vmem:[%s7 + $0x18] sm:$0xff]
        %v3092 = vld [vmem:[%s7 + $0x20] sm:$0xff]
        %v3093 = vld [vmem:[%s7 + $0x28] sm:$0xff]
        %v3094 = vld [vmem:[%s7 + $0x30] sm:$0xff]
        %v3095 = vld [vmem:[%s7 + $0x38] sm:$0xff]
        %s3096 = scalar_lea.vmem %s7, 64
        %v3097 = vld [vmem:[%s3096] sm:$0xff]
        %v3098 = vld [vmem:[%s3096 + $0x8] sm:$0xff]
        %v3099 = vld [vmem:[%s3096 + $0x10] sm:$0xff]
        %v3100 = vld [vmem:[%s3096 + $0x18] sm:$0xff]
        %v3101 = vld [vmem:[%s3096 + $0x20] sm:$0xff]
        %v3102 = vld [vmem:[%s3096 + $0x28] sm:$0xff]
        %v3103 = vld [vmem:[%s3096 + $0x30] sm:$0xff]
        %v3104 = vld [vmem:[%s3096 + $0x38] sm:$0xff]
        %v3106 = vrot.slane %v3060, 4
        %v3107 = vsel %vm2894, %v3106, 0
        %3109 = vmatprep.subr.mxu0 0.0
        %3110 = vmatpush1.msra.mxu0 %v3097
        %3111 = vmatprep.subr.mxu0 0.0
        %3112 = vmatpush1.msra.mxu0 %v3098
        %3113 = vmatprep.subr.mxu0 0.0
        %3114 = vmatpush1.msra.mxu0 %v3099
        %3115 = vmatprep.subr.mxu0 0.0
        %3116 = vmatpush1.msra.mxu0 %v3100
        %3117 = vmatprep.subr.mxu0 0.0
        %3118 = vmatpush1.msra.mxu0 %v3101
        %3119 = vmatprep.subr.mxu0 0.0
        %3120 = vmatpush1.msra.mxu0 %v3102
        %3121 = vmatprep.subr.mxu0 0.0
        %3122 = vmatpush1.msra.mxu0 %v3103
        %3123 = vmatprep.subr.mxu0 0.0
        %3124 = vmatpush1.msra.mxu0 %v3104
        %3125 = vmatprep.subr.mxu0 0.0
        %3126 = vmatpush1.msra.mxu0 0.0
        %3127 = vmatprep.subr.mxu0 0.0
        %3128 = vmatpush1.msra.mxu0 0.0
        %3129 = vmatprep.subr.mxu0 0.0
        %3130 = vmatpush1.msra.mxu0 0.0
        %3131 = vmatprep.subr.mxu0 0.0
        %3132 = vmatpush1.msra.mxu0 0.0
        %3133 = vmatprep.subr.mxu0 0.0
        %3134 = vmatpush1.msra.mxu0 0.0
        %3135 = vmatprep.subr.mxu0 0.0
        %3136 = vmatpush1.msra.mxu0 0.0
        %3137 = vmatprep.subr.mxu0 0.0
        %3138 = vmatpush1.msra.mxu0 0.0
        %3139 = vmatprep.subr.mxu0 0.0
        %3140 = vmatpush1.msra.mxu0 0.0
        %3141 = vmatprep.subr.mxu0 0.0
        %3142 = vmatpush1.msra.mxu0 0.0
        %3143 = vmatprep.subr.mxu0 0.0
        %3144 = vmatpush1.msra.mxu0 0.0
        %3145 = vmatprep.subr.mxu0 0.0
        %3146 = vmatpush1.msra.mxu0 0.0
        %3147 = vmatprep.subr.mxu0 0.0
        %3148 = vmatpush1.msra.mxu0 0.0
        %3149 = vmatprep.subr.mxu0 0.0
        %3150 = vmatpush1.msra.mxu0 0.0
        %3151 = vmatprep.subr.mxu0 0.0
        %3152 = vmatpush1.msra.mxu0 0.0
        %3153 = vmatprep.subr.mxu0 0.0
        %3154 = vmatpush1.msra.mxu0 0.0
        %3155 = vmatprep.subr.mxu0 0.0
        %3156 = vmatpush1.msra.mxu0 0.0
        %3157 = vmatprep.subr.mxu0 0.0
        %3158 = vmatpush1.msra.mxu0 0.0
        %3159 = vmatprep.subr.mxu0 0.0
        %3160 = vmatpush1.msra.mxu0 0.0
        %3161 = vmatprep.subr.mxu0 0.0
        %3162 = vmatpush1.msra.mxu0 0.0
        %3163 = vmatprep.subr.mxu0 0.0
        %3164 = vmatpush1.msra.mxu0 0.0
        %3165 = vmatprep.subr.mxu0 0.0
        %3166 = vmatpush1.msra.mxu0 0.0
        %3167 = vmatprep.subr.mxu0 0.0
        %3168 = vmatpush1.msra.mxu0 0.0
        %3169 = vmatprep.subr.mxu0 0.0
        %3170 = vmatpush1.msra.mxu0 0.0
        %3171 = vmatprep.subr.mxu0 0.0
        %3172 = vmatpush1.msra.mxu0 0.0
        %3173 = vmatprep.mubr.f32.mxu0 0.0
        %3174 = vmatmul.mubr.f32.gmra.mrb[0].mxu0 %v3107
        %v3175 = vpop.f32.mrb[0].mxu0
        %v3176 = vadd.f32 0.0, %v3175
        %v3177 = vpop.f32.mrb[0].mxu0
        %3178 = vdwg.mxu0
        %v3179 = vsel %vm2894, %v3060, 0
        %3181 = vmatprep.subr.mxu0 0.0
        %3182 = vmatpush1.msra.mxu0 %v3088
        %3183 = vmatprep.subr.mxu0 0.0
        %3184 = vmatpush1.msra.mxu0 %v3089
        %3185 = vmatprep.subr.mxu0 0.0
        %3186 = vmatpush1.msra.mxu0 %v3090
        %3187 = vmatprep.subr.mxu0 0.0
        %3188 = vmatpush1.msra.mxu0 %v3091
        %3189 = vmatprep.subr.mxu0 0.0
        %3190 = vmatpush1.msra.mxu0 %v3092
        %3191 = vmatprep.subr.mxu0 0.0
        %3192 = vmatpush1.msra.mxu0 %v3093
        %3193 = vmatprep.subr.mxu0 0.0
        %3194 = vmatpush1.msra.mxu0 %v3094
        %3195 = vmatprep.subr.mxu0 0.0
        %3196 = vmatpush1.msra.mxu0 %v3095
        %3197 = vmatprep.subr.mxu0 0.0
        %3198 = vmatpush1.msra.mxu0 0.0
        %3199 = vmatprep.subr.mxu0 0.0
        %3200 = vmatpush1.msra.mxu0 0.0
        %3201 = vmatprep.subr.mxu0 0.0
        %3202 = vmatpush1.msra.mxu0 0.0
        %3203 = vmatprep.subr.mxu0 0.0
        %3204 = vmatpush1.msra.mxu0 0.0
        %3205 = vmatprep.subr.mxu0 0.0
        %3206 = vmatpush1.msra.mxu0 0.0
        %3207 = vmatprep.subr.mxu0 0.0
        %3208 = vmatpush1.msra.mxu0 0.0
        %3209 = vmatprep.subr.mxu0 0.0
        %3210 = vmatpush1.msra.mxu0 0.0
        %3211 = vmatprep.subr.mxu0 0.0
        %3212 = vmatpush1.msra.mxu0 0.0
        %3213 = vmatprep.subr.mxu0 0.0
        %3214 = vmatpush1.msra.mxu0 0.0
        %3215 = vmatprep.subr.mxu0 0.0
        %3216 = vmatpush1.msra.mxu0 0.0
        %3217 = vmatprep.subr.mxu0 0.0
        %3218 = vmatpush1.msra.mxu0 0.0
        %3219 = vmatprep.subr.mxu0 0.0
        %3220 = vmatpush1.msra.mxu0 0.0
        %3221 = vmatprep.subr.mxu0 0.0
        %3222 = vmatpush1.msra.mxu0 0.0
        %3223 = vmatprep.subr.mxu0 0.0
        %3224 = vmatpush1.msra.mxu0 0.0
        %3225 = vmatprep.subr.mxu0 0.0
        %3226 = vmatpush1.msra.mxu0 0.0
        %3227 = vmatprep.subr.mxu0 0.0
        %3228 = vmatpush1.msra.mxu0 0.0
        %3229 = vmatprep.subr.mxu0 0.0
        %3230 = vmatpush1.msra.mxu0 0.0
        %3231 = vmatprep.subr.mxu0 0.0
        %3232 = vmatpush1.msra.mxu0 0.0
        %3233 = vmatprep.subr.mxu0 0.0
        %3234 = vmatpush1.msra.mxu0 0.0
        %3235 = vmatprep.subr.mxu0 0.0
        %3236 = vmatpush1.msra.mxu0 0.0
        %3237 = vmatprep.subr.mxu0 0.0
        %3238 = vmatpush1.msra.mxu0 0.0
        %3239 = vmatprep.subr.mxu0 0.0
        %3240 = vmatpush1.msra.mxu0 0.0
        %3241 = vmatprep.subr.mxu0 0.0
        %3242 = vmatpush1.msra.mxu0 0.0
        %3243 = vmatprep.subr.mxu0 0.0
        %3244 = vmatpush1.msra.mxu0 0.0
        %3245 = vmatprep.mubr.f32.mxu0 0.0
        %3246 = vmatmul.mubr.f32.gmra.mrb[0].mxu0 %v3179
        %v3247 = vpop.f32.mrb[0].mxu0
        %v3248 = vadd.f32 %v3176, %v3247
        %v3249 = vpop.f32.mrb[0].mxu0
        %3250 = vdwg.mxu0
        %s3251 = scalar_lea.vmem %s7, 128
        %v3252 = vld [vmem:[%s3251] sm:$0xff]
        %v3253 = vld [vmem:[%s3251 + $0x8] sm:$0xff]
        %v3254 = vld [vmem:[%s3251 + $0x10] sm:$0xff]
        %v3255 = vld [vmem:[%s3251 + $0x18] sm:$0xff]
        %v3256 = vld [vmem:[%s3251 + $0x20] sm:$0xff]
        %v3257 = vld [vmem:[%s3251 + $0x28] sm:$0xff]
        %v3258 = vld [vmem:[%s3251 + $0x30] sm:$0xff]
        %v3259 = vld [vmem:[%s3251 + $0x38] sm:$0xff]
        %v3261 = vsel %vm2894, %v3065, 0
        %3263 = vmatprep.subr.mxu0 0.0
        %3264 = vmatpush1.msra.mxu0 %v3252
        %3265 = vmatprep.subr.mxu0 0.0
        %3266 = vmatpush1.msra.mxu0 %v3253
        %3267 = vmatprep.subr.mxu0 0.0
        %3268 = vmatpush1.msra.mxu0 %v3254
        %3269 = vmatprep.subr.mxu0 0.0
        %3270 = vmatpush1.msra.mxu0 %v3255
        %3271 = vmatprep.subr.mxu0 0.0
        %3272 = vmatpush1.msra.mxu0 %v3256
        %3273 = vmatprep.subr.mxu0 0.0
        %3274 = vmatpush1.msra.mxu0 %v3257
        %3275 = vmatprep.subr.mxu0 0.0
        %3276 = vmatpush1.msra.mxu0 %v3258
        %3277 = vmatprep.subr.mxu0 0.0
        %3278 = vmatpush1.msra.mxu0 %v3259
        %3279 = vmatprep.subr.mxu0 0.0
        %3280 = vmatpush1.msra.mxu0 0.0
        %3281 = vmatprep.subr.mxu0 0.0
        %3282 = vmatpush1.msra.mxu0 0.0
        %3283 = vmatprep.subr.mxu0 0.0
        %3284 = vmatpush1.msra.mxu0 0.0
        %3285 = vmatprep.subr.mxu0 0.0
        %3286 = vmatpush1.msra.mxu0 0.0
        %3287 = vmatprep.subr.mxu0 0.0
        %3288 = vmatpush1.msra.mxu0 0.0
        %3289 = vmatprep.subr.mxu0 0.0
        %3290 = vmatpush1.msra.mxu0 0.0
        %3291 = vmatprep.subr.mxu0 0.0
        %3292 = vmatpush1.msra.mxu0 0.0
        %3293 = vmatprep.subr.mxu0 0.0
        %3294 = vmatpush1.msra.mxu0 0.0
        %3295 = vmatprep.subr.mxu0 0.0
        %3296 = vmatpush1.msra.mxu0 0.0
        %3297 = vmatprep.subr.mxu0 0.0
        %3298 = vmatpush1.msra.mxu0 0.0
        %3299 = vmatprep.subr.mxu0 0.0
        %3300 = vmatpush1.msra.mxu0 0.0
        %3301 = vmatprep.subr.mxu0 0.0
        %3302 = vmatpush1.msra.mxu0 0.0
        %3303 = vmatprep.subr.mxu0 0.0
        %3304 = vmatpush1.msra.mxu0 0.0
        %3305 = vmatprep.subr.mxu0 0.0
        %3306 = vmatpush1.msra.mxu0 0.0
        %3307 = vmatprep.subr.mxu0 0.0
        %3308 = vmatpush1.msra.mxu0 0.0
        %3309 = vmatprep.subr.mxu0 0.0
        %3310 = vmatpush1.msra.mxu0 0.0
        %3311 = vmatprep.subr.mxu0 0.0
        %3312 = vmatpush1.msra.mxu0 0.0
        %3313 = vmatprep.subr.mxu0 0.0
        %3314 = vmatpush1.msra.mxu0 0.0
        %3315 = vmatprep.subr.mxu0 0.0
        %3316 = vmatpush1.msra.mxu0 0.0
        %3317 = vmatprep.subr.mxu0 0.0
        %3318 = vmatpush1.msra.mxu0 0.0
        %3319 = vmatprep.subr.mxu0 0.0
        %3320 = vmatpush1.msra.mxu0 0.0
        %3321 = vmatprep.subr.mxu0 0.0
        %3322 = vmatpush1.msra.mxu0 0.0
        %3323 = vmatprep.subr.mxu0 0.0
        %3324 = vmatpush1.msra.mxu0 0.0
        %3325 = vmatprep.subr.mxu0 0.0
        %3326 = vmatpush1.msra.mxu0 0.0
        %3327 = vmatprep.mubr.f32.mxu0 0.0
        %3328 = vmatmul.mubr.f32.gmra.mrb[0].mxu0 %v3261
        %v3329 = vpop.f32.mrb[0].mxu0
        %v3330 = vadd.f32 0.0, %v3329
        %v3331 = vpop.f32.mrb[0].mxu0
        %3332 = vdwg.mxu0
        %v3333 = vadd.f32 %v3248, %v3330
        %s3334 = scalar_lea.vmem %s7, 192
        %v3335 = vld [vmem:[%s3334] sm:$0xff]
        %v3336 = vld [vmem:[%s3334 + $0x8] sm:$0xff]
        %v3337 = vld [vmem:[%s3334 + $0x10] sm:$0xff]
        %v3338 = vld [vmem:[%s3334 + $0x18] sm:$0xff]
        %v3339 = vld [vmem:[%s3334 + $0x20] sm:$0xff]
        %v3340 = vld [vmem:[%s3334 + $0x28] sm:$0xff]
        %v3341 = vld [vmem:[%s3334 + $0x30] sm:$0xff]
        %v3342 = vld [vmem:[%s3334 + $0x38] sm:$0xff]
        %v3343 = vrot.slane %v3065, 4
        %v3344 = vsel %vm2894, %v3343, 0
        %3346 = vmatprep.subr.mxu0 0.0
        %3347 = vmatpush1.msra.mxu0 %v3335
        %3348 = vmatprep.subr.mxu0 0.0
        %3349 = vmatpush1.msra.mxu0 %v3336
        %3350 = vmatprep.subr.mxu0 0.0
        %3351 = vmatpush1.msra.mxu0 %v3337
        %3352 = vmatprep.subr.mxu0 0.0
        %3353 = vmatpush1.msra.mxu0 %v3338
        %3354 = vmatprep.subr.mxu0 0.0
        %3355 = vmatpush1.msra.mxu0 %v3339
        %3356 = vmatprep.subr.mxu0 0.0
        %3357 = vmatpush1.msra.mxu0 %v3340
        %3358 = vmatprep.subr.mxu0 0.0
        %3359 = vmatpush1.msra.mxu0 %v3341
        %3360 = vmatprep.subr.mxu0 0.0
        %3361 = vmatpush1.msra.mxu0 %v3342
        %3362 = vmatprep.subr.mxu0 0.0
        %3363 = vmatpush1.msra.mxu0 0.0
        %3364 = vmatprep.subr.mxu0 0.0
        %3365 = vmatpush1.msra.mxu0 0.0
        %3366 = vmatprep.subr.mxu0 0.0
        %3367 = vmatpush1.msra.mxu0 0.0
        %3368 = vmatprep.subr.mxu0 0.0
        %3369 = vmatpush1.msra.mxu0 0.0
        %3370 = vmatprep.subr.mxu0 0.0
        %3371 = vmatpush1.msra.mxu0 0.0
        %3372 = vmatprep.subr.mxu0 0.0
        %3373 = vmatpush1.msra.mxu0 0.0
        %3374 = vmatprep.subr.mxu0 0.0
        %3375 = vmatpush1.msra.mxu0 0.0
        %3376 = vmatprep.subr.mxu0 0.0
        %3377 = vmatpush1.msra.mxu0 0.0
        %3378 = vmatprep.subr.mxu0 0.0
        %3379 = vmatpush1.msra.mxu0 0.0
        %3380 = vmatprep.subr.mxu0 0.0
        %3381 = vmatpush1.msra.mxu0 0.0
        %3382 = vmatprep.subr.mxu0 0.0
        %3383 = vmatpush1.msra.mxu0 0.0
        %3384 = vmatprep.subr.mxu0 0.0
        %3385 = vmatpush1.msra.mxu0 0.0
        %3386 = vmatprep.subr.mxu0 0.0
        %3387 = vmatpush1.msra.mxu0 0.0
        %3388 = vmatprep.subr.mxu0 0.0
        %3389 = vmatpush1.msra.mxu0 0.0
        %3390 = vmatprep.subr.mxu0 0.0
        %3391 = vmatpush1.msra.mxu0 0.0
        %3392 = vmatprep.subr.mxu0 0.0
        %3393 = vmatpush1.msra.mxu0 0.0
        %3394 = vmatprep.subr.mxu0 0.0
        %3395 = vmatpush1.msra.mxu0 0.0
        %3396 = vmatprep.subr.mxu0 0.0
        %3397 = vmatpush1.msra.mxu0 0.0
        %3398 = vmatprep.subr.mxu0 0.0
        %3399 = vmatpush1.msra.mxu0 0.0
        %3400 = vmatprep.subr.mxu0 0.0
        %3401 = vmatpush1.msra.mxu0 0.0
        %3402 = vmatprep.subr.mxu0 0.0
        %3403 = vmatpush1.msra.mxu0 0.0
        %3404 = vmatprep.subr.mxu0 0.0
        %3405 = vmatpush1.msra.mxu0 0.0
        %3406 = vmatprep.subr.mxu0 0.0
        %3407 = vmatpush1.msra.mxu0 0.0
        %3408 = vmatprep.subr.mxu0 0.0
        %3409 = vmatpush1.msra.mxu0 0.0
        %3410 = vmatprep.mubr.f32.mxu0 0.0
        %3411 = vmatmul.mubr.f32.gmra.mrb[0].mxu0 %v3344
        %v3412 = vpop.f32.mrb[0].mxu0
        %v3413 = vadd.f32 0.0, %v3412
        %v3414 = vpop.f32.mrb[0].mxu0
        %3415 = vdwg.mxu0
        %v3416 = vadd.f32 %v3333, %v3413
        %s3417 = scalar_lea.vmem %s7, 256
        %v3418 = vld [vmem:[%s3417] sm:$0xff]
        %v3419 = vld [vmem:[%s3417 + $0x8] sm:$0xff]
        %v3420 = vld [vmem:[%s3417 + $0x10] sm:$0xff]
        %v3421 = vld [vmem:[%s3417 + $0x18] sm:$0xff]
        %v3422 = vld [vmem:[%s3417 + $0x20] sm:$0xff]
        %v3423 = vld [vmem:[%s3417 + $0x28] sm:$0xff]
        %v3424 = vld [vmem:[%s3417 + $0x30] sm:$0xff]
        %v3425 = vld [vmem:[%s3417 + $0x38] sm:$0xff]
        %v3427 = vsel %vm2894, %v3070, 0
        %3429 = vmatprep.subr.mxu0 0.0
        %3430 = vmatpush1.msra.mxu0 %v3418
        %3431 = vmatprep.subr.mxu0 0.0
        %3432 = vmatpush1.msra.mxu0 %v3419
        %3433 = vmatprep.subr.mxu0 0.0
        %3434 = vmatpush1.msra.mxu0 %v3420
        %3435 = vmatprep.subr.mxu0 0.0
        %3436 = vmatpush1.msra.mxu0 %v3421
        %3437 = vmatprep.subr.mxu0 0.0
        %3438 = vmatpush1.msra.mxu0 %v3422
        %3439 = vmatprep.subr.mxu0 0.0
        %3440 = vmatpush1.msra.mxu0 %v3423
        %3441 = vmatprep.subr.mxu0 0.0
        %3442 = vmatpush1.msra.mxu0 %v3424
        %3443 = vmatprep.subr.mxu0 0.0
        %3444 = vmatpush1.msra.mxu0 %v3425
        %3445 = vmatprep.subr.mxu0 0.0
        %3446 = vmatpush1.msra.mxu0 0.0
        %3447 = vmatprep.subr.mxu0 0.0
        %3448 = vmatpush1.msra.mxu0 0.0
        %3449 = vmatprep.subr.mxu0 0.0
        %3450 = vmatpush1.msra.mxu0 0.0
        %3451 = vmatprep.subr.mxu0 0.0
        %3452 = vmatpush1.msra.mxu0 0.0
        %3453 = vmatprep.subr.mxu0 0.0
        %3454 = vmatpush1.msra.mxu0 0.0
        %3455 = vmatprep.subr.mxu0 0.0
        %3456 = vmatpush1.msra.mxu0 0.0
        %3457 = vmatprep.subr.mxu0 0.0
        %3458 = vmatpush1.msra.mxu0 0.0
        %3459 = vmatprep.subr.mxu0 0.0
        %3460 = vmatpush1.msra.mxu0 0.0
        %3461 = vmatprep.subr.mxu0 0.0
        %3462 = vmatpush1.msra.mxu0 0.0
        %3463 = vmatprep.subr.mxu0 0.0
        %3464 = vmatpush1.msra.mxu0 0.0
        %3465 = vmatprep.subr.mxu0 0.0
        %3466 = vmatpush1.msra.mxu0 0.0
        %3467 = vmatprep.subr.mxu0 0.0
        %3468 = vmatpush1.msra.mxu0 0.0
        %3469 = vmatprep.subr.mxu0 0.0
        %3470 = vmatpush1.msra.mxu0 0.0
        %3471 = vmatprep.subr.mxu0 0.0
        %3472 = vmatpush1.msra.mxu0 0.0
        %3473 = vmatprep.subr.mxu0 0.0
        %3474 = vmatpush1.msra.mxu0 0.0
        %3475 = vmatprep.subr.mxu0 0.0
        %3476 = vmatpush1.msra.mxu0 0.0
        %3477 = vmatprep.subr.mxu0 0.0
        %3478 = vmatpush1.msra.mxu0 0.0
        %3479 = vmatprep.subr.mxu0 0.0
        %3480 = vmatpush1.msra.mxu0 0.0
        %3481 = vmatprep.subr.mxu0 0.0
        %3482 = vmatpush1.msra.mxu0 0.0
        %3483 = vmatprep.subr.mxu0 0.0
        %3484 = vmatpush1.msra.mxu0 0.0
        %3485 = vmatprep.subr.mxu0 0.0
        %3486 = vmatpush1.msra.mxu0 0.0
        %3487 = vmatprep.subr.mxu0 0.0
        %3488 = vmatpush1.msra.mxu0 0.0
        %3489 = vmatprep.subr.mxu0 0.0
        %3490 = vmatpush1.msra.mxu0 0.0
        %3491 = vmatprep.subr.mxu0 0.0
        %3492 = vmatpush1.msra.mxu0 0.0
        %3493 = vmatprep.mubr.f32.mxu0 0.0
        %3494 = vmatmul.mubr.f32.gmra.mrb[0].mxu0 %v3427
        %v3495 = vpop.f32.mrb[0].mxu0
        %v3496 = vadd.f32 0.0, %v3495
        %v3497 = vpop.f32.mrb[0].mxu0
        %3498 = vdwg.mxu0
        %v3499 = vadd.f32 %v3416, %v3496
        %s3500 = scalar_lea.vmem %s7, 320
        %v3501 = vld [vmem:[%s3500] sm:$0xff]
        %v3502 = vld [vmem:[%s3500 + $0x8] sm:$0xff]
        %v3503 = vld [vmem:[%s3500 + $0x10] sm:$0xff]
        %v3504 = vld [vmem:[%s3500 + $0x18] sm:$0xff]
        %v3505 = vld [vmem:[%s3500 + $0x20] sm:$0xff]
        %v3506 = vld [vmem:[%s3500 + $0x28] sm:$0xff]
        %v3507 = vld [vmem:[%s3500 + $0x30] sm:$0xff]
        %v3508 = vld [vmem:[%s3500 + $0x38] sm:$0xff]
        %v3509 = vrot.slane %v3070, 4
        %v3510 = vsel %vm2894, %v3509, 0
        %3512 = vmatprep.subr.mxu0 0.0
        %3513 = vmatpush1.msra.mxu0 %v3501
        %3514 = vmatprep.subr.mxu0 0.0
        %3515 = vmatpush1.msra.mxu0 %v3502
        %3516 = vmatprep.subr.mxu0 0.0
        %3517 = vmatpush1.msra.mxu0 %v3503
        %3518 = vmatprep.subr.mxu0 0.0
        %3519 = vmatpush1.msra.mxu0 %v3504
        %3520 = vmatprep.subr.mxu0 0.0
        %3521 = vmatpush1.msra.mxu0 %v3505
        %3522 = vmatprep.subr.mxu0 0.0
        %3523 = vmatpush1.msra.mxu0 %v3506
        %3524 = vmatprep.subr.mxu0 0.0
        %3525 = vmatpush1.msra.mxu0 %v3507
        %3526 = vmatprep.subr.mxu0 0.0
        %3527 = vmatpush1.msra.mxu0 %v3508
        %3528 = vmatprep.subr.mxu0 0.0
        %3529 = vmatpush1.msra.mxu0 0.0
        %3530 = vmatprep.subr.mxu0 0.0
        %3531 = vmatpush1.msra.mxu0 0.0
        %3532 = vmatprep.subr.mxu0 0.0
        %3533 = vmatpush1.msra.mxu0 0.0
        %3534 = vmatprep.subr.mxu0 0.0
        %3535 = vmatpush1.msra.mxu0 0.0
        %3536 = vmatprep.subr.mxu0 0.0
        %3537 = vmatpush1.msra.mxu0 0.0
        %3538 = vmatprep.subr.mxu0 0.0
        %3539 = vmatpush1.msra.mxu0 0.0
        %3540 = vmatprep.subr.mxu0 0.0
        %3541 = vmatpush1.msra.mxu0 0.0
        %3542 = vmatprep.subr.mxu0 0.0
        %3543 = vmatpush1.msra.mxu0 0.0
        %3544 = vmatprep.subr.mxu0 0.0
        %3545 = vmatpush1.msra.mxu0 0.0
        %3546 = vmatprep.subr.mxu0 0.0
        %3547 = vmatpush1.msra.mxu0 0.0
        %3548 = vmatprep.subr.mxu0 0.0
        %3549 = vmatpush1.msra.mxu0 0.0
        %3550 = vmatprep.subr.mxu0 0.0
        %3551 = vmatpush1.msra.mxu0 0.0
        %3552 = vmatprep.subr.mxu0 0.0
        %3553 = vmatpush1.msra.mxu0 0.0
        %3554 = vmatprep.subr.mxu0 0.0
        %3555 = vmatpush1.msra.mxu0 0.0
        %3556 = vmatprep.subr.mxu0 0.0
        %3557 = vmatpush1.msra.mxu0 0.0
        %3558 = vmatprep.subr.mxu0 0.0
        %3559 = vmatpush1.msra.mxu0 0.0
        %3560 = vmatprep.subr.mxu0 0.0
        %3561 = vmatpush1.msra.mxu0 0.0
        %3562 = vmatprep.subr.mxu0 0.0
        %3563 = vmatpush1.msra.mxu0 0.0
        %3564 = vmatprep.subr.mxu0 0.0
        %3565 = vmatpush1.msra.mxu0 0.0
        %3566 = vmatprep.subr.mxu0 0.0
        %3567 = vmatpush1.msra.mxu0 0.0
        %3568 = vmatprep.subr.mxu0 0.0
        %3569 = vmatpush1.msra.mxu0 0.0
        %3570 = vmatprep.subr.mxu0 0.0
        %3571 = vmatpush1.msra.mxu0 0.0
        %3572 = vmatprep.subr.mxu0 0.0
        %3573 = vmatpush1.msra.mxu0 0.0
        %3574 = vmatprep.subr.mxu0 0.0
        %3575 = vmatpush1.msra.mxu0 0.0
        %3576 = vmatprep.mubr.f32.mxu0 0.0
        %3577 = vmatmul.mubr.f32.gmra.mrb[0].mxu0 %v3510
        %v3578 = vpop.f32.mrb[0].mxu0
        %v3579 = vadd.f32 0.0, %v3578
        %v3580 = vpop.f32.mrb[0].mxu0
        %3581 = vdwg.mxu0
        %v3582 = vadd.f32 %v3499, %v3579
        %s3583 = scalar_lea.vmem %s7, 384
        %v3584 = vld [vmem:[%s3583] sm:$0xff]
        %v3585 = vld [vmem:[%s3583 + $0x8] sm:$0xff]
        %v3586 = vld [vmem:[%s3583 + $0x10] sm:$0xff]
        %v3587 = vld [vmem:[%s3583 + $0x18] sm:$0xff]
        %v3588 = vld [vmem:[%s3583 + $0x20] sm:$0xff]
        %v3589 = vld [vmem:[%s3583 + $0x28] sm:$0xff]
        %v3590 = vld [vmem:[%s3583 + $0x30] sm:$0xff]
        %v3591 = vld [vmem:[%s3583 + $0x38] sm:$0xff]
        %v3593 = vsel %vm2894, %v3075, 0
        %3595 = vmatprep.subr.mxu0 0.0
        %3596 = vmatpush1.msra.mxu0 %v3584
        %3597 = vmatprep.subr.mxu0 0.0
        %3598 = vmatpush1.msra.mxu0 %v3585
        %3599 = vmatprep.subr.mxu0 0.0
        %3600 = vmatpush1.msra.mxu0 %v3586
        %3601 = vmatprep.subr.mxu0 0.0
        %3602 = vmatpush1.msra.mxu0 %v3587
        %3603 = vmatprep.subr.mxu0 0.0
        %3604 = vmatpush1.msra.mxu0 %v3588
        %3605 = vmatprep.subr.mxu0 0.0
        %3606 = vmatpush1.msra.mxu0 %v3589
        %3607 = vmatprep.subr.mxu0 0.0
        %3608 = vmatpush1.msra.mxu0 %v3590
        %3609 = vmatprep.subr.mxu0 0.0
        %3610 = vmatpush1.msra.mxu0 %v3591
        %3611 = vmatprep.subr.mxu0 0.0
        %3612 = vmatpush1.msra.mxu0 0.0
        %3613 = vmatprep.subr.mxu0 0.0
        %3614 = vmatpush1.msra.mxu0 0.0
        %3615 = vmatprep.subr.mxu0 0.0
        %3616 = vmatpush1.msra.mxu0 0.0
        %3617 = vmatprep.subr.mxu0 0.0
        %3618 = vmatpush1.msra.mxu0 0.0
        %3619 = vmatprep.subr.mxu0 0.0
        %3620 = vmatpush1.msra.mxu0 0.0
        %3621 = vmatprep.subr.mxu0 0.0
        %3622 = vmatpush1.msra.mxu0 0.0
        %3623 = vmatprep.subr.mxu0 0.0
        %3624 = vmatpush1.msra.mxu0 0.0
        %3625 = vmatprep.subr.mxu0 0.0
        %3626 = vmatpush1.msra.mxu0 0.0
        %3627 = vmatprep.subr.mxu0 0.0
        %3628 = vmatpush1.msra.mxu0 0.0
        %3629 = vmatprep.subr.mxu0 0.0
        %3630 = vmatpush1.msra.mxu0 0.0
        %3631 = vmatprep.subr.mxu0 0.0
        %3632 = vmatpush1.msra.mxu0 0.0
        %3633 = vmatprep.subr.mxu0 0.0
        %3634 = vmatpush1.msra.mxu0 0.0
        %3635 = vmatprep.subr.mxu0 0.0
        %3636 = vmatpush1.msra.mxu0 0.0
        %3637 = vmatprep.subr.mxu0 0.0
        %3638 = vmatpush1.msra.mxu0 0.0
        %3639 = vmatprep.subr.mxu0 0.0
        %3640 = vmatpush1.msra.mxu0 0.0
        %3641 = vmatprep.subr.mxu0 0.0
        %3642 = vmatpush1.msra.mxu0 0.0
        %3643 = vmatprep.subr.mxu0 0.0
        %3644 = vmatpush1.msra.mxu0 0.0
        %3645 = vmatprep.subr.mxu0 0.0
        %3646 = vmatpush1.msra.mxu0 0.0
        %3647 = vmatprep.subr.mxu0 0.0
        %3648 = vmatpush1.msra.mxu0 0.0
        %3649 = vmatprep.subr.mxu0 0.0
        %3650 = vmatpush1.msra.mxu0 0.0
        %3651 = vmatprep.subr.mxu0 0.0
        %3652 = vmatpush1.msra.mxu0 0.0
        %3653 = vmatprep.subr.mxu0 0.0
        %3654 = vmatpush1.msra.mxu0 0.0
        %3655 = vmatprep.subr.mxu0 0.0
        %3656 = vmatpush1.msra.mxu0 0.0
        %3657 = vmatprep.subr.mxu0 0.0
        %3658 = vmatpush1.msra.mxu0 0.0
        %3659 = vmatprep.mubr.f32.mxu0 0.0
        %3660 = vmatmul.mubr.f32.gmra.mrb[0].mxu0 %v3593
        %v3661 = vpop.f32.mrb[0].mxu0
        %v3662 = vadd.f32 0.0, %v3661
        %v3663 = vpop.f32.mrb[0].mxu0
        %3664 = vdwg.mxu0
        %v3665 = vadd.f32 %v3582, %v3662
        %s3666 = scalar_lea.vmem %s7, 448
        %v3667 = vld [vmem:[%s3666] sm:$0xff]
        %v3668 = vld [vmem:[%s3666 + $0x8] sm:$0xff]
        %v3669 = vld [vmem:[%s3666 + $0x10] sm:$0xff]
        %v3670 = vld [vmem:[%s3666 + $0x18] sm:$0xff]
        %v3671 = vld [vmem:[%s3666 + $0x20] sm:$0xff]
        %v3672 = vld [vmem:[%s3666 + $0x28] sm:$0xff]
        %v3673 = vld [vmem:[%s3666 + $0x30] sm:$0xff]
        %v3674 = vld [vmem:[%s3666 + $0x38] sm:$0xff]
        %v3675 = vrot.slane %v3075, 4
        %v3676 = vsel %vm2894, %v3675, 0
        %3678 = vmatprep.subr.mxu0 0.0
        %3679 = vmatpush1.msra.mxu0 %v3667
        %3680 = vmatprep.subr.mxu0 0.0
        %3681 = vmatpush1.msra.mxu0 %v3668
        %3682 = vmatprep.subr.mxu0 0.0
        %3683 = vmatpush1.msra.mxu0 %v3669
        %3684 = vmatprep.subr.mxu0 0.0
        %3685 = vmatpush1.msra.mxu0 %v3670
        %3686 = vmatprep.subr.mxu0 0.0
        %3687 = vmatpush1.msra.mxu0 %v3671
        %3688 = vmatprep.subr.mxu0 0.0
        %3689 = vmatpush1.msra.mxu0 %v3672
        %3690 = vmatprep.subr.mxu0 0.0
        %3691 = vmatpush1.msra.mxu0 %v3673
        %3692 = vmatprep.subr.mxu0 0.0
        %3693 = vmatpush1.msra.mxu0 %v3674
        %3694 = vmatprep.subr.mxu0 0.0
        %3695 = vmatpush1.msra.mxu0 0.0
        %3696 = vmatprep.subr.mxu0 0.0
        %3697 = vmatpush1.msra.mxu0 0.0
        %3698 = vmatprep.subr.mxu0 0.0
        %3699 = vmatpush1.msra.mxu0 0.0
        %3700 = vmatprep.subr.mxu0 0.0
        %3701 = vmatpush1.msra.mxu0 0.0
        %3702 = vmatprep.subr.mxu0 0.0
        %3703 = vmatpush1.msra.mxu0 0.0
        %3704 = vmatprep.subr.mxu0 0.0
        %3705 = vmatpush1.msra.mxu0 0.0
        %3706 = vmatprep.subr.mxu0 0.0
        %3707 = vmatpush1.msra.mxu0 0.0
        %3708 = vmatprep.subr.mxu0 0.0
        %3709 = vmatpush1.msra.mxu0 0.0
        %3710 = vmatprep.subr.mxu0 0.0
        %3711 = vmatpush1.msra.mxu0 0.0
        %3712 = vmatprep.subr.mxu0 0.0
        %3713 = vmatpush1.msra.mxu0 0.0
        %3714 = vmatprep.subr.mxu0 0.0
        %3715 = vmatpush1.msra.mxu0 0.0
        %3716 = vmatprep.subr.mxu0 0.0
        %3717 = vmatpush1.msra.mxu0 0.0
        %3718 = vmatprep.subr.mxu0 0.0
        %3719 = vmatpush1.msra.mxu0 0.0
        %3720 = vmatprep.subr.mxu0 0.0
        %3721 = vmatpush1.msra.mxu0 0.0
        %3722 = vmatprep.subr.mxu0 0.0
        %3723 = vmatpush1.msra.mxu0 0.0
        %3724 = vmatprep.subr.mxu0 0.0
        %3725 = vmatpush1.msra.mxu0 0.0
        %3726 = vmatprep.subr.mxu0 0.0
        %3727 = vmatpush1.msra.mxu0 0.0
        %3728 = vmatprep.subr.mxu0 0.0
        %3729 = vmatpush1.msra.mxu0 0.0
        %3730 = vmatprep.subr.mxu0 0.0
        %3731 = vmatpush1.msra.mxu0 0.0
        %3732 = vmatprep.subr.mxu0 0.0
        %3733 = vmatpush1.msra.mxu0 0.0
        %3734 = vmatprep.subr.mxu0 0.0
        %3735 = vmatpush1.msra.mxu0 0.0
        %3736 = vmatprep.subr.mxu0 0.0
        %3737 = vmatpush1.msra.mxu0 0.0
        %3738 = vmatprep.subr.mxu0 0.0
        %3739 = vmatpush1.msra.mxu0 0.0
        %3740 = vmatprep.subr.mxu0 0.0
        %3741 = vmatpush1.msra.mxu0 0.0
        %3742 = vmatprep.mubr.f32.mxu0 0.0
        %3743 = vmatmul.mubr.f32.gmra.mrb[0].mxu0 %v3676
        %v3744 = vpop.f32.mrb[0].mxu0
        %v3745 = vadd.f32 0.0, %v3744
        %v3746 = vpop.f32.mrb[0].mxu0
        %3747 = vdwg.mxu0
        %v3748 = vadd.f32 %v3665, %v3745
        %s3749 = scalar_lea.vmem %s7, 512
        %v3750 = vld [vmem:[%s3749] sm:$0xff]
        %v3751 = vld [vmem:[%s3749 + $0x8] sm:$0xff]
        %v3752 = vld [vmem:[%s3749 + $0x10] sm:$0xff]
        %v3753 = vld [vmem:[%s3749 + $0x18] sm:$0xff]
        %v3754 = vld [vmem:[%s3749 + $0x20] sm:$0xff]
        %v3755 = vld [vmem:[%s3749 + $0x28] sm:$0xff]
        %v3756 = vld [vmem:[%s3749 + $0x30] sm:$0xff]
        %v3757 = vld [vmem:[%s3749 + $0x38] sm:$0xff]
        %v3759 = vsel %vm2894, %v3080, 0
        %3761 = vmatprep.subr.mxu0 0.0
        %3762 = vmatpush1.msra.mxu0 %v3750
        %3763 = vmatprep.subr.mxu0 0.0
        %3764 = vmatpush1.msra.mxu0 %v3751
        %3765 = vmatprep.subr.mxu0 0.0
        %3766 = vmatpush1.msra.mxu0 %v3752
        %3767 = vmatprep.subr.mxu0 0.0
        %3768 = vmatpush1.msra.mxu0 %v3753
        %3769 = vmatprep.subr.mxu0 0.0
        %3770 = vmatpush1.msra.mxu0 %v3754
        %3771 = vmatprep.subr.mxu0 0.0
        %3772 = vmatpush1.msra.mxu0 %v3755
        %3773 = vmatprep.subr.mxu0 0.0
        %3774 = vmatpush1.msra.mxu0 %v3756
        %3775 = vmatprep.subr.mxu0 0.0
        %3776 = vmatpush1.msra.mxu0 %v3757
        %3777 = vmatprep.subr.mxu0 0.0
        %3778 = vmatpush1.msra.mxu0 0.0
        %3779 = vmatprep.subr.mxu0 0.0
        %3780 = vmatpush1.msra.mxu0 0.0
        %3781 = vmatprep.subr.mxu0 0.0
        %3782 = vmatpush1.msra.mxu0 0.0
        %3783 = vmatprep.subr.mxu0 0.0
        %3784 = vmatpush1.msra.mxu0 0.0
        %3785 = vmatprep.subr.mxu0 0.0
        %3786 = vmatpush1.msra.mxu0 0.0
        %3787 = vmatprep.subr.mxu0 0.0
        %3788 = vmatpush1.msra.mxu0 0.0
        %3789 = vmatprep.subr.mxu0 0.0
        %3790 = vmatpush1.msra.mxu0 0.0
        %3791 = vmatprep.subr.mxu0 0.0
        %3792 = vmatpush1.msra.mxu0 0.0
        %3793 = vmatprep.subr.mxu0 0.0
        %3794 = vmatpush1.msra.mxu0 0.0
        %3795 = vmatprep.subr.mxu0 0.0
        %3796 = vmatpush1.msra.mxu0 0.0
        %3797 = vmatprep.subr.mxu0 0.0
        %3798 = vmatpush1.msra.mxu0 0.0
        %3799 = vmatprep.subr.mxu0 0.0
        %3800 = vmatpush1.msra.mxu0 0.0
        %3801 = vmatprep.subr.mxu0 0.0
        %3802 = vmatpush1.msra.mxu0 0.0
        %3803 = vmatprep.subr.mxu0 0.0
        %3804 = vmatpush1.msra.mxu0 0.0
        %3805 = vmatprep.subr.mxu0 0.0
        %3806 = vmatpush1.msra.mxu0 0.0
        %3807 = vmatprep.subr.mxu0 0.0
        %3808 = vmatpush1.msra.mxu0 0.0
        %3809 = vmatprep.subr.mxu0 0.0
        %3810 = vmatpush1.msra.mxu0 0.0
        %3811 = vmatprep.subr.mxu0 0.0
        %3812 = vmatpush1.msra.mxu0 0.0
        %3813 = vmatprep.subr.mxu0 0.0
        %3814 = vmatpush1.msra.mxu0 0.0
        %3815 = vmatprep.subr.mxu0 0.0
        %3816 = vmatpush1.msra.mxu0 0.0
        %3817 = vmatprep.subr.mxu0 0.0
        %3818 = vmatpush1.msra.mxu0 0.0
        %3819 = vmatprep.subr.mxu0 0.0
        %3820 = vmatpush1.msra.mxu0 0.0
        %3821 = vmatprep.subr.mxu0 0.0
        %3822 = vmatpush1.msra.mxu0 0.0
        %3823 = vmatprep.subr.mxu0 0.0
        %3824 = vmatpush1.msra.mxu0 0.0
        %3825 = vmatprep.mubr.f32.mxu0 0.0
        %3826 = vmatmul.mubr.f32.gmra.mrb[0].mxu0 %v3759
        %v3827 = vpop.f32.mrb[0].mxu0
        %v3828 = vadd.f32 0.0, %v3827
        %v3829 = vpop.f32.mrb[0].mxu0
        %3830 = vdwg.mxu0
        %v3831 = vadd.f32 %v3748, %v3828
        %s3832 = scalar_lea.vmem %s7, 576
        %v3833 = vld [vmem:[%s3832] sm:$0xff]
        %v3834 = vld [vmem:[%s3832 + $0x8] sm:$0xff]
        %v3835 = vld [vmem:[%s3832 + $0x10] sm:$0xff]
        %v3836 = vld [vmem:[%s3832 + $0x18] sm:$0xff]
        %v3837 = vld [vmem:[%s3832 + $0x20] sm:$0xff]
        %v3838 = vld [vmem:[%s3832 + $0x28] sm:$0xff]
        %v3839 = vld [vmem:[%s3832 + $0x30] sm:$0xff]
        %v3840 = vld [vmem:[%s3832 + $0x38] sm:$0xff]
        %v3841 = vrot.slane %v3080, 4
        %v3842 = vsel %vm2894, %v3841, 0
        %3844 = vmatprep.subr.mxu0 0.0
        %3845 = vmatpush1.msra.mxu0 %v3833
        %3846 = vmatprep.subr.mxu0 0.0
        %3847 = vmatpush1.msra.mxu0 %v3834
        %3848 = vmatprep.subr.mxu0 0.0
        %3849 = vmatpush1.msra.mxu0 %v3835
        %3850 = vmatprep.subr.mxu0 0.0
        %3851 = vmatpush1.msra.mxu0 %v3836
        %3852 = vmatprep.subr.mxu0 0.0
        %3853 = vmatpush1.msra.mxu0 %v3837
        %3854 = vmatprep.subr.mxu0 0.0
        %3855 = vmatpush1.msra.mxu0 %v3838
        %3856 = vmatprep.subr.mxu0 0.0
        %3857 = vmatpush1.msra.mxu0 %v3839
        %3858 = vmatprep.subr.mxu0 0.0
        %3859 = vmatpush1.msra.mxu0 %v3840
        %3860 = vmatprep.subr.mxu0 0.0
        %3861 = vmatpush1.msra.mxu0 0.0
        %3862 = vmatprep.subr.mxu0 0.0
        %3863 = vmatpush1.msra.mxu0 0.0
        %3864 = vmatprep.subr.mxu0 0.0
        %3865 = vmatpush1.msra.mxu0 0.0
        %3866 = vmatprep.subr.mxu0 0.0
        %3867 = vmatpush1.msra.mxu0 0.0
        %3868 = vmatprep.subr.mxu0 0.0
        %3869 = vmatpush1.msra.mxu0 0.0
        %3870 = vmatprep.subr.mxu0 0.0
        %3871 = vmatpush1.msra.mxu0 0.0
        %3872 = vmatprep.subr.mxu0 0.0
        %3873 = vmatpush1.msra.mxu0 0.0
        %3874 = vmatprep.subr.mxu0 0.0
        %3875 = vmatpush1.msra.mxu0 0.0
        %3876 = vmatprep.subr.mxu0 0.0
        %3877 = vmatpush1.msra.mxu0 0.0
        %3878 = vmatprep.subr.mxu0 0.0
        %3879 = vmatpush1.msra.mxu0 0.0
        %3880 = vmatprep.subr.mxu0 0.0
        %3881 = vmatpush1.msra.mxu0 0.0
        %3882 = vmatprep.subr.mxu0 0.0
        %3883 = vmatpush1.msra.mxu0 0.0
        %3884 = vmatprep.subr.mxu0 0.0
        %3885 = vmatpush1.msra.mxu0 0.0
        %3886 = vmatprep.subr.mxu0 0.0
        %3887 = vmatpush1.msra.mxu0 0.0
        %3888 = vmatprep.subr.mxu0 0.0
        %3889 = vmatpush1.msra.mxu0 0.0
        %3890 = vmatprep.subr.mxu0 0.0
        %3891 = vmatpush1.msra.mxu0 0.0
        %3892 = vmatprep.subr.mxu0 0.0
        %3893 = vmatpush1.msra.mxu0 0.0
        %3894 = vmatprep.subr.mxu0 0.0
        %3895 = vmatpush1.msra.mxu0 0.0
        %3896 = vmatprep.subr.mxu0 0.0
        %3897 = vmatpush1.msra.mxu0 0.0
        %3898 = vmatprep.subr.mxu0 0.0
        %3899 = vmatpush1.msra.mxu0 0.0
        %3900 = vmatprep.subr.mxu0 0.0
        %3901 = vmatpush1.msra.mxu0 0.0
        %3902 = vmatprep.subr.mxu0 0.0
        %3903 = vmatpush1.msra.mxu0 0.0
        %3904 = vmatprep.subr.mxu0 0.0
        %3905 = vmatpush1.msra.mxu0 0.0
        %3906 = vmatprep.subr.mxu0 0.0
        %3907 = vmatpush1.msra.mxu0 0.0
        %3908 = vmatprep.mubr.f32.mxu0 0.0
        %3909 = vmatmul.mubr.f32.gmra.mrb[0].mxu0 %v3842
        %v3910 = vpop.f32.mrb[0].mxu0
        %v3911 = vadd.f32 0.0, %v3910
        %v3912 = vpop.f32.mrb[0].mxu0
        %3913 = vdwg.mxu0
        %v3914 = vadd.f32 %v3831, %v3911
        %s3915 = scalar_lea.vmem %s7, 640
        %v3916 = vld [vmem:[%s3915] sm:$0xff]
        %v3917 = vld [vmem:[%s3915 + $0x8] sm:$0xff]
        %v3918 = vld [vmem:[%s3915 + $0x10] sm:$0xff]
        %v3919 = vld [vmem:[%s3915 + $0x18] sm:$0xff]
        %v3920 = vld [vmem:[%s3915 + $0x20] sm:$0xff]
        %v3921 = vld [vmem:[%s3915 + $0x28] sm:$0xff]
        %v3922 = vld [vmem:[%s3915 + $0x30] sm:$0xff]
        %v3923 = vld [vmem:[%s3915 + $0x38] sm:$0xff]
        %v3925 = vsel %vm2894, %v3085, 0
        %3927 = vmatprep.subr.mxu0 0.0
        %3928 = vmatpush1.msra.mxu0 %v3916
        %3929 = vmatprep.subr.mxu0 0.0
        %3930 = vmatpush1.msra.mxu0 %v3917
        %3931 = vmatprep.subr.mxu0 0.0
        %3932 = vmatpush1.msra.mxu0 %v3918
        %3933 = vmatprep.subr.mxu0 0.0
        %3934 = vmatpush1.msra.mxu0 %v3919
        %3935 = vmatprep.subr.mxu0 0.0
        %3936 = vmatpush1.msra.mxu0 %v3920
        %3937 = vmatprep.subr.mxu0 0.0
        %3938 = vmatpush1.msra.mxu0 %v3921
        %3939 = vmatprep.subr.mxu0 0.0
        %3940 = vmatpush1.msra.mxu0 %v3922
        %3941 = vmatprep.subr.mxu0 0.0
        %3942 = vmatpush1.msra.mxu0 %v3923
        %3943 = vmatprep.subr.mxu0 0.0
        %3944 = vmatpush1.msra.mxu0 0.0
        %3945 = vmatprep.subr.mxu0 0.0
        %3946 = vmatpush1.msra.mxu0 0.0
        %3947 = vmatprep.subr.mxu0 0.0
        %3948 = vmatpush1.msra.mxu0 0.0
        %3949 = vmatprep.subr.mxu0 0.0
        %3950 = vmatpush1.msra.mxu0 0.0
        %3951 = vmatprep.subr.mxu0 0.0
        %3952 = vmatpush1.msra.mxu0 0.0
        %3953 = vmatprep.subr.mxu0 0.0
        %3954 = vmatpush1.msra.mxu0 0.0
        %3955 = vmatprep.subr.mxu0 0.0
        %3956 = vmatpush1.msra.mxu0 0.0
        %3957 = vmatprep.subr.mxu0 0.0
        %3958 = vmatpush1.msra.mxu0 0.0
        %3959 = vmatprep.subr.mxu0 0.0
        %3960 = vmatpush1.msra.mxu0 0.0
        %3961 = vmatprep.subr.mxu0 0.0
        %3962 = vmatpush1.msra.mxu0 0.0
        %3963 = vmatprep.subr.mxu0 0.0
        %3964 = vmatpush1.msra.mxu0 0.0
        %3965 = vmatprep.subr.mxu0 0.0
        %3966 = vmatpush1.msra.mxu0 0.0
        %3967 = vmatprep.subr.mxu0 0.0
        %3968 = vmatpush1.msra.mxu0 0.0
        %3969 = vmatprep.subr.mxu0 0.0
        %3970 = vmatpush1.msra.mxu0 0.0
        %3971 = vmatprep.subr.mxu0 0.0
        %3972 = vmatpush1.msra.mxu0 0.0
        %3973 = vmatprep.subr.mxu0 0.0
        %3974 = vmatpush1.msra.mxu0 0.0
        %3975 = vmatprep.subr.mxu0 0.0
        %3976 = vmatpush1.msra.mxu0 0.0
        %3977 = vmatprep.subr.mxu0 0.0
        %3978 = vmatpush1.msra.mxu0 0.0
        %3979 = vmatprep.subr.mxu0 0.0
        %3980 = vmatpush1.msra.mxu0 0.0
        %3981 = vmatprep.subr.mxu0 0.0
        %3982 = vmatpush1.msra.mxu0 0.0
        %3983 = vmatprep.subr.mxu0 0.0
        %3984 = vmatpush1.msra.mxu0 0.0
        %3985 = vmatprep.subr.mxu0 0.0
        %3986 = vmatpush1.msra.mxu0 0.0
        %3987 = vmatprep.subr.mxu0 0.0
        %3988 = vmatpush1.msra.mxu0 0.0
        %3989 = vmatprep.subr.mxu0 0.0
        %3990 = vmatpush1.msra.mxu0 0.0
        %3991 = vmatprep.mubr.f32.mxu0 0.0
        %3992 = vmatmul.mubr.f32.gmra.mrb[0].mxu0 %v3925
        %v3993 = vpop.f32.mrb[0].mxu0
        %v3994 = vadd.f32 0.0, %v3993
        %v3995 = vpop.f32.mrb[0].mxu0
        %3996 = vdwg.mxu0
        %v3997 = vadd.f32 %v3914, %v3994
        %s3998 = scalar_lea.vmem %s7, 704
        %v3999 = vld [vmem:[%s3998] sm:$0xff]
        %v4000 = vld [vmem:[%s3998 + $0x8] sm:$0xff]
        %v4001 = vld [vmem:[%s3998 + $0x10] sm:$0xff]
        %v4002 = vld [vmem:[%s3998 + $0x18] sm:$0xff]
        %v4003 = vld [vmem:[%s3998 + $0x20] sm:$0xff]
        %v4004 = vld [vmem:[%s3998 + $0x28] sm:$0xff]
        %v4005 = vld [vmem:[%s3998 + $0x30] sm:$0xff]
        %v4006 = vld [vmem:[%s3998 + $0x38] sm:$0xff]
        %v4007 = vrot.slane %v3085, 4
        %v4008 = vsel %vm2894, %v4007, 0
        %4010 = vmatprep.subr.mxu0 0.0
        %4011 = vmatpush1.msra.mxu0 %v3999
        %4012 = vmatprep.subr.mxu0 0.0
        %4013 = vmatpush1.msra.mxu0 %v4000
        %4014 = vmatprep.subr.mxu0 0.0
        %4015 = vmatpush1.msra.mxu0 %v4001
        %4016 = vmatprep.subr.mxu0 0.0
        %4017 = vmatpush1.msra.mxu0 %v4002
        %4018 = vmatprep.subr.mxu0 0.0
        %4019 = vmatpush1.msra.mxu0 %v4003
        %4020 = vmatprep.subr.mxu0 0.0
        %4021 = vmatpush1.msra.mxu0 %v4004
        %4022 = vmatprep.subr.mxu0 0.0
        %4023 = vmatpush1.msra.mxu0 %v4005
        %4024 = vmatprep.subr.mxu0 0.0
        %4025 = vmatpush1.msra.mxu0 %v4006
        %4026 = vmatprep.subr.mxu0 0.0
        %4027 = vmatpush1.msra.mxu0 0.0
        %4028 = vmatprep.subr.mxu0 0.0
        %4029 = vmatpush1.msra.mxu0 0.0
        %4030 = vmatprep.subr.mxu0 0.0
        %4031 = vmatpush1.msra.mxu0 0.0
        %4032 = vmatprep.subr.mxu0 0.0
        %4033 = vmatpush1.msra.mxu0 0.0
        %4034 = vmatprep.subr.mxu0 0.0
        %4035 = vmatpush1.msra.mxu0 0.0
        %4036 = vmatprep.subr.mxu0 0.0
        %4037 = vmatpush1.msra.mxu0 0.0
        %4038 = vmatprep.subr.mxu0 0.0
        %4039 = vmatpush1.msra.mxu0 0.0
        %4040 = vmatprep.subr.mxu0 0.0
        %4041 = vmatpush1.msra.mxu0 0.0
        %4042 = vmatprep.subr.mxu0 0.0
        %4043 = vmatpush1.msra.mxu0 0.0
        %4044 = vmatprep.subr.mxu0 0.0
        %4045 = vmatpush1.msra.mxu0 0.0
        %4046 = vmatprep.subr.mxu0 0.0
        %4047 = vmatpush1.msra.mxu0 0.0
        %4048 = vmatprep.subr.mxu0 0.0
        %4049 = vmatpush1.msra.mxu0 0.0
        %4050 = vmatprep.subr.mxu0 0.0
        %4051 = vmatpush1.msra.mxu0 0.0
        %4052 = vmatprep.subr.mxu0 0.0
        %4053 = vmatpush1.msra.mxu0 0.0
        %4054 = vmatprep.subr.mxu0 0.0
        %4055 = vmatpush1.msra.mxu0 0.0
        %4056 = vmatprep.subr.mxu0 0.0
        %4057 = vmatpush1.msra.mxu0 0.0
        %4058 = vmatprep.subr.mxu0 0.0
        %4059 = vmatpush1.msra.mxu0 0.0
        %4060 = vmatprep.subr.mxu0 0.0
        %4061 = vmatpush1.msra.mxu0 0.0
        %4062 = vmatprep.subr.mxu0 0.0
        %4063 = vmatpush1.msra.mxu0 0.0
        %4064 = vmatprep.subr.mxu0 0.0
        %4065 = vmatpush1.msra.mxu0 0.0
        %4066 = vmatprep.subr.mxu0 0.0
        %4067 = vmatpush1.msra.mxu0 0.0
        %4068 = vmatprep.subr.mxu0 0.0
        %4069 = vmatpush1.msra.mxu0 0.0
        %4070 = vmatprep.subr.mxu0 0.0
        %4071 = vmatpush1.msra.mxu0 0.0
        %4072 = vmatprep.subr.mxu0 0.0
        %4073 = vmatpush1.msra.mxu0 0.0
        %4074 = vmatprep.mubr.f32.mxu0 0.0
        %4075 = vmatmul.mubr.f32.gmra.mrb[0].mxu0 %v4008
        %v4076 = vpop.f32.mrb[0].mxu0
        %v4077 = vadd.f32 0.0, %v4076
        %v4078 = vpop.f32.mrb[0].mxu0
        %4079 = vdwg.mxu0
        %v4080 = vadd.f32 %v3997, %v4077
        %v4081 = vld [vmem:[%s8] sm:$0x1]
        %v4082 = vld [vmem:[%s8 + $0x1] sm:$0x1]
        %v4083 = vld [vmem:[%s8 + $0x2] sm:$0x1]
        %vm4084 = vcmask 257024
        %v4085 = vsel %vm4084, %v4080, 0.0
        %v4086 = vrot.slane %v4085, 4
        %v4087 = vadd.f32 %v4085, %v4086
        %v4088 = vrot.slane %v4087, 2
        %v4089 = vadd.f32 %v4087, %v4088
        %v4090 = vrot.slane %v4089, 1
        %v4091 = vadd.f32 %v4089, %v4090
        %v4092 = vrcp.pop 4.0
        %v4093 = vmul.f32 %v4091, %v4092
        %v4094 = vsub.f32 %v4080, %v4093
        %v4095 = vmul.f32 %v4094, %v4094
        %v4096 = vsel %vm4084, %v4095, 0.0
        %v4097 = vrot.slane %v4096, 4
        %v4098 = vadd.f32 %v4096, %v4097
        %v4099 = vrot.slane %v4098, 2
        %v4100 = vadd.f32 %v4098, %v4099
        %v4101 = vrot.slane %v4100, 1
        %v4102 = vadd.f32 %v4100, %v4101
        %v4103 = vmul.f32 %v4102, %v4092
        %v4104 = vadd.f32 %v4103, 1e-05
        %v4105 = vrsqrt.pop %v4104
        %v4106 = vmul.f32 %v4081, %v4105
        %v4107 = vmul.f32 %v4093, %v4106
        %v4108 = vsub.f32 %v4082, %v4107
        %v4109 = vlaneseq
        %v4110 = vshrl.u32 %v4109, 7
        %v4111 = vsub.s32 0, %v4110
        %v4112 = vrot.slane %v4106, %v4111
        %v4113 = vmul.f32 %v4080, %v4112
        %v4114 = vlaneseq
        %v4115 = vshrl.u32 %v4114, 7
        %v4116 = vsub.s32 0, %v4115
        %v4117 = vrot.slane %v4108, %v4116
        %v4118 = vadd.f32 %v4113, %v4117
        %vm4119 = vcmp.ge.f32.partialorder %v4118, 0.0
        %v4120 = vlaneseq
        %v4121 = vshrl.u32 %v4120, 7
        %v4122 = vsub.s32 0, %v4121
        %v4123 = vrot.slane %v4083, %v4122
        %v4124 = vmul.f32 %v4123, %v4118
        %v4125 = vsel %vm4119, %v4118, %v4124
        %4126 = vst.msk [vmem:[%s325] sm:$0xf] %vm4084, %v4125
        %s4127 = sand.u32 %s225, 1
        %s4128 = scalar_lea.sflag [#allocation3], %s4127
        %s4129 = sand.u32 %s225, 1
        %s4130 = smul.addr %s4129, 4
        %s4131 = scalar_lea.vmem [#allocation2], %s4130
        // Predicated region
        $region57: #{tpu_custom_call.1} parent=55 // pred_check
          %p4132 = pneg %p235
        $region58: #{tpu_custom_call.1} parent=55 // pred_check_branch
          %4134 = sbr.rel (%p4132) target = $region60
        $region59: #{tpu_custom_call.1} parent=55 // pred_region
          %s4136 = ssub.s32 64, 64
          %4137 = vsyncadd %s4128, %s4136
          %s4138 = smul.addr %s23, 64
          %s4139 = scalar_lea.hbm %s9, %s4138
          %s4141 = sshll.u32 %s4131, 4
          %s4142 = int_to_ptr.vmem [resolvable:$true] %s4141
          %4144 = dma.vmem_to_hbm [thread:$0]  %s4142, 64, %s4139, %s4128
        $region60: #{tpu_custom_call.1} parent=55 // pred_fallthru
          _
      $region56: #{tpu_custom_call.1} parent=5 // pred_fallthru
        _
      %p4145 = scmp.le.s32.totalorder 2, %s18
      // Predicated region
      $region61: #{tpu_custom_call.1} parent=5 // pred_check
        %p4146 = pneg %p4145
      $region62: #{tpu_custom_call.1} parent=5 // pred_check_branch
        %4148 = sbr.rel (%p4146) target = $region64
      $region63: #{tpu_custom_call.1} parent=5 // pred_region
        %s4149 = ssub.s32 %s18, 2
        // Predicated region
        $region65: #{tpu_custom_call.1} parent=63 // pred_check
          %p4150 = pneg %p241
        $region66: #{tpu_custom_call.1} parent=63 // pred_check_branch
          %4152 = sbr.rel (%p4150) target = $region68
        $region67: #{tpu_custom_call.1} parent=63 // pred_region
          %s4153 = sand.u32 %s226, 1
          %s4154 = scalar_lea.sflag [#allocation3], %s4153
          %s4155 = sand.u32 %s226, 1
          %s4156 = smul.addr %s4155, 4
          %s4157 = scalar_lea.vmem [#allocation2], %s4156
          %4158 = dma.done %s4154, 64
        $region68: #{tpu_custom_call.1} parent=63 // pred_fallthru
          _
      $region64: #{tpu_custom_call.1} parent=5 // pred_fallthru
        _
    $region6: #{tpu_custom_call.1} parent=1 // loop_footer
      %s22 = sadd.s32 1, %s18
    $region7: #{tpu_custom_call.1} parent=1 // loop_footer_branch
      %17 = sbr.rel target = $region3
    $region8: #{tpu_custom_call.1} parent=1 // loop_exit
      _
    %4159 = vsyncpa [#allocation3], 1
    %s4160 = scalar_lea.sflag [#allocation3], 1
    %4161 = vsyncpa %s4160, 1

</llo_original>
